<compile_context>
chip_gen: v5e
topology: v5e:2x2
jax: 0.10.0
libtpu: 0.0.40
codegen_flags: <defaults>
</compile_context>

<pallas_src>
import jax
import jax.numpy as jnp
from jax.experimental import pallas as pl
from jax.experimental.pallas import tpu as pltpu

# ----------------------------- config (small) -------------------------------
VOCAB = 64
MAX_POS = 16
TYPE_VOCAB = 2
HIDDEN = 32          # bert hidden_size
NUM_HEADS = 4
HEAD_DIM = HIDDEN // NUM_HEADS
INTERMEDIATE = 64
NUM_LAYERS = 2
LN_EPS = 1e-12

NUM_LABELS = 3
CLS_HIDDEN = 50      # hidden_dim of the classification head
CLS_PAD = 128        # lane-dense padding of CLS_HIDDEN
LBL_PAD = 128        # lane-dense padding of NUM_LABELS

BATCH = 2
SEQ = 8

MASK_BIAS = -10000.0   # BERT extended attention mask bias
NEG_INF = -1e30


# --------------------------- in-kernel helpers -------------------------------
def _ln(x, g, b):
    """LayerNorm over the last axis, f32."""
    mu = jnp.mean(x, axis=-1, keepdims=True)
    var = jnp.mean((x - mu) ** 2, axis=-1, keepdims=True)
    return (x - mu) * jax.lax.rsqrt(var + LN_EPS) * g + b


def _dot(x, w_bf16):
    """bf16 MXU matmul (weights stored bf16), f32 accumulation."""
    return jnp.dot(x.astype(jnp.bfloat16), w_bf16,
                   preferred_element_type=jnp.float32)


# ----------------------------- fused kernel ----------------------------------
def _bert_fwd_kernel(ids_ref, mask_ref, wemb_ref, postype_ref,
                     eln_g_ref, eln_b_ref,
                     qkv_w_ref, qkv_b_ref, o_w_ref, o_b_ref,
                     ln1_g_ref, ln1_b_ref, i_w_ref, i_b_ref,
                     f_w_ref, f_b_ref, ln2_g_ref, ln2_b_ref,
                     pool_w_ref, pool_b_ref, head_w_ref, head_b_ref,
                     cls_w_ref, cls_b_ref, labels_ref,
                     logits_ref, sse_ref):
    """Whole forward for ONE batch sample (grid axis 0 = batch, parallel)."""
    S, H = SEQ, HIDDEN

    # ---- embeddings: one-hot gather on the MXU + pos/type add + LayerNorm ----
    ids = ids_ref[0]                                            # (S, 1) int32
    iota = jax.lax.broadcasted_iota(jnp.int32, (S, VOCAB), 1)
    onehot = (iota == ids).astype(jnp.float32)                  # (S, VOCAB)
    word_e = _dot(onehot, wemb_ref[...])                        # (S, H)
    x = _ln(word_e + postype_ref[...], eln_g_ref[...], eln_b_ref[...])

    # additive attention bias: computed once, reused by every layer / head
    bias = (1.0 - mask_ref[0]) * MASK_BIAS                      # (1, S)
    scale = 1.0 / (HEAD_DIM ** 0.5)

    # ---- encoder layers (fully unrolled; weights stacked on layer axis) ----
    for l in range(NUM_LAYERS):
        qkv = _dot(x, qkv_w_ref[l]) + qkv_b_ref[l]              # (S, 3H)
        q = qkv[:, 0:H]
        k = qkv[:, H:2 * H]
        v = qkv[:, 2 * H:3 * H]

        ctx_heads = []
        for h in range(NUM_HEADS):
            lo, hi = h * HEAD_DIM, (h + 1) * HEAD_DIM
            qh, kh, vh = q[:, lo:hi], k[:, lo:hi], v[:, lo:hi]
            s = jnp.einsum("qd,kd->qk", qh, kh,
                           preferred_element_type=jnp.float32) * scale + bias
            s = s - jnp.max(s, axis=-1, keepdims=True)
            e = jnp.exp(s)
            p = e * pl.reciprocal(jnp.sum(e, axis=-1, keepdims=True),
                                  approx=True)
            ctx_heads.append(jnp.dot(p, vh,
                                     preferred_element_type=jnp.float32))
        ctx = jnp.concatenate(ctx_heads, axis=-1)               # (S, H)

        attn_out = _dot(ctx, o_w_ref[l]) + o_b_ref[l]
        x = _ln(attn_out + x, ln1_g_ref[l], ln1_b_ref[l])

        # TODO(synk): jax.nn.gelu is the tanh approximation; HF BERT default
        # 'gelu' is the exact erf form (tiny numeric drift vs torch).
        inter = jax.nn.gelu(_dot(x, i_w_ref[l]) + i_b_ref[l])
        ffn = _dot(inter, f_w_ref[l]) + f_b_ref[l]
        x = _ln(ffn + x, ln2_g_ref[l], ln2_b_ref[l])

    # ---- BERT pooler: tanh(dense([CLS])) == outputs[1] ----
    cls_tok = x[0:1, :]                                         # (1, H)
    pooled = jnp.tanh(_dot(cls_tok, pool_w_ref[...]) + pool_b_ref[...])

    # ---- classification head (dropout = identity in eval mode) ----
    # TODO(synk): torch.nn.Dropout in training mode has no deterministic
    # Pallas equivalent here; inference (identity) semantics are used.
    hidden = jnp.maximum(_dot(pooled, head_w_ref[...]) + head_b_ref[...], 0.0)
    raw = _dot(hidden, cls_w_ref[...]) + cls_b_ref[...]         # (1, LBL_PAD)

    lane = jax.lax.broadcasted_iota(jnp.int32, (1, LBL_PAD), 1)
    valid = lane < NUM_LABELS
    raw = jnp.where(valid, raw, NEG_INF)
    raw = raw - jnp.max(raw, axis=-1, keepdims=True)
    e = jnp.exp(raw)
    probs = e / jnp.sum(e, axis=-1, keepdims=True)              # exact softmax
    probs = jnp.where(valid, probs, 0.0)
    logits_ref[0] = probs                                       # lane-dense slab

    # per-sample sum of squared error (padded lanes contribute exactly 0)
    d = probs - labels_ref[0]
    sse_ref[...] = jnp.sum(d * d)[None, None, None]


# ------------------------------ BlockSpec helpers -----------------------------
def _rep_spec(shape):
    """Whole-array block, replicated across the batch grid."""
    zeros = (0,) * len(shape)
    return pl.BlockSpec(tuple(shape), lambda b, _z=zeros: _z)


def _batch_spec(shape):
    """Per-sample block along the leading batch axis."""
    blk = (1,) + tuple(shape[1:])
    rest = (0,) * (len(shape) - 1)
    return pl.BlockSpec(blk, lambda b, _r=rest: (b,) + _r)


# ------------------------------- forward wrapper ------------------------------
@jax.jit
def bert_classification_forward(params, word_seq, word_mask, labels=None):
    """Mirrors BertClassificationModel.forward (eval-mode dropout = identity)."""
    B, S = word_seq.shape

    ids = word_seq.astype(jnp.int32).reshape(B, S, 1)
    mask_f = word_mask.astype(jnp.float32).reshape(B, 1, S)
    pos_type = params["pos_emb"][:S] + params["type_emb"][0][None, :]  # (S, H)

    if labels is None:
        labels_pad = jnp.zeros((B, 1, LBL_PAD), jnp.float32)
    else:
        labels_pad = (jnp.zeros((B, 1, LBL_PAD), jnp.float32)
                      .at[:, 0, :NUM_LABELS].set(labels))

    inputs = (
        ids, mask_f,
        params["word_emb"], pos_type, params["emb_ln_g"], params["emb_ln_b"],
        params["qkv_w"], params["qkv_b"], params["o_w"], params["o_b"],
        params["ln1_g"], params["ln1_b"], params["i_w"], params["i_b"],
        params["f_w"], params["f_b"], params["ln2_g"], params["ln2_b"],
        params["pool_w"], params["pool_b"], params["head_w"], params["head_b"],
        params["cls_w"], params["cls_b"], labels_pad,
    )
    in_specs = ([_batch_spec(ids.shape), _batch_spec(mask_f.shape)]
                + [_rep_spec(a.shape) for a in inputs[2:24]]
                + [_batch_spec(labels_pad.shape)])

    logits_pad, sse = pl.pallas_call(
        _bert_fwd_kernel,
        grid=(B,),
        out_shape=(jax.ShapeDtypeStruct((B, 1, LBL_PAD), jnp.float32),
                   jax.ShapeDtypeStruct((B, 1, 1), jnp.float32)),
        in_specs=in_specs,
        out_specs=(_batch_spec((B, 1, LBL_PAD)), _batch_spec((B, 1, 1))),
        compiler_params=pltpu.CompilerParams(
            dimension_semantics=("parallel",)),
    )(*inputs)

    logits = logits_pad[:, 0, :NUM_LABELS]
    if labels is None:
        return logits, None
    loss = jnp.sum(sse) / (B * NUM_LABELS)   # MSE over (B, NUM_LABELS)
    return logits, loss


# ------------------------------ synthetic params ------------------------------
def init_params(key):
    keys = iter(jax.random.split(key, 32))

    def nrm(shape, std=0.02):
        return std * jax.random.normal(next(keys), shape, dtype=jnp.float32)

    bf16 = lambda a: a.astype(jnp.bfloat16)

    p = {
        "word_emb": bf16(nrm((VOCAB, HIDDEN))),
        "pos_emb": nrm((MAX_POS, HIDDEN)),
        "type_emb": nrm((TYPE_VOCAB, HIDDEN)),
        "emb_ln_g": jnp.ones((1, HIDDEN), jnp.float32),
        "emb_ln_b": jnp.zeros((1, HIDDEN), jnp.float32),
        # encoder layers stacked on a leading layer axis; Q/K/V fused
        "qkv_w": bf16(nrm((NUM_LAYERS, HIDDEN, 3 * HIDDEN))),
        "qkv_b": jnp.zeros((NUM_LAYERS, 1, 3 * HIDDEN), jnp.float32),
        "o_w": bf16(nrm((NUM_LAYERS, HIDDEN, HIDDEN))),
        "o_b": jnp.zeros((NUM_LAYERS, 1, HIDDEN), jnp.float32),
        "ln1_g": jnp.ones((NUM_LAYERS, 1, HIDDEN), jnp.float32),
        "ln1_b": jnp.zeros((NUM_LAYERS, 1, HIDDEN), jnp.float32),
        "i_w": bf16(nrm((NUM_LAYERS, HIDDEN, INTERMEDIATE))),
        "i_b": jnp.zeros((NUM_LAYERS, 1, INTERMEDIATE), jnp.float32),
        "f_w": bf16(nrm((NUM_LAYERS, INTERMEDIATE, HIDDEN))),
        "f_b": jnp.zeros((NUM_LAYERS, 1, HIDDEN), jnp.float32),
        "ln2_g": jnp.ones((NUM_LAYERS, 1, HIDDEN), jnp.float32),
        "ln2_b": jnp.zeros((NUM_LAYERS, 1, HIDDEN), jnp.float32),
        # pooler
        "pool_w": bf16(nrm((HIDDEN, HIDDEN))),
        "pool_b": jnp.zeros((1, HIDDEN), jnp.float32),
    }

    # classification head (default-ish init + Xavier classifier), zero-padded
    # to lane-dense widths (50 -> 128, 3 -> 128); padding is mathematically inert.
    head_w = nrm((HIDDEN, CLS_HIDDEN), std=0.05)
    p["head_w"] = bf16(jnp.zeros((HIDDEN, CLS_PAD), jnp.float32)
                       .at[:, :CLS_HIDDEN].set(head_w))
    p["head_b"] = jnp.zeros((1, CLS_PAD), jnp.float32)

    limit = (6.0 / (CLS_HIDDEN + NUM_LABELS)) ** 0.5
    cls_w = jax.random.uniform(next(keys), (CLS_HIDDEN, NUM_LABELS),
                               minval=-limit, maxval=limit, dtype=jnp.float32)
    p["cls_w"] = bf16(jnp.zeros((CLS_PAD, LBL_PAD), jnp.float32)
                      .at[:CLS_HIDDEN, :NUM_LABELS].set(cls_w))
    p["cls_b"] = jnp.zeros((1, LBL_PAD), jnp.float32)
    return p


# ----------------------------------- main ------------------------------------
if __name__ == "__main__":
    root = jax.random.PRNGKey(0)
    k_param, k_ids, k_lab = jax.random.split(root, 3)

    params = init_params(k_param)

    word_seq = jax.random.randint(k_ids, (BATCH, SEQ), 0, VOCAB, dtype=jnp.int32)
    word_mask = jnp.ones((BATCH, SEQ), dtype=jnp.int32)
    word_mask = word_mask.at[1, SEQ - 2:].set(0)   # pad the tail of sample 1
    labels = jax.nn.softmax(
        jax.random.normal(k_lab, (BATCH, NUM_LABELS), dtype=jnp.float32), axis=-1)

    logits, loss = bert_classification_forward(params, word_seq, word_mask, labels)
    logits = jax.block_until_ready(logits)
    loss = jax.block_until_ready(loss)

    assert logits.shape == (BATCH, NUM_LABELS)
    assert jnp.all(jnp.isfinite(logits)) and jnp.isfinite(loss)
    # softmax rows must sum to 1
    assert jnp.allclose(jnp.sum(logits, axis=1), 1.0, atol=1e-5)

    print("KERNEL_OK")
</pallas_src>

<mosaic_0001>
module attributes {stable_mosaic.version = 11 : i64} {
  func.func @_bert_fwd_kernel(%arg0: i32, %arg1: memref<1x8x1xi32, #tpu.memory_space<vmem>>, %arg2: memref<1x1x8xf32, #tpu.memory_space<vmem>>, %arg3: memref<64x32xbf16, #tpu.memory_space<vmem>>, %arg4: memref<8x32xf32, #tpu.memory_space<vmem>>, %arg5: memref<1x32xf32, #tpu.memory_space<vmem>>, %arg6: memref<1x32xf32, #tpu.memory_space<vmem>>, %arg7: memref<2x32x96xbf16, #tpu.memory_space<vmem>>, %arg8: memref<2x1x96xf32, #tpu.memory_space<vmem>>, %arg9: memref<2x32x32xbf16, #tpu.memory_space<vmem>>, %arg10: memref<2x1x32xf32, #tpu.memory_space<vmem>>, %arg11: memref<2x1x32xf32, #tpu.memory_space<vmem>>, %arg12: memref<2x1x32xf32, #tpu.memory_space<vmem>>, %arg13: memref<2x32x64xbf16, #tpu.memory_space<vmem>>, %arg14: memref<2x1x64xf32, #tpu.memory_space<vmem>>, %arg15: memref<2x64x32xbf16, #tpu.memory_space<vmem>>, %arg16: memref<2x1x32xf32, #tpu.memory_space<vmem>>, %arg17: memref<2x1x32xf32, #tpu.memory_space<vmem>>, %arg18: memref<2x1x32xf32, #tpu.memory_space<vmem>>, %arg19: memref<32x32xbf16, #tpu.memory_space<vmem>>, %arg20: memref<1x32xf32, #tpu.memory_space<vmem>>, %arg21: memref<32x128xbf16, #tpu.memory_space<vmem>>, %arg22: memref<1x128xf32, #tpu.memory_space<vmem>>, %arg23: memref<128x128xbf16, #tpu.memory_space<vmem>>, %arg24: memref<1x128xf32, #tpu.memory_space<vmem>>, %arg25: memref<1x1x128xf32, #tpu.memory_space<vmem>>, %arg26: memref<1x1x128xf32, #tpu.memory_space<vmem>>, %arg27: memref<1x1x1xf32, #tpu.memory_space<vmem>>) attributes {dimension_semantics = [#tpu.dimension_semantics<parallel>], iteration_bounds = array<i64: 2>, scalar_prefetch = 0 : i64, scratch_operands = 0 : i64, tpu.core_type = #tpu.core_type<tc>, window_params = [{transform_indices = @transform_0, window_bounds = array<i64: 1, 8, 1>}, {transform_indices = @transform_1, window_bounds = array<i64: 1, 1, 8>}, {pipeline_mode = #tpu.pipeline_mode<synchronous>, transform_indices = @transform_2, window_bounds = array<i64: 64, 32>}, {pipeline_mode = #tpu.pipeline_mode<synchronous>, transform_indices = @transform_3, window_bounds = array<i64: 8, 32>}, {pipeline_mode = #tpu.pipeline_mode<synchronous>, transform_indices = @transform_4, window_bounds = array<i64: 1, 32>}, {pipeline_mode = #tpu.pipeline_mode<synchronous>, transform_indices = @transform_5, window_bounds = array<i64: 1, 32>}, {pipeline_mode = #tpu.pipeline_mode<synchronous>, transform_indices = @transform_6, window_bounds = array<i64: 2, 32, 96>}, {pipeline_mode = #tpu.pipeline_mode<synchronous>, transform_indices = @transform_7, window_bounds = array<i64: 2, 1, 96>}, {pipeline_mode = #tpu.pipeline_mode<synchronous>, transform_indices = @transform_8, window_bounds = array<i64: 2, 32, 32>}, {pipeline_mode = #tpu.pipeline_mode<synchronous>, transform_indices = @transform_9, window_bounds = array<i64: 2, 1, 32>}, {pipeline_mode = #tpu.pipeline_mode<synchronous>, transform_indices = @transform_10, window_bounds = array<i64: 2, 1, 32>}, {pipeline_mode = #tpu.pipeline_mode<synchronous>, transform_indices = @transform_11, window_bounds = array<i64: 2, 1, 32>}, {pipeline_mode = #tpu.pipeline_mode<synchronous>, transform_indices = @transform_12, window_bounds = array<i64: 2, 32, 64>}, {pipeline_mode = #tpu.pipeline_mode<synchronous>, transform_indices = @transform_13, window_bounds = array<i64: 2, 1, 64>}, {pipeline_mode = #tpu.pipeline_mode<synchronous>, transform_indices = @transform_14, window_bounds = array<i64: 2, 64, 32>}, {pipeline_mode = #tpu.pipeline_mode<synchronous>, transform_indices = @transform_15, window_bounds = array<i64: 2, 1, 32>}, {pipeline_mode = #tpu.pipeline_mode<synchronous>, transform_indices = @transform_16, window_bounds = array<i64: 2, 1, 32>}, {pipeline_mode = #tpu.pipeline_mode<synchronous>, transform_indices = @transform_17, window_bounds = array<i64: 2, 1, 32>}, {pipeline_mode = #tpu.pipeline_mode<synchronous>, transform_indices = @transform_18, window_bounds = array<i64: 32, 32>}, {pipeline_mode = #tpu.pipeline_mode<synchronous>, transform_indices = @transform_19, window_bounds = array<i64: 1, 32>}, {pipeline_mode = #tpu.pipeline_mode<synchronous>, transform_indices = @transform_20, window_bounds = array<i64: 32, 128>}, {pipeline_mode = #tpu.pipeline_mode<synchronous>, transform_indices = @transform_21, window_bounds = array<i64: 1, 128>}, {pipeline_mode = #tpu.pipeline_mode<synchronous>, transform_indices = @transform_22, window_bounds = array<i64: 128, 128>}, {pipeline_mode = #tpu.pipeline_mode<synchronous>, transform_indices = @transform_23, window_bounds = array<i64: 1, 128>}, {transform_indices = @transform_24, window_bounds = array<i64: 1, 1, 128>}, {transform_indices = @transform_25, window_bounds = array<i64: 1, 1, 128>}, {transform_indices = @transform_26, window_bounds = array<i64: 1, 1, 1>}]} {
    %c0 = arith.constant 0 : index
    %c0_0 = arith.constant 0 : index
    %c0_1 = arith.constant 0 : index
    %0 = vector.load %arg1[%c0, %c0_0, %c0_1] : memref<1x8x1xi32, #tpu.memory_space<vmem>>, vector<1x8x1xi32>
    %1 = vector.shape_cast %0 : vector<1x8x1xi32> to vector<8x1xi32>
    %2 = tpu.iota {dimensions = array<i32: 1>} : vector<8x64xi32>
    %3 = vector.broadcast %1 : vector<8x1xi32> to vector<8x64xi32>
    %4 = arith.cmpi eq, %2, %3 : vector<8x64xi32>
    %5 = arith.extui %4 : vector<8x64xi1> to vector<8x64xi32>
    %6 = arith.sitofp %5 : vector<8x64xi32> to vector<8x64xf32>
    %c0_2 = arith.constant 0 : index
    %c0_3 = arith.constant 0 : index
    %7 = vector.load %arg3[%c0_2, %c0_3] : memref<64x32xbf16, #tpu.memory_space<vmem>>, vector<64x32xbf16>
    %8 = arith.truncf %6 : vector<8x64xf32> to vector<8x64xbf16>
    %cst = arith.constant dense<0.000000e+00> : vector<8x32xf32>
    %9 = tpu.matmul %8, %7, %cst {dimension_numbers = #tpu.dot_dimension_numbers<[1], [0], [0], [1], [0, 0, 1, 1], [], []>} : vector<8x64xbf16>, vector<64x32xbf16>, vector<8x32xf32> -> vector<8x32xf32>
    %c0_4 = arith.constant 0 : index
    %c0_5 = arith.constant 0 : index
    %10 = vector.load %arg4[%c0_4, %c0_5] : memref<8x32xf32, #tpu.memory_space<vmem>>, vector<8x32xf32>
    %11 = arith.addf %9, %10 : vector<8x32xf32>
    %c0_6 = arith.constant 0 : index
    %c0_7 = arith.constant 0 : index
    %12 = vector.load %arg5[%c0_6, %c0_7] : memref<1x32xf32, #tpu.memory_space<vmem>>, vector<1x32xf32>
    %c0_8 = arith.constant 0 : index
    %c0_9 = arith.constant 0 : index
    %13 = vector.load %arg6[%c0_8, %c0_9] : memref<1x32xf32, #tpu.memory_space<vmem>>, vector<1x32xf32>
    %cst_10 = arith.constant dense<0.000000e+00> : vector<8xf32>
    %14 = vector.multi_reduction <add>, %11, %cst_10 [1] : vector<8x32xf32> to vector<8xf32>
    %15 = vector.shape_cast %14 : vector<8xf32> to vector<8x1xf32>
    %cst_11 = arith.constant 3.200000e+01 : f32
    %16 = vector.broadcast %cst_11 : f32 to vector<8x1xf32>
    %17 = arith.divf %15, %16 : vector<8x1xf32>
    %18 = vector.broadcast %17 : vector<8x1xf32> to vector<8x32xf32>
    %19 = arith.subf %11, %18 : vector<8x32xf32>
    %20 = arith.mulf %19, %19 : vector<8x32xf32>
    %cst_12 = arith.constant dense<0.000000e+00> : vector<8xf32>
    %21 = vector.multi_reduction <add>, %20, %cst_12 [1] : vector<8x32xf32> to vector<8xf32>
    %22 = vector.shape_cast %21 : vector<8xf32> to vector<8x1xf32>
    %cst_13 = arith.constant 3.200000e+01 : f32
    %23 = vector.broadcast %cst_13 : f32 to vector<8x1xf32>
    %24 = arith.divf %22, %23 : vector<8x1xf32>
    %25 = vector.broadcast %17 : vector<8x1xf32> to vector<8x32xf32>
    %26 = arith.subf %11, %25 : vector<8x32xf32>
    %cst_14 = arith.constant 9.99999996E-13 : f32
    %27 = vector.broadcast %cst_14 : f32 to vector<8x1xf32>
    %28 = arith.addf %24, %27 : vector<8x1xf32>
    %29 = math.rsqrt %28 : vector<8x1xf32>
    %30 = vector.broadcast %29 : vector<8x1xf32> to vector<8x32xf32>
    %31 = arith.mulf %26, %30 : vector<8x32xf32>
    %32 = vector.broadcast %12 : vector<1x32xf32> to vector<8x32xf32>
    %33 = arith.mulf %31, %32 : vector<8x32xf32>
    %34 = vector.broadcast %13 : vector<1x32xf32> to vector<8x32xf32>
    %35 = arith.addf %33, %34 : vector<8x32xf32>
    %c0_15 = arith.constant 0 : index
    %c0_16 = arith.constant 0 : index
    %c0_17 = arith.constant 0 : index
    %36 = vector.load %arg2[%c0_15, %c0_16, %c0_17] : memref<1x1x8xf32, #tpu.memory_space<vmem>>, vector<1x1x8xf32>
    %37 = vector.shape_cast %36 : vector<1x1x8xf32> to vector<1x8xf32>
    %cst_18 = arith.constant 1.000000e+00 : f32
    %38 = vector.broadcast %cst_18 : f32 to vector<1x8xf32>
    %39 = arith.subf %38, %37 : vector<1x8xf32>
    %cst_19 = arith.constant -1.000000e+04 : f32
    %40 = vector.broadcast %cst_19 : f32 to vector<1x8xf32>
    %41 = arith.mulf %39, %40 : vector<1x8xf32>
    %c0_20 = arith.constant 0 : index
    %c0_21 = arith.constant 0 : index
    %c0_22 = arith.constant 0 : index
    %42 = vector.load %arg7[%c0_20, %c0_21, %c0_22] : memref<2x32x96xbf16, #tpu.memory_space<vmem>>, vector<1x32x96xbf16>
    %43 = vector.shape_cast %42 : vector<1x32x96xbf16> to vector<32x96xbf16>
    %44 = arith.truncf %35 : vector<8x32xf32> to vector<8x32xbf16>
    %cst_23 = arith.constant dense<0.000000e+00> : vector<8x96xf32>
    %45 = tpu.matmul %44, %43, %cst_23 {dimension_numbers = #tpu.dot_dimension_numbers<[1], [0], [0], [1], [0, 0, 1, 1], [], []>} : vector<8x32xbf16>, vector<32x96xbf16>, vector<8x96xf32> -> vector<8x96xf32>
    %c0_24 = arith.constant 0 : index
    %c0_25 = arith.constant 0 : index
    %c0_26 = arith.constant 0 : index
    %46 = vector.load %arg8[%c0_24, %c0_25, %c0_26] : memref<2x1x96xf32, #tpu.memory_space<vmem>>, vector<1x1x96xf32>
    %47 = vector.shape_cast %46 : vector<1x1x96xf32> to vector<1x96xf32>
    %48 = vector.broadcast %47 : vector<1x96xf32> to vector<8x96xf32>
    %49 = arith.addf %45, %48 : vector<8x96xf32>
    %50 = vector.extract_strided_slice %49 {offsets = [0, 0], sizes = [8, 32], strides = [1, 1]} : vector<8x96xf32> to vector<8x32xf32>
    %51 = vector.extract_strided_slice %49 {offsets = [0, 32], sizes = [8, 32], strides = [1, 1]} : vector<8x96xf32> to vector<8x32xf32>
    %52 = vector.extract_strided_slice %49 {offsets = [0, 64], sizes = [8, 32], strides = [1, 1]} : vector<8x96xf32> to vector<8x32xf32>
    %53 = vector.extract_strided_slice %50 {offsets = [0, 0], sizes = [8, 8], strides = [1, 1]} : vector<8x32xf32> to vector<8x8xf32>
    %54 = vector.extract_strided_slice %51 {offsets = [0, 0], sizes = [8, 8], strides = [1, 1]} : vector<8x32xf32> to vector<8x8xf32>
    %55 = vector.extract_strided_slice %52 {offsets = [0, 0], sizes = [8, 8], strides = [1, 1]} : vector<8x32xf32> to vector<8x8xf32>
    "tpu.trace_start"() <{level = 10 : i32, message = "qd,kd->qk"}> : () -> ()
    %cst_27 = arith.constant dense<0.000000e+00> : vector<8x8xf32>
    %56 = tpu.matmul %53, %54, %cst_27 {dimension_numbers = #tpu.dot_dimension_numbers<[1], [1], [0], [0], [0, 0, 1, 0], [], []>} : vector<8x8xf32>, vector<8x8xf32>, vector<8x8xf32> -> vector<8x8xf32>
    "tpu.trace_stop"() : () -> ()
    %cst_28 = arith.constant 0.353553385 : f32
    %57 = vector.broadcast %cst_28 : f32 to vector<8x8xf32>
    %58 = arith.mulf %56, %57 : vector<8x8xf32>
    %59 = vector.broadcast %41 : vector<1x8xf32> to vector<8x8xf32>
    %60 = arith.addf %58, %59 : vector<8x8xf32>
    %cst_29 = arith.constant dense<0xFF800000> : vector<8xf32>
    %61 = vector.multi_reduction <maximumf>, %60, %cst_29 [1] : vector<8x8xf32> to vector<8xf32>
    %62 = vector.shape_cast %61 : vector<8xf32> to vector<8x1xf32>
    %63 = vector.broadcast %62 : vector<8x1xf32> to vector<8x8xf32>
    %64 = arith.subf %60, %63 : vector<8x8xf32>
    %65 = math.exp %64 : vector<8x8xf32>
    %cst_30 = arith.constant dense<0.000000e+00> : vector<8xf32>
    %66 = vector.multi_reduction <add>, %65, %cst_30 [1] : vector<8x8xf32> to vector<8xf32>
    %67 = vector.shape_cast %66 : vector<8xf32> to vector<8x1xf32>
    %68 = tpu.reciprocal %67 {approx = true} : vector<8x1xf32> -> vector<8x1xf32>
    %69 = vector.broadcast %68 : vector<8x1xf32> to vector<8x8xf32>
    %70 = arith.mulf %65, %69 : vector<8x8xf32>
    %cst_31 = arith.constant dense<0.000000e+00> : vector<8x8xf32>
    %71 = tpu.matmul %70, %55, %cst_31 {dimension_numbers = #tpu.dot_dimension_numbers<[1], [0], [0], [1], [0, 0, 1, 1], [], []>} : vector<8x8xf32>, vector<8x8xf32>, vector<8x8xf32> -> vector<8x8xf32>
    %72 = vector.extract_strided_slice %50 {offsets = [0, 8], sizes = [8, 8], strides = [1, 1]} : vector<8x32xf32> to vector<8x8xf32>
    %73 = vector.extract_strided_slice %51 {offsets = [0, 8], sizes = [8, 8], strides = [1, 1]} : vector<8x32xf32> to vector<8x8xf32>
    %74 = vector.extract_strided_slice %52 {offsets = [0, 8], sizes = [8, 8], strides = [1, 1]} : vector<8x32xf32> to vector<8x8xf32>
    "tpu.trace_start"() <{level = 10 : i32, message = "qd,kd->qk"}> : () -> ()
    %cst_32 = arith.constant dense<0.000000e+00> : vector<8x8xf32>
    %75 = tpu.matmul %72, %73, %cst_32 {dimension_numbers = #tpu.dot_dimension_numbers<[1], [1], [0], [0], [0, 0, 1, 0], [], []>} : vector<8x8xf32>, vector<8x8xf32>, vector<8x8xf32> -> vector<8x8xf32>
    "tpu.trace_stop"() : () -> ()
    %cst_33 = arith.constant 0.353553385 : f32
    %76 = vector.broadcast %cst_33 : f32 to vector<8x8xf32>
    %77 = arith.mulf %75, %76 : vector<8x8xf32>
    %78 = vector.broadcast %41 : vector<1x8xf32> to vector<8x8xf32>
    %79 = arith.addf %77, %78 : vector<8x8xf32>
    %cst_34 = arith.constant dense<0xFF800000> : vector<8xf32>
    %80 = vector.multi_reduction <maximumf>, %79, %cst_34 [1] : vector<8x8xf32> to vector<8xf32>
    %81 = vector.shape_cast %80 : vector<8xf32> to vector<8x1xf32>
    %82 = vector.broadcast %81 : vector<8x1xf32> to vector<8x8xf32>
    %83 = arith.subf %79, %82 : vector<8x8xf32>
    %84 = math.exp %83 : vector<8x8xf32>
    %cst_35 = arith.constant dense<0.000000e+00> : vector<8xf32>
    %85 = vector.multi_reduction <add>, %84, %cst_35 [1] : vector<8x8xf32> to vector<8xf32>
    %86 = vector.shape_cast %85 : vector<8xf32> to vector<8x1xf32>
    %87 = tpu.reciprocal %86 {approx = true} : vector<8x1xf32> -> vector<8x1xf32>
    %88 = vector.broadcast %87 : vector<8x1xf32> to vector<8x8xf32>
    %89 = arith.mulf %84, %88 : vector<8x8xf32>
    %cst_36 = arith.constant dense<0.000000e+00> : vector<8x8xf32>
    %90 = tpu.matmul %89, %74, %cst_36 {dimension_numbers = #tpu.dot_dimension_numbers<[1], [0], [0], [1], [0, 0, 1, 1], [], []>} : vector<8x8xf32>, vector<8x8xf32>, vector<8x8xf32> -> vector<8x8xf32>
    %91 = vector.extract_strided_slice %50 {offsets = [0, 16], sizes = [8, 8], strides = [1, 1]} : vector<8x32xf32> to vector<8x8xf32>
    %92 = vector.extract_strided_slice %51 {offsets = [0, 16], sizes = [8, 8], strides = [1, 1]} : vector<8x32xf32> to vector<8x8xf32>
    %93 = vector.extract_strided_slice %52 {offsets = [0, 16], sizes = [8, 8], strides = [1, 1]} : vector<8x32xf32> to vector<8x8xf32>
    "tpu.trace_start"() <{level = 10 : i32, message = "qd,kd->qk"}> : () -> ()
    %cst_37 = arith.constant dense<0.000000e+00> : vector<8x8xf32>
    %94 = tpu.matmul %91, %92, %cst_37 {dimension_numbers = #tpu.dot_dimension_numbers<[1], [1], [0], [0], [0, 0, 1, 0], [], []>} : vector<8x8xf32>, vector<8x8xf32>, vector<8x8xf32> -> vector<8x8xf32>
    "tpu.trace_stop"() : () -> ()
    %cst_38 = arith.constant 0.353553385 : f32
    %95 = vector.broadcast %cst_38 : f32 to vector<8x8xf32>
    %96 = arith.mulf %94, %95 : vector<8x8xf32>
    %97 = vector.broadcast %41 : vector<1x8xf32> to vector<8x8xf32>
    %98 = arith.addf %96, %97 : vector<8x8xf32>
    %cst_39 = arith.constant dense<0xFF800000> : vector<8xf32>
    %99 = vector.multi_reduction <maximumf>, %98, %cst_39 [1] : vector<8x8xf32> to vector<8xf32>
    %100 = vector.shape_cast %99 : vector<8xf32> to vector<8x1xf32>
    %101 = vector.broadcast %100 : vector<8x1xf32> to vector<8x8xf32>
    %102 = arith.subf %98, %101 : vector<8x8xf32>
    %103 = math.exp %102 : vector<8x8xf32>
    %cst_40 = arith.constant dense<0.000000e+00> : vector<8xf32>
    %104 = vector.multi_reduction <add>, %103, %cst_40 [1] : vector<8x8xf32> to vector<8xf32>
    %105 = vector.shape_cast %104 : vector<8xf32> to vector<8x1xf32>
    %106 = tpu.reciprocal %105 {approx = true} : vector<8x1xf32> -> vector<8x1xf32>
    %107 = vector.broadcast %106 : vector<8x1xf32> to vector<8x8xf32>
    %108 = arith.mulf %103, %107 : vector<8x8xf32>
    %cst_41 = arith.constant dense<0.000000e+00> : vector<8x8xf32>
    %109 = tpu.matmul %108, %93, %cst_41 {dimension_numbers = #tpu.dot_dimension_numbers<[1], [0], [0], [1], [0, 0, 1, 1], [], []>} : vector<8x8xf32>, vector<8x8xf32>, vector<8x8xf32> -> vector<8x8xf32>
    %110 = vector.extract_strided_slice %50 {offsets = [0, 24], sizes = [8, 8], strides = [1, 1]} : vector<8x32xf32> to vector<8x8xf32>
    %111 = vector.extract_strided_slice %51 {offsets = [0, 24], sizes = [8, 8], strides = [1, 1]} : vector<8x32xf32> to vector<8x8xf32>
    %112 = vector.extract_strided_slice %52 {offsets = [0, 24], sizes = [8, 8], strides = [1, 1]} : vector<8x32xf32> to vector<8x8xf32>
    "tpu.trace_start"() <{level = 10 : i32, message = "qd,kd->qk"}> : () -> ()
    %cst_42 = arith.constant dense<0.000000e+00> : vector<8x8xf32>
    %113 = tpu.matmul %110, %111, %cst_42 {dimension_numbers = #tpu.dot_dimension_numbers<[1], [1], [0], [0], [0, 0, 1, 0], [], []>} : vector<8x8xf32>, vector<8x8xf32>, vector<8x8xf32> -> vector<8x8xf32>
    "tpu.trace_stop"() : () -> ()
    %cst_43 = arith.constant 0.353553385 : f32
    %114 = vector.broadcast %cst_43 : f32 to vector<8x8xf32>
    %115 = arith.mulf %113, %114 : vector<8x8xf32>
    %116 = vector.broadcast %41 : vector<1x8xf32> to vector<8x8xf32>
    %117 = arith.addf %115, %116 : vector<8x8xf32>
    %cst_44 = arith.constant dense<0xFF800000> : vector<8xf32>
    %118 = vector.multi_reduction <maximumf>, %117, %cst_44 [1] : vector<8x8xf32> to vector<8xf32>
    %119 = vector.shape_cast %118 : vector<8xf32> to vector<8x1xf32>
    %120 = vector.broadcast %119 : vector<8x1xf32> to vector<8x8xf32>
    %121 = arith.subf %117, %120 : vector<8x8xf32>
    %122 = math.exp %121 : vector<8x8xf32>
    %cst_45 = arith.constant dense<0.000000e+00> : vector<8xf32>
    %123 = vector.multi_reduction <add>, %122, %cst_45 [1] : vector<8x8xf32> to vector<8xf32>
    %124 = vector.shape_cast %123 : vector<8xf32> to vector<8x1xf32>
    %125 = tpu.reciprocal %124 {approx = true} : vector<8x1xf32> -> vector<8x1xf32>
    %126 = vector.broadcast %125 : vector<8x1xf32> to vector<8x8xf32>
    %127 = arith.mulf %122, %126 : vector<8x8xf32>
    %cst_46 = arith.constant dense<0.000000e+00> : vector<8x8xf32>
    %128 = tpu.matmul %127, %112, %cst_46 {dimension_numbers = #tpu.dot_dimension_numbers<[1], [0], [0], [1], [0, 0, 1, 1], [], []>} : vector<8x8xf32>, vector<8x8xf32>, vector<8x8xf32> -> vector<8x8xf32>
    %129 = tpu.concatenate %71, %90, %109, %128 in 1 : vector<8x8xf32>, vector<8x8xf32>, vector<8x8xf32>, vector<8x8xf32> -> vector<8x32xf32>
    %c0_47 = arith.constant 0 : index
    %c0_48 = arith.constant 0 : index
    %c0_49 = arith.constant 0 : index
    %130 = vector.load %arg9[%c0_47, %c0_48, %c0_49] : memref<2x32x32xbf16, #tpu.memory_space<vmem>>, vector<1x32x32xbf16>
    %131 = vector.shape_cast %130 : vector<1x32x32xbf16> to vector<32x32xbf16>
    %132 = arith.truncf %129 : vector<8x32xf32> to vector<8x32xbf16>
    %cst_50 = arith.constant dense<0.000000e+00> : vector<8x32xf32>
    %133 = tpu.matmul %132, %131, %cst_50 {dimension_numbers = #tpu.dot_dimension_numbers<[1], [0], [0], [1], [0, 0, 1, 1], [], []>} : vector<8x32xbf16>, vector<32x32xbf16>, vector<8x32xf32> -> vector<8x32xf32>
    %c0_51 = arith.constant 0 : index
    %c0_52 = arith.constant 0 : index
    %c0_53 = arith.constant 0 : index
    %134 = vector.load %arg10[%c0_51, %c0_52, %c0_53] : memref<2x1x32xf32, #tpu.memory_space<vmem>>, vector<1x1x32xf32>
    %135 = vector.shape_cast %134 : vector<1x1x32xf32> to vector<1x32xf32>
    %136 = vector.broadcast %135 : vector<1x32xf32> to vector<8x32xf32>
    %137 = arith.addf %133, %136 : vector<8x32xf32>
    %138 = arith.addf %137, %35 : vector<8x32xf32>
    %c0_54 = arith.constant 0 : index
    %c0_55 = arith.constant 0 : index
    %c0_56 = arith.constant 0 : index
    %139 = vector.load %arg11[%c0_54, %c0_55, %c0_56] : memref<2x1x32xf32, #tpu.memory_space<vmem>>, vector<1x1x32xf32>
    %140 = vector.shape_cast %139 : vector<1x1x32xf32> to vector<1x32xf32>
    %c0_57 = arith.constant 0 : index
    %c0_58 = arith.constant 0 : index
    %c0_59 = arith.constant 0 : index
    %141 = vector.load %arg12[%c0_57, %c0_58, %c0_59] : memref<2x1x32xf32, #tpu.memory_space<vmem>>, vector<1x1x32xf32>
    %142 = vector.shape_cast %141 : vector<1x1x32xf32> to vector<1x32xf32>
    %cst_60 = arith.constant dense<0.000000e+00> : vector<8xf32>
    %143 = vector.multi_reduction <add>, %138, %cst_60 [1] : vector<8x32xf32> to vector<8xf32>
    %144 = vector.shape_cast %143 : vector<8xf32> to vector<8x1xf32>
    %cst_61 = arith.constant 3.200000e+01 : f32
    %145 = vector.broadcast %cst_61 : f32 to vector<8x1xf32>
    %146 = arith.divf %144, %145 : vector<8x1xf32>
    %147 = vector.broadcast %146 : vector<8x1xf32> to vector<8x32xf32>
    %148 = arith.subf %138, %147 : vector<8x32xf32>
    %149 = arith.mulf %148, %148 : vector<8x32xf32>
    %cst_62 = arith.constant dense<0.000000e+00> : vector<8xf32>
    %150 = vector.multi_reduction <add>, %149, %cst_62 [1] : vector<8x32xf32> to vector<8xf32>
    %151 = vector.shape_cast %150 : vector<8xf32> to vector<8x1xf32>
    %cst_63 = arith.constant 3.200000e+01 : f32
    %152 = vector.broadcast %cst_63 : f32 to vector<8x1xf32>
    %153 = arith.divf %151, %152 : vector<8x1xf32>
    %154 = vector.broadcast %146 : vector<8x1xf32> to vector<8x32xf32>
    %155 = arith.subf %138, %154 : vector<8x32xf32>
    %cst_64 = arith.constant 9.99999996E-13 : f32
    %156 = vector.broadcast %cst_64 : f32 to vector<8x1xf32>
    %157 = arith.addf %153, %156 : vector<8x1xf32>
    %158 = math.rsqrt %157 : vector<8x1xf32>
    %159 = vector.broadcast %158 : vector<8x1xf32> to vector<8x32xf32>
    %160 = arith.mulf %155, %159 : vector<8x32xf32>
    %161 = vector.broadcast %140 : vector<1x32xf32> to vector<8x32xf32>
    %162 = arith.mulf %160, %161 : vector<8x32xf32>
    %163 = vector.broadcast %142 : vector<1x32xf32> to vector<8x32xf32>
    %164 = arith.addf %162, %163 : vector<8x32xf32>
    %c0_65 = arith.constant 0 : index
    %c0_66 = arith.constant 0 : index
    %c0_67 = arith.constant 0 : index
    %165 = vector.load %arg13[%c0_65, %c0_66, %c0_67] : memref<2x32x64xbf16, #tpu.memory_space<vmem>>, vector<1x32x64xbf16>
    %166 = vector.shape_cast %165 : vector<1x32x64xbf16> to vector<32x64xbf16>
    %167 = arith.truncf %164 : vector<8x32xf32> to vector<8x32xbf16>
    %cst_68 = arith.constant dense<0.000000e+00> : vector<8x64xf32>
    %168 = tpu.matmul %167, %166, %cst_68 {dimension_numbers = #tpu.dot_dimension_numbers<[1], [0], [0], [1], [0, 0, 1, 1], [], []>} : vector<8x32xbf16>, vector<32x64xbf16>, vector<8x64xf32> -> vector<8x64xf32>
    %c0_69 = arith.constant 0 : index
    %c0_70 = arith.constant 0 : index
    %c0_71 = arith.constant 0 : index
    %169 = vector.load %arg14[%c0_69, %c0_70, %c0_71] : memref<2x1x64xf32, #tpu.memory_space<vmem>>, vector<1x1x64xf32>
    %170 = vector.shape_cast %169 : vector<1x1x64xf32> to vector<1x64xf32>
    %171 = vector.broadcast %170 : vector<1x64xf32> to vector<8x64xf32>
    %172 = arith.addf %168, %171 : vector<8x64xf32>
    %173 = arith.mulf %172, %172 : vector<8x64xf32>
    %174 = arith.mulf %172, %173 : vector<8x64xf32>
    %cst_72 = arith.constant 4.471500e-02 : f32
    %175 = vector.broadcast %cst_72 : f32 to vector<8x64xf32>
    %176 = arith.mulf %175, %174 : vector<8x64xf32>
    %177 = arith.addf %172, %176 : vector<8x64xf32>
    %cst_73 = arith.constant 0.797884583 : f32
    %178 = vector.broadcast %cst_73 : f32 to vector<8x64xf32>
    %179 = arith.mulf %178, %177 : vector<8x64xf32>
    %180 = math.tanh %179 : vector<8x64xf32>
    %cst_74 = arith.constant 1.000000e+00 : f32
    %181 = vector.broadcast %cst_74 : f32 to vector<8x64xf32>
    %182 = arith.addf %181, %180 : vector<8x64xf32>
    %cst_75 = arith.constant 5.000000e-01 : f32
    %183 = vector.broadcast %cst_75 : f32 to vector<8x64xf32>
    %184 = arith.mulf %183, %182 : vector<8x64xf32>
    %185 = arith.mulf %172, %184 : vector<8x64xf32>
    %c0_76 = arith.constant 0 : index
    %c0_77 = arith.constant 0 : index
    %c0_78 = arith.constant 0 : index
    %186 = vector.load %arg15[%c0_76, %c0_77, %c0_78] : memref<2x64x32xbf16, #tpu.memory_space<vmem>>, vector<1x64x32xbf16>
    %187 = vector.shape_cast %186 : vector<1x64x32xbf16> to vector<64x32xbf16>
    %188 = arith.truncf %185 : vector<8x64xf32> to vector<8x64xbf16>
    %cst_79 = arith.constant dense<0.000000e+00> : vector<8x32xf32>
    %189 = tpu.matmul %188, %187, %cst_79 {dimension_numbers = #tpu.dot_dimension_numbers<[1], [0], [0], [1], [0, 0, 1, 1], [], []>} : vector<8x64xbf16>, vector<64x32xbf16>, vector<8x32xf32> -> vector<8x32xf32>
    %c0_80 = arith.constant 0 : index
    %c0_81 = arith.constant 0 : index
    %c0_82 = arith.constant 0 : index
    %190 = vector.load %arg16[%c0_80, %c0_81, %c0_82] : memref<2x1x32xf32, #tpu.memory_space<vmem>>, vector<1x1x32xf32>
    %191 = vector.shape_cast %190 : vector<1x1x32xf32> to vector<1x32xf32>
    %192 = vector.broadcast %191 : vector<1x32xf32> to vector<8x32xf32>
    %193 = arith.addf %189, %192 : vector<8x32xf32>
    %194 = arith.addf %193, %164 : vector<8x32xf32>
    %c0_83 = arith.constant 0 : index
    %c0_84 = arith.constant 0 : index
    %c0_85 = arith.constant 0 : index
    %195 = vector.load %arg17[%c0_83, %c0_84, %c0_85] : memref<2x1x32xf32, #tpu.memory_space<vmem>>, vector<1x1x32xf32>
    %196 = vector.shape_cast %195 : vector<1x1x32xf32> to vector<1x32xf32>
    %c0_86 = arith.constant 0 : index
    %c0_87 = arith.constant 0 : index
    %c0_88 = arith.constant 0 : index
    %197 = vector.load %arg18[%c0_86, %c0_87, %c0_88] : memref<2x1x32xf32, #tpu.memory_space<vmem>>, vector<1x1x32xf32>
    %198 = vector.shape_cast %197 : vector<1x1x32xf32> to vector<1x32xf32>
    %cst_89 = arith.constant dense<0.000000e+00> : vector<8xf32>
    %199 = vector.multi_reduction <add>, %194, %cst_89 [1] : vector<8x32xf32> to vector<8xf32>
    %200 = vector.shape_cast %199 : vector<8xf32> to vector<8x1xf32>
    %cst_90 = arith.constant 3.200000e+01 : f32
    %201 = vector.broadcast %cst_90 : f32 to vector<8x1xf32>
    %202 = arith.divf %200, %201 : vector<8x1xf32>
    %203 = vector.broadcast %202 : vector<8x1xf32> to vector<8x32xf32>
    %204 = arith.subf %194, %203 : vector<8x32xf32>
    %205 = arith.mulf %204, %204 : vector<8x32xf32>
    %cst_91 = arith.constant dense<0.000000e+00> : vector<8xf32>
    %206 = vector.multi_reduction <add>, %205, %cst_91 [1] : vector<8x32xf32> to vector<8xf32>
    %207 = vector.shape_cast %206 : vector<8xf32> to vector<8x1xf32>
    %cst_92 = arith.constant 3.200000e+01 : f32
    %208 = vector.broadcast %cst_92 : f32 to vector<8x1xf32>
    %209 = arith.divf %207, %208 : vector<8x1xf32>
    %210 = vector.broadcast %202 : vector<8x1xf32> to vector<8x32xf32>
    %211 = arith.subf %194, %210 : vector<8x32xf32>
    %cst_93 = arith.constant 9.99999996E-13 : f32
    %212 = vector.broadcast %cst_93 : f32 to vector<8x1xf32>
    %213 = arith.addf %209, %212 : vector<8x1xf32>
    %214 = math.rsqrt %213 : vector<8x1xf32>
    %215 = vector.broadcast %214 : vector<8x1xf32> to vector<8x32xf32>
    %216 = arith.mulf %211, %215 : vector<8x32xf32>
    %217 = vector.broadcast %196 : vector<1x32xf32> to vector<8x32xf32>
    %218 = arith.mulf %216, %217 : vector<8x32xf32>
    %219 = vector.broadcast %198 : vector<1x32xf32> to vector<8x32xf32>
    %220 = arith.addf %218, %219 : vector<8x32xf32>
    %c1 = arith.constant 1 : index
    %c0_94 = arith.constant 0 : index
    %c0_95 = arith.constant 0 : index
    %221 = vector.load %arg7[%c1, %c0_94, %c0_95] : memref<2x32x96xbf16, #tpu.memory_space<vmem>>, vector<1x32x96xbf16>
    %222 = vector.shape_cast %221 : vector<1x32x96xbf16> to vector<32x96xbf16>
    %223 = arith.truncf %220 : vector<8x32xf32> to vector<8x32xbf16>
    %cst_96 = arith.constant dense<0.000000e+00> : vector<8x96xf32>
    %224 = tpu.matmul %223, %222, %cst_96 {dimension_numbers = #tpu.dot_dimension_numbers<[1], [0], [0], [1], [0, 0, 1, 1], [], []>} : vector<8x32xbf16>, vector<32x96xbf16>, vector<8x96xf32> -> vector<8x96xf32>
    %c1_97 = arith.constant 1 : index
    %c0_98 = arith.constant 0 : index
    %c0_99 = arith.constant 0 : index
    %225 = vector.load %arg8[%c1_97, %c0_98, %c0_99] : memref<2x1x96xf32, #tpu.memory_space<vmem>>, vector<1x1x96xf32>
    %226 = vector.shape_cast %225 : vector<1x1x96xf32> to vector<1x96xf32>
    %227 = vector.broadcast %226 : vector<1x96xf32> to vector<8x96xf32>
    %228 = arith.addf %224, %227 : vector<8x96xf32>
    %229 = vector.extract_strided_slice %228 {offsets = [0, 0], sizes = [8, 32], strides = [1, 1]} : vector<8x96xf32> to vector<8x32xf32>
    %230 = vector.extract_strided_slice %228 {offsets = [0, 32], sizes = [8, 32], strides = [1, 1]} : vector<8x96xf32> to vector<8x32xf32>
    %231 = vector.extract_strided_slice %228 {offsets = [0, 64], sizes = [8, 32], strides = [1, 1]} : vector<8x96xf32> to vector<8x32xf32>
    %232 = vector.extract_strided_slice %229 {offsets = [0, 0], sizes = [8, 8], strides = [1, 1]} : vector<8x32xf32> to vector<8x8xf32>
    %233 = vector.extract_strided_slice %230 {offsets = [0, 0], sizes = [8, 8], strides = [1, 1]} : vector<8x32xf32> to vector<8x8xf32>
    %234 = vector.extract_strided_slice %231 {offsets = [0, 0], sizes = [8, 8], strides = [1, 1]} : vector<8x32xf32> to vector<8x8xf32>
    "tpu.trace_start"() <{level = 10 : i32, message = "qd,kd->qk"}> : () -> ()
    %cst_100 = arith.constant dense<0.000000e+00> : vector<8x8xf32>
    %235 = tpu.matmul %232, %233, %cst_100 {dimension_numbers = #tpu.dot_dimension_numbers<[1], [1], [0], [0], [0, 0, 1, 0], [], []>} : vector<8x8xf32>, vector<8x8xf32>, vector<8x8xf32> -> vector<8x8xf32>
    "tpu.trace_stop"() : () -> ()
    %cst_101 = arith.constant 0.353553385 : f32
    %236 = vector.broadcast %cst_101 : f32 to vector<8x8xf32>
    %237 = arith.mulf %235, %236 : vector<8x8xf32>
    %238 = vector.broadcast %41 : vector<1x8xf32> to vector<8x8xf32>
    %239 = arith.addf %237, %238 : vector<8x8xf32>
    %cst_102 = arith.constant dense<0xFF800000> : vector<8xf32>
    %240 = vector.multi_reduction <maximumf>, %239, %cst_102 [1] : vector<8x8xf32> to vector<8xf32>
    %241 = vector.shape_cast %240 : vector<8xf32> to vector<8x1xf32>
    %242 = vector.broadcast %241 : vector<8x1xf32> to vector<8x8xf32>
    %243 = arith.subf %239, %242 : vector<8x8xf32>
    %244 = math.exp %243 : vector<8x8xf32>
    %cst_103 = arith.constant dense<0.000000e+00> : vector<8xf32>
    %245 = vector.multi_reduction <add>, %244, %cst_103 [1] : vector<8x8xf32> to vector<8xf32>
    %246 = vector.shape_cast %245 : vector<8xf32> to vector<8x1xf32>
    %247 = tpu.reciprocal %246 {approx = true} : vector<8x1xf32> -> vector<8x1xf32>
    %248 = vector.broadcast %247 : vector<8x1xf32> to vector<8x8xf32>
    %249 = arith.mulf %244, %248 : vector<8x8xf32>
    %cst_104 = arith.constant dense<0.000000e+00> : vector<8x8xf32>
    %250 = tpu.matmul %249, %234, %cst_104 {dimension_numbers = #tpu.dot_dimension_numbers<[1], [0], [0], [1], [0, 0, 1, 1], [], []>} : vector<8x8xf32>, vector<8x8xf32>, vector<8x8xf32> -> vector<8x8xf32>
    %251 = vector.extract_strided_slice %229 {offsets = [0, 8], sizes = [8, 8], strides = [1, 1]} : vector<8x32xf32> to vector<8x8xf32>
    %252 = vector.extract_strided_slice %230 {offsets = [0, 8], sizes = [8, 8], strides = [1, 1]} : vector<8x32xf32> to vector<8x8xf32>
    %253 = vector.extract_strided_slice %231 {offsets = [0, 8], sizes = [8, 8], strides = [1, 1]} : vector<8x32xf32> to vector<8x8xf32>
    "tpu.trace_start"() <{level = 10 : i32, message = "qd,kd->qk"}> : () -> ()
    %cst_105 = arith.constant dense<0.000000e+00> : vector<8x8xf32>
    %254 = tpu.matmul %251, %252, %cst_105 {dimension_numbers = #tpu.dot_dimension_numbers<[1], [1], [0], [0], [0, 0, 1, 0], [], []>} : vector<8x8xf32>, vector<8x8xf32>, vector<8x8xf32> -> vector<8x8xf32>
    "tpu.trace_stop"() : () -> ()
    %cst_106 = arith.constant 0.353553385 : f32
    %255 = vector.broadcast %cst_106 : f32 to vector<8x8xf32>
    %256 = arith.mulf %254, %255 : vector<8x8xf32>
    %257 = vector.broadcast %41 : vector<1x8xf32> to vector<8x8xf32>
    %258 = arith.addf %256, %257 : vector<8x8xf32>
    %cst_107 = arith.constant dense<0xFF800000> : vector<8xf32>
    %259 = vector.multi_reduction <maximumf>, %258, %cst_107 [1] : vector<8x8xf32> to vector<8xf32>
    %260 = vector.shape_cast %259 : vector<8xf32> to vector<8x1xf32>
    %261 = vector.broadcast %260 : vector<8x1xf32> to vector<8x8xf32>
    %262 = arith.subf %258, %261 : vector<8x8xf32>
    %263 = math.exp %262 : vector<8x8xf32>
    %cst_108 = arith.constant dense<0.000000e+00> : vector<8xf32>
    %264 = vector.multi_reduction <add>, %263, %cst_108 [1] : vector<8x8xf32> to vector<8xf32>
    %265 = vector.shape_cast %264 : vector<8xf32> to vector<8x1xf32>
    %266 = tpu.reciprocal %265 {approx = true} : vector<8x1xf32> -> vector<8x1xf32>
    %267 = vector.broadcast %266 : vector<8x1xf32> to vector<8x8xf32>
    %268 = arith.mulf %263, %267 : vector<8x8xf32>
    %cst_109 = arith.constant dense<0.000000e+00> : vector<8x8xf32>
    %269 = tpu.matmul %268, %253, %cst_109 {dimension_numbers = #tpu.dot_dimension_numbers<[1], [0], [0], [1], [0, 0, 1, 1], [], []>} : vector<8x8xf32>, vector<8x8xf32>, vector<8x8xf32> -> vector<8x8xf32>
    %270 = vector.extract_strided_slice %229 {offsets = [0, 16], sizes = [8, 8], strides = [1, 1]} : vector<8x32xf32> to vector<8x8xf32>
    %271 = vector.extract_strided_slice %230 {offsets = [0, 16], sizes = [8, 8], strides = [1, 1]} : vector<8x32xf32> to vector<8x8xf32>
    %272 = vector.extract_strided_slice %231 {offsets = [0, 16], sizes = [8, 8], strides = [1, 1]} : vector<8x32xf32> to vector<8x8xf32>
    "tpu.trace_start"() <{level = 10 : i32, message = "qd,kd->qk"}> : () -> ()
    %cst_110 = arith.constant dense<0.000000e+00> : vector<8x8xf32>
    %273 = tpu.matmul %270, %271, %cst_110 {dimension_numbers = #tpu.dot_dimension_numbers<[1], [1], [0], [0], [0, 0, 1, 0], [], []>} : vector<8x8xf32>, vector<8x8xf32>, vector<8x8xf32> -> vector<8x8xf32>
    "tpu.trace_stop"() : () -> ()
    %cst_111 = arith.constant 0.353553385 : f32
    %274 = vector.broadcast %cst_111 : f32 to vector<8x8xf32>
    %275 = arith.mulf %273, %274 : vector<8x8xf32>
    %276 = vector.broadcast %41 : vector<1x8xf32> to vector<8x8xf32>
    %277 = arith.addf %275, %276 : vector<8x8xf32>
    %cst_112 = arith.constant dense<0xFF800000> : vector<8xf32>
    %278 = vector.multi_reduction <maximumf>, %277, %cst_112 [1] : vector<8x8xf32> to vector<8xf32>
    %279 = vector.shape_cast %278 : vector<8xf32> to vector<8x1xf32>
    %280 = vector.broadcast %279 : vector<8x1xf32> to vector<8x8xf32>
    %281 = arith.subf %277, %280 : vector<8x8xf32>
    %282 = math.exp %281 : vector<8x8xf32>
    %cst_113 = arith.constant dense<0.000000e+00> : vector<8xf32>
    %283 = vector.multi_reduction <add>, %282, %cst_113 [1] : vector<8x8xf32> to vector<8xf32>
    %284 = vector.shape_cast %283 : vector<8xf32> to vector<8x1xf32>
    %285 = tpu.reciprocal %284 {approx = true} : vector<8x1xf32> -> vector<8x1xf32>
    %286 = vector.broadcast %285 : vector<8x1xf32> to vector<8x8xf32>
    %287 = arith.mulf %282, %286 : vector<8x8xf32>
    %cst_114 = arith.constant dense<0.000000e+00> : vector<8x8xf32>
    %288 = tpu.matmul %287, %272, %cst_114 {dimension_numbers = #tpu.dot_dimension_numbers<[1], [0], [0], [1], [0, 0, 1, 1], [], []>} : vector<8x8xf32>, vector<8x8xf32>, vector<8x8xf32> -> vector<8x8xf32>
    %289 = vector.extract_strided_slice %229 {offsets = [0, 24], sizes = [8, 8], strides = [1, 1]} : vector<8x32xf32> to vector<8x8xf32>
    %290 = vector.extract_strided_slice %230 {offsets = [0, 24], sizes = [8, 8], strides = [1, 1]} : vector<8x32xf32> to vector<8x8xf32>
    %291 = vector.extract_strided_slice %231 {offsets = [0, 24], sizes = [8, 8], strides = [1, 1]} : vector<8x32xf32> to vector<8x8xf32>
    "tpu.trace_start"() <{level = 10 : i32, message = "qd,kd->qk"}> : () -> ()
    %cst_115 = arith.constant dense<0.000000e+00> : vector<8x8xf32>
    %292 = tpu.matmul %289, %290, %cst_115 {dimension_numbers = #tpu.dot_dimension_numbers<[1], [1], [0], [0], [0, 0, 1, 0], [], []>} : vector<8x8xf32>, vector<8x8xf32>, vector<8x8xf32> -> vector<8x8xf32>
    "tpu.trace_stop"() : () -> ()
    %cst_116 = arith.constant 0.353553385 : f32
    %293 = vector.broadcast %cst_116 : f32 to vector<8x8xf32>
    %294 = arith.mulf %292, %293 : vector<8x8xf32>
    %295 = vector.broadcast %41 : vector<1x8xf32> to vector<8x8xf32>
    %296 = arith.addf %294, %295 : vector<8x8xf32>
    %cst_117 = arith.constant dense<0xFF800000> : vector<8xf32>
    %297 = vector.multi_reduction <maximumf>, %296, %cst_117 [1] : vector<8x8xf32> to vector<8xf32>
    %298 = vector.shape_cast %297 : vector<8xf32> to vector<8x1xf32>
    %299 = vector.broadcast %298 : vector<8x1xf32> to vector<8x8xf32>
    %300 = arith.subf %296, %299 : vector<8x8xf32>
    %301 = math.exp %300 : vector<8x8xf32>
    %cst_118 = arith.constant dense<0.000000e+00> : vector<8xf32>
    %302 = vector.multi_reduction <add>, %301, %cst_118 [1] : vector<8x8xf32> to vector<8xf32>
    %303 = vector.shape_cast %302 : vector<8xf32> to vector<8x1xf32>
    %304 = tpu.reciprocal %303 {approx = true} : vector<8x1xf32> -> vector<8x1xf32>
    %305 = vector.broadcast %304 : vector<8x1xf32> to vector<8x8xf32>
    %306 = arith.mulf %301, %305 : vector<8x8xf32>
    %cst_119 = arith.constant dense<0.000000e+00> : vector<8x8xf32>
    %307 = tpu.matmul %306, %291, %cst_119 {dimension_numbers = #tpu.dot_dimension_numbers<[1], [0], [0], [1], [0, 0, 1, 1], [], []>} : vector<8x8xf32>, vector<8x8xf32>, vector<8x8xf32> -> vector<8x8xf32>
    %308 = tpu.concatenate %250, %269, %288, %307 in 1 : vector<8x8xf32>, vector<8x8xf32>, vector<8x8xf32>, vector<8x8xf32> -> vector<8x32xf32>
    %c1_120 = arith.constant 1 : index
    %c0_121 = arith.constant 0 : index
    %c0_122 = arith.constant 0 : index
    %309 = vector.load %arg9[%c1_120, %c0_121, %c0_122] : memref<2x32x32xbf16, #tpu.memory_space<vmem>>, vector<1x32x32xbf16>
    %310 = vector.shape_cast %309 : vector<1x32x32xbf16> to vector<32x32xbf16>
    %311 = arith.truncf %308 : vector<8x32xf32> to vector<8x32xbf16>
    %cst_123 = arith.constant dense<0.000000e+00> : vector<8x32xf32>
    %312 = tpu.matmul %311, %310, %cst_123 {dimension_numbers = #tpu.dot_dimension_numbers<[1], [0], [0], [1], [0, 0, 1, 1], [], []>} : vector<8x32xbf16>, vector<32x32xbf16>, vector<8x32xf32> -> vector<8x32xf32>
    %c1_124 = arith.constant 1 : index
    %c0_125 = arith.constant 0 : index
    %c0_126 = arith.constant 0 : index
    %313 = vector.load %arg10[%c1_124, %c0_125, %c0_126] : memref<2x1x32xf32, #tpu.memory_space<vmem>>, vector<1x1x32xf32>
    %314 = vector.shape_cast %313 : vector<1x1x32xf32> to vector<1x32xf32>
    %315 = vector.broadcast %314 : vector<1x32xf32> to vector<8x32xf32>
    %316 = arith.addf %312, %315 : vector<8x32xf32>
    %317 = arith.addf %316, %220 : vector<8x32xf32>
    %c1_127 = arith.constant 1 : index
    %c0_128 = arith.constant 0 : index
    %c0_129 = arith.constant 0 : index
    %318 = vector.load %arg11[%c1_127, %c0_128, %c0_129] : memref<2x1x32xf32, #tpu.memory_space<vmem>>, vector<1x1x32xf32>
    %319 = vector.shape_cast %318 : vector<1x1x32xf32> to vector<1x32xf32>
    %c1_130 = arith.constant 1 : index
    %c0_131 = arith.constant 0 : index
    %c0_132 = arith.constant 0 : index
    %320 = vector.load %arg12[%c1_130, %c0_131, %c0_132] : memref<2x1x32xf32, #tpu.memory_space<vmem>>, vector<1x1x32xf32>
    %321 = vector.shape_cast %320 : vector<1x1x32xf32> to vector<1x32xf32>
    %cst_133 = arith.constant dense<0.000000e+00> : vector<8xf32>
    %322 = vector.multi_reduction <add>, %317, %cst_133 [1] : vector<8x32xf32> to vector<8xf32>
    %323 = vector.shape_cast %322 : vector<8xf32> to vector<8x1xf32>
    %cst_134 = arith.constant 3.200000e+01 : f32
    %324 = vector.broadcast %cst_134 : f32 to vector<8x1xf32>
    %325 = arith.divf %323, %324 : vector<8x1xf32>
    %326 = vector.broadcast %325 : vector<8x1xf32> to vector<8x32xf32>
    %327 = arith.subf %317, %326 : vector<8x32xf32>
    %328 = arith.mulf %327, %327 : vector<8x32xf32>
    %cst_135 = arith.constant dense<0.000000e+00> : vector<8xf32>
    %329 = vector.multi_reduction <add>, %328, %cst_135 [1] : vector<8x32xf32> to vector<8xf32>
    %330 = vector.shape_cast %329 : vector<8xf32> to vector<8x1xf32>
    %cst_136 = arith.constant 3.200000e+01 : f32
    %331 = vector.broadcast %cst_136 : f32 to vector<8x1xf32>
    %332 = arith.divf %330, %331 : vector<8x1xf32>
    %333 = vector.broadcast %325 : vector<8x1xf32> to vector<8x32xf32>
    %334 = arith.subf %317, %333 : vector<8x32xf32>
    %cst_137 = arith.constant 9.99999996E-13 : f32
    %335 = vector.broadcast %cst_137 : f32 to vector<8x1xf32>
    %336 = arith.addf %332, %335 : vector<8x1xf32>
    %337 = math.rsqrt %336 : vector<8x1xf32>
    %338 = vector.broadcast %337 : vector<8x1xf32> to vector<8x32xf32>
    %339 = arith.mulf %334, %338 : vector<8x32xf32>
    %340 = vector.broadcast %319 : vector<1x32xf32> to vector<8x32xf32>
    %341 = arith.mulf %339, %340 : vector<8x32xf32>
    %342 = vector.broadcast %321 : vector<1x32xf32> to vector<8x32xf32>
    %343 = arith.addf %341, %342 : vector<8x32xf32>
    %c1_138 = arith.constant 1 : index
    %c0_139 = arith.constant 0 : index
    %c0_140 = arith.constant 0 : index
    %344 = vector.load %arg13[%c1_138, %c0_139, %c0_140] : memref<2x32x64xbf16, #tpu.memory_space<vmem>>, vector<1x32x64xbf16>
    %345 = vector.shape_cast %344 : vector<1x32x64xbf16> to vector<32x64xbf16>
    %346 = arith.truncf %343 : vector<8x32xf32> to vector<8x32xbf16>
    %cst_141 = arith.constant dense<0.000000e+00> : vector<8x64xf32>
    %347 = tpu.matmul %346, %345, %cst_141 {dimension_numbers = #tpu.dot_dimension_numbers<[1], [0], [0], [1], [0, 0, 1, 1], [], []>} : vector<8x32xbf16>, vector<32x64xbf16>, vector<8x64xf32> -> vector<8x64xf32>
    %c1_142 = arith.constant 1 : index
    %c0_143 = arith.constant 0 : index
    %c0_144 = arith.constant 0 : index
    %348 = vector.load %arg14[%c1_142, %c0_143, %c0_144] : memref<2x1x64xf32, #tpu.memory_space<vmem>>, vector<1x1x64xf32>
    %349 = vector.shape_cast %348 : vector<1x1x64xf32> to vector<1x64xf32>
    %350 = vector.broadcast %349 : vector<1x64xf32> to vector<8x64xf32>
    %351 = arith.addf %347, %350 : vector<8x64xf32>
    %352 = arith.mulf %351, %351 : vector<8x64xf32>
    %353 = arith.mulf %351, %352 : vector<8x64xf32>
    %cst_145 = arith.constant 4.471500e-02 : f32
    %354 = vector.broadcast %cst_145 : f32 to vector<8x64xf32>
    %355 = arith.mulf %354, %353 : vector<8x64xf32>
    %356 = arith.addf %351, %355 : vector<8x64xf32>
    %cst_146 = arith.constant 0.797884583 : f32
    %357 = vector.broadcast %cst_146 : f32 to vector<8x64xf32>
    %358 = arith.mulf %357, %356 : vector<8x64xf32>
    %359 = math.tanh %358 : vector<8x64xf32>
    %cst_147 = arith.constant 1.000000e+00 : f32
    %360 = vector.broadcast %cst_147 : f32 to vector<8x64xf32>
    %361 = arith.addf %360, %359 : vector<8x64xf32>
    %cst_148 = arith.constant 5.000000e-01 : f32
    %362 = vector.broadcast %cst_148 : f32 to vector<8x64xf32>
    %363 = arith.mulf %362, %361 : vector<8x64xf32>
    %364 = arith.mulf %351, %363 : vector<8x64xf32>
    %c1_149 = arith.constant 1 : index
    %c0_150 = arith.constant 0 : index
    %c0_151 = arith.constant 0 : index
    %365 = vector.load %arg15[%c1_149, %c0_150, %c0_151] : memref<2x64x32xbf16, #tpu.memory_space<vmem>>, vector<1x64x32xbf16>
    %366 = vector.shape_cast %365 : vector<1x64x32xbf16> to vector<64x32xbf16>
    %367 = arith.truncf %364 : vector<8x64xf32> to vector<8x64xbf16>
    %cst_152 = arith.constant dense<0.000000e+00> : vector<8x32xf32>
    %368 = tpu.matmul %367, %366, %cst_152 {dimension_numbers = #tpu.dot_dimension_numbers<[1], [0], [0], [1], [0, 0, 1, 1], [], []>} : vector<8x64xbf16>, vector<64x32xbf16>, vector<8x32xf32> -> vector<8x32xf32>
    %c1_153 = arith.constant 1 : index
    %c0_154 = arith.constant 0 : index
    %c0_155 = arith.constant 0 : index
    %369 = vector.load %arg16[%c1_153, %c0_154, %c0_155] : memref<2x1x32xf32, #tpu.memory_space<vmem>>, vector<1x1x32xf32>
    %370 = vector.shape_cast %369 : vector<1x1x32xf32> to vector<1x32xf32>
    %371 = vector.broadcast %370 : vector<1x32xf32> to vector<8x32xf32>
    %372 = arith.addf %368, %371 : vector<8x32xf32>
    %373 = arith.addf %372, %343 : vector<8x32xf32>
    %c1_156 = arith.constant 1 : index
    %c0_157 = arith.constant 0 : index
    %c0_158 = arith.constant 0 : index
    %374 = vector.load %arg17[%c1_156, %c0_157, %c0_158] : memref<2x1x32xf32, #tpu.memory_space<vmem>>, vector<1x1x32xf32>
    %375 = vector.shape_cast %374 : vector<1x1x32xf32> to vector<1x32xf32>
    %c1_159 = arith.constant 1 : index
    %c0_160 = arith.constant 0 : index
    %c0_161 = arith.constant 0 : index
    %376 = vector.load %arg18[%c1_159, %c0_160, %c0_161] : memref<2x1x32xf32, #tpu.memory_space<vmem>>, vector<1x1x32xf32>
    %377 = vector.shape_cast %376 : vector<1x1x32xf32> to vector<1x32xf32>
    %cst_162 = arith.constant dense<0.000000e+00> : vector<8xf32>
    %378 = vector.multi_reduction <add>, %373, %cst_162 [1] : vector<8x32xf32> to vector<8xf32>
    %379 = vector.shape_cast %378 : vector<8xf32> to vector<8x1xf32>
    %cst_163 = arith.constant 3.200000e+01 : f32
    %380 = vector.broadcast %cst_163 : f32 to vector<8x1xf32>
    %381 = arith.divf %379, %380 : vector<8x1xf32>
    %382 = vector.broadcast %381 : vector<8x1xf32> to vector<8x32xf32>
    %383 = arith.subf %373, %382 : vector<8x32xf32>
    %384 = arith.mulf %383, %383 : vector<8x32xf32>
    %cst_164 = arith.constant dense<0.000000e+00> : vector<8xf32>
    %385 = vector.multi_reduction <add>, %384, %cst_164 [1] : vector<8x32xf32> to vector<8xf32>
    %386 = vector.shape_cast %385 : vector<8xf32> to vector<8x1xf32>
    %cst_165 = arith.constant 3.200000e+01 : f32
    %387 = vector.broadcast %cst_165 : f32 to vector<8x1xf32>
    %388 = arith.divf %386, %387 : vector<8x1xf32>
    %389 = vector.broadcast %381 : vector<8x1xf32> to vector<8x32xf32>
    %390 = arith.subf %373, %389 : vector<8x32xf32>
    %cst_166 = arith.constant 9.99999996E-13 : f32
    %391 = vector.broadcast %cst_166 : f32 to vector<8x1xf32>
    %392 = arith.addf %388, %391 : vector<8x1xf32>
    %393 = math.rsqrt %392 : vector<8x1xf32>
    %394 = vector.broadcast %393 : vector<8x1xf32> to vector<8x32xf32>
    %395 = arith.mulf %390, %394 : vector<8x32xf32>
    %396 = vector.broadcast %375 : vector<1x32xf32> to vector<8x32xf32>
    %397 = arith.mulf %395, %396 : vector<8x32xf32>
    %398 = vector.broadcast %377 : vector<1x32xf32> to vector<8x32xf32>
    %399 = arith.addf %397, %398 : vector<8x32xf32>
    %400 = vector.extract_strided_slice %399 {offsets = [0, 0], sizes = [1, 32], strides = [1, 1]} : vector<8x32xf32> to vector<1x32xf32>
    %c0_167 = arith.constant 0 : index
    %c0_168 = arith.constant 0 : index
    %401 = vector.load %arg19[%c0_167, %c0_168] : memref<32x32xbf16, #tpu.memory_space<vmem>>, vector<32x32xbf16>
    %402 = arith.truncf %400 : vector<1x32xf32> to vector<1x32xbf16>
    %cst_169 = arith.constant dense<0.000000e+00> : vector<1x32xf32>
    %403 = tpu.matmul %402, %401, %cst_169 {dimension_numbers = #tpu.dot_dimension_numbers<[1], [0], [0], [1], [0, 0, 1, 1], [], []>} : vector<1x32xbf16>, vector<32x32xbf16>, vector<1x32xf32> -> vector<1x32xf32>
    %c0_170 = arith.constant 0 : index
    %c0_171 = arith.constant 0 : index
    %404 = vector.load %arg20[%c0_170, %c0_171] : memref<1x32xf32, #tpu.memory_space<vmem>>, vector<1x32xf32>
    %405 = arith.addf %403, %404 : vector<1x32xf32>
    %406 = math.tanh %405 : vector<1x32xf32>
    %c0_172 = arith.constant 0 : index
    %c0_173 = arith.constant 0 : index
    %407 = vector.load %arg21[%c0_172, %c0_173] : memref<32x128xbf16, #tpu.memory_space<vmem>>, vector<32x128xbf16>
    %408 = arith.truncf %406 : vector<1x32xf32> to vector<1x32xbf16>
    %cst_174 = arith.constant dense<0.000000e+00> : vector<1x128xf32>
    %409 = tpu.matmul %408, %407, %cst_174 {dimension_numbers = #tpu.dot_dimension_numbers<[1], [0], [0], [1], [0, 0, 1, 1], [], []>} : vector<1x32xbf16>, vector<32x128xbf16>, vector<1x128xf32> -> vector<1x128xf32>
    %c0_175 = arith.constant 0 : index
    %c0_176 = arith.constant 0 : index
    %410 = vector.load %arg22[%c0_175, %c0_176] : memref<1x128xf32, #tpu.memory_space<vmem>>, vector<1x128xf32>
    %411 = arith.addf %409, %410 : vector<1x128xf32>
    %cst_177 = arith.constant 0.000000e+00 : f32
    %412 = vector.broadcast %cst_177 : f32 to vector<1x128xf32>
    %413 = arith.maximumf %411, %412 : vector<1x128xf32>
    %c0_178 = arith.constant 0 : index
    %c0_179 = arith.constant 0 : index
    %414 = vector.load %arg23[%c0_178, %c0_179] : memref<128x128xbf16, #tpu.memory_space<vmem>>, vector<128x128xbf16>
    %415 = arith.truncf %413 : vector<1x128xf32> to vector<1x128xbf16>
    %cst_180 = arith.constant dense<0.000000e+00> : vector<1x128xf32>
    %416 = tpu.matmul %415, %414, %cst_180 {dimension_numbers = #tpu.dot_dimension_numbers<[1], [0], [0], [1], [0, 0, 1, 1], [], []>} : vector<1x128xbf16>, vector<128x128xbf16>, vector<1x128xf32> -> vector<1x128xf32>
    %c0_181 = arith.constant 0 : index
    %c0_182 = arith.constant 0 : index
    %417 = vector.load %arg24[%c0_181, %c0_182] : memref<1x128xf32, #tpu.memory_space<vmem>>, vector<1x128xf32>
    %418 = arith.addf %416, %417 : vector<1x128xf32>
    %419 = tpu.iota {dimensions = array<i32: 1>} : vector<1x128xi32>
    %c3_i32 = arith.constant 3 : i32
    %420 = vector.broadcast %c3_i32 : i32 to vector<1x128xi32>
    %421 = arith.cmpi slt, %419, %420 : vector<1x128xi32>
    %cst_183 = arith.constant -1.000000e+30 : f32
    %422 = vector.broadcast %cst_183 : f32 to vector<1x128xf32>
    %423 = arith.select %421, %418, %422 : vector<1x128xi1>, vector<1x128xf32>
    %cst_184 = arith.constant dense<0xFF800000> : vector<1xf32>
    %424 = vector.multi_reduction <maximumf>, %423, %cst_184 [1] : vector<1x128xf32> to vector<1xf32>
    %425 = vector.shape_cast %424 : vector<1xf32> to vector<1x1xf32>
    %426 = vector.broadcast %425 : vector<1x1xf32> to vector<1x128xf32>
    %427 = arith.subf %423, %426 : vector<1x128xf32>
    %428 = math.exp %427 : vector<1x128xf32>
    %cst_185 = arith.constant dense<0.000000e+00> : vector<1xf32>
    %429 = vector.multi_reduction <add>, %428, %cst_185 [1] : vector<1x128xf32> to vector<1xf32>
    %430 = vector.shape_cast %429 : vector<1xf32> to vector<1x1xf32>
    %431 = vector.broadcast %430 : vector<1x1xf32> to vector<1x128xf32>
    %432 = arith.divf %428, %431 : vector<1x128xf32>
    %cst_186 = arith.constant 0.000000e+00 : f32
    %433 = vector.broadcast %cst_186 : f32 to vector<1x128xf32>
    %434 = arith.select %421, %432, %433 : vector<1x128xi1>, vector<1x128xf32>
    %c0_187 = arith.constant 0 : index
    %c0_188 = arith.constant 0 : index
    %c0_189 = arith.constant 0 : index
    %435 = vector.load %arg26[%c0_187, %c0_188, %c0_189] : memref<1x1x128xf32, #tpu.memory_space<vmem>>, vector<1x1x128xf32>
    %436 = vector.shape_cast %435 : vector<1x1x128xf32> to vector<1x128xf32>
    %437 = vector.shape_cast %434 : vector<1x128xf32> to vector<1x1x128xf32>
    tpu.vector_store %arg26[%c0_187, %c0_188, %c0_189], %437 {strides = array<i32>} : memref<1x1x128xf32, #tpu.memory_space<vmem>>, vector<1x1x128xf32>,
    %c0_190 = arith.constant 0 : index
    %c0_191 = arith.constant 0 : index
    %c0_192 = arith.constant 0 : index
    %438 = vector.load %arg25[%c0_190, %c0_191, %c0_192] : memref<1x1x128xf32, #tpu.memory_space<vmem>>, vector<1x1x128xf32>
    %439 = vector.shape_cast %438 : vector<1x1x128xf32> to vector<1x128xf32>
    %440 = arith.subf %434, %439 : vector<1x128xf32>
    %441 = arith.mulf %440, %440 : vector<1x128xf32>
    %442 = vector.shape_cast %441 : vector<1x128xf32> to vector<1x1x128xf32>
    %cst_193 = arith.constant dense<0.000000e+00> : vector<1xf32>
    %443 = vector.multi_reduction <add>, %442, %cst_193 [1, 2] : vector<1x1x128xf32> to vector<1xf32>
    %444 = vector.shape_cast %443 : vector<1xf32> to vector<1x1x1xf32>
    %445 = vector.extract %444[0, 0, 0] : f32 from vector<1x1x1xf32>
    %446 = vector.broadcast %445 : f32 to vector<1x1x1xf32>
    %c0_194 = arith.constant 0 : index
    %c0_195 = arith.constant 0 : index
    %c0_196 = arith.constant 0 : index
    %447 = vector.load %arg27[%c0_194, %c0_195, %c0_196] : memref<1x1x1xf32, #tpu.memory_space<vmem>>, vector<1x1x1xf32>
    tpu.vector_store %arg27[%c0_194, %c0_195, %c0_196], %446 {strides = array<i32>} : memref<1x1x1xf32, #tpu.memory_space<vmem>>, vector<1x1x1xf32>,
    return
  }
  func.func @transform_0(%arg0: i32) -> (i32, i32, i32) {
    %c0_i32 = arith.constant 0 : i32
    %c0_i32_0 = arith.constant 0 : i32
    %c0_i32_1 = arith.constant 0 : i32
    return %arg0, %c0_i32, %c0_i32_0 : i32, i32, i32
  }
  func.func @transform_1(%arg0: i32) -> (i32, i32, i32) {
    %c0_i32 = arith.constant 0 : i32
    %c0_i32_0 = arith.constant 0 : i32
    %c0_i32_1 = arith.constant 0 : i32
    return %arg0, %c0_i32, %c0_i32_0 : i32, i32, i32
  }
  func.func @transform_2(%arg0: i32) -> (i32, i32) {
    %c0_i32 = arith.constant 0 : i32
    %c0_i32_0 = arith.constant 0 : i32
    %c0_i32_1 = arith.constant 0 : i32
    return %c0_i32, %c0_i32_0 : i32, i32
  }
  func.func @transform_3(%arg0: i32) -> (i32, i32) {
    %c0_i32 = arith.constant 0 : i32
    %c0_i32_0 = arith.constant 0 : i32
    %c0_i32_1 = arith.constant 0 : i32
    return %c0_i32, %c0_i32_0 : i32, i32
  }
  func.func @transform_4(%arg0: i32) -> (i32, i32) {
    %c0_i32 = arith.constant 0 : i32
    %c0_i32_0 = arith.constant 0 : i32
    %c0_i32_1 = arith.constant 0 : i32
    return %c0_i32, %c0_i32_0 : i32, i32
  }
  func.func @transform_5(%arg0: i32) -> (i32, i32) {
    %c0_i32 = arith.constant 0 : i32
    %c0_i32_0 = arith.constant 0 : i32
    %c0_i32_1 = arith.constant 0 : i32
    return %c0_i32, %c0_i32_0 : i32, i32
  }
  func.func @transform_6(%arg0: i32) -> (i32, i32, i32) {
    %c0_i32 = arith.constant 0 : i32
    %c0_i32_0 = arith.constant 0 : i32
    %c0_i32_1 = arith.constant 0 : i32
    %c0_i32_2 = arith.constant 0 : i32
    return %c0_i32, %c0_i32_0, %c0_i32_1 : i32, i32, i32
  }
  func.func @transform_7(%arg0: i32) -> (i32, i32, i32) {
    %c0_i32 = arith.constant 0 : i32
    %c0_i32_0 = arith.constant 0 : i32
    %c0_i32_1 = arith.constant 0 : i32
    %c0_i32_2 = arith.constant 0 : i32
    return %c0_i32, %c0_i32_0, %c0_i32_1 : i32, i32, i32
  }
  func.func @transform_8(%arg0: i32) -> (i32, i32, i32) {
    %c0_i32 = arith.constant 0 : i32
    %c0_i32_0 = arith.constant 0 : i32
    %c0_i32_1 = arith.constant 0 : i32
    %c0_i32_2 = arith.constant 0 : i32
    return %c0_i32, %c0_i32_0, %c0_i32_1 : i32, i32, i32
  }
  func.func @transform_9(%arg0: i32) -> (i32, i32, i32) {
    %c0_i32 = arith.constant 0 : i32
    %c0_i32_0 = arith.constant 0 : i32
    %c0_i32_1 = arith.constant 0 : i32
    %c0_i32_2 = arith.constant 0 : i32
    return %c0_i32, %c0_i32_0, %c0_i32_1 : i32, i32, i32
  }
  func.func @transform_10(%arg0: i32) -> (i32, i32, i32) {
    %c0_i32 = arith.constant 0 : i32
    %c0_i32_0 = arith.constant 0 : i32
    %c0_i32_1 = arith.constant 0 : i32
    %c0_i32_2 = arith.constant 0 : i32
    return %c0_i32, %c0_i32_0, %c0_i32_1 : i32, i32, i32
  }
  func.func @transform_11(%arg0: i32) -> (i32, i32, i32) {
    %c0_i32 = arith.constant 0 : i32
    %c0_i32_0 = arith.constant 0 : i32
    %c0_i32_1 = arith.constant 0 : i32
    %c0_i32_2 = arith.constant 0 : i32
    return %c0_i32, %c0_i32_0, %c0_i32_1 : i32, i32, i32
  }
  func.func @transform_12(%arg0: i32) -> (i32, i32, i32) {
    %c0_i32 = arith.constant 0 : i32
    %c0_i32_0 = arith.constant 0 : i32
    %c0_i32_1 = arith.constant 0 : i32
    %c0_i32_2 = arith.constant 0 : i32
    return %c0_i32, %c0_i32_0, %c0_i32_1 : i32, i32, i32
  }
  func.func @transform_13(%arg0: i32) -> (i32, i32, i32) {
    %c0_i32 = arith.constant 0 : i32
    %c0_i32_0 = arith.constant 0 : i32
    %c0_i32_1 = arith.constant 0 : i32
    %c0_i32_2 = arith.constant 0 : i32
    return %c0_i32, %c0_i32_0, %c0_i32_1 : i32, i32, i32
  }
  func.func @transform_14(%arg0: i32) -> (i32, i32, i32) {
    %c0_i32 = arith.constant 0 : i32
    %c0_i32_0 = arith.constant 0 : i32
    %c0_i32_1 = arith.constant 0 : i32
    %c0_i32_2 = arith.constant 0 : i32
    return %c0_i32, %c0_i32_0, %c0_i32_1 : i32, i32, i32
  }
  func.func @transform_15(%arg0: i32) -> (i32, i32, i32) {
    %c0_i32 = arith.constant 0 : i32
    %c0_i32_0 = arith.constant 0 : i32
    %c0_i32_1 = arith.constant 0 : i32
    %c0_i32_2 = arith.constant 0 : i32
    return %c0_i32, %c0_i32_0, %c0_i32_1 : i32, i32, i32
  }
  func.func @transform_16(%arg0: i32) -> (i32, i32, i32) {
    %c0_i32 = arith.constant 0 : i32
    %c0_i32_0 = arith.constant 0 : i32
    %c0_i32_1 = arith.constant 0 : i32
    %c0_i32_2 = arith.constant 0 : i32
    return %c0_i32, %c0_i32_0, %c0_i32_1 : i32, i32, i32
  }
  func.func @transform_17(%arg0: i32) -> (i32, i32, i32) {
    %c0_i32 = arith.constant 0 : i32
    %c0_i32_0 = arith.constant 0 : i32
    %c0_i32_1 = arith.constant 0 : i32
    %c0_i32_2 = arith.constant 0 : i32
    return %c0_i32, %c0_i32_0, %c0_i32_1 : i32, i32, i32
  }
  func.func @transform_18(%arg0: i32) -> (i32, i32) {
    %c0_i32 = arith.constant 0 : i32
    %c0_i32_0 = arith.constant 0 : i32
    %c0_i32_1 = arith.constant 0 : i32
    return %c0_i32, %c0_i32_0 : i32, i32
  }
  func.func @transform_19(%arg0: i32) -> (i32, i32) {
    %c0_i32 = arith.constant 0 : i32
    %c0_i32_0 = arith.constant 0 : i32
    %c0_i32_1 = arith.constant 0 : i32
    return %c0_i32, %c0_i32_0 : i32, i32
  }
  func.func @transform_20(%arg0: i32) -> (i32, i32) {
    %c0_i32 = arith.constant 0 : i32
    %c0_i32_0 = arith.constant 0 : i32
    %c0_i32_1 = arith.constant 0 : i32
    return %c0_i32, %c0_i32_0 : i32, i32
  }
  func.func @transform_21(%arg0: i32) -> (i32, i32) {
    %c0_i32 = arith.constant 0 : i32
    %c0_i32_0 = arith.constant 0 : i32
    %c0_i32_1 = arith.constant 0 : i32
    return %c0_i32, %c0_i32_0 : i32, i32
  }
  func.func @transform_22(%arg0: i32) -> (i32, i32) {
    %c0_i32 = arith.constant 0 : i32
    %c0_i32_0 = arith.constant 0 : i32
    %c0_i32_1 = arith.constant 0 : i32
    return %c0_i32, %c0_i32_0 : i32, i32
  }
  func.func @transform_23(%arg0: i32) -> (i32, i32) {
    %c0_i32 = arith.constant 0 : i32
    %c0_i32_0 = arith.constant 0 : i32
    %c0_i32_1 = arith.constant 0 : i32
    return %c0_i32, %c0_i32_0 : i32, i32
  }
  func.func @transform_24(%arg0: i32) -> (i32, i32, i32) {
    %c0_i32 = arith.constant 0 : i32
    %c0_i32_0 = arith.constant 0 : i32
    %c0_i32_1 = arith.constant 0 : i32
    return %arg0, %c0_i32, %c0_i32_0 : i32, i32, i32
  }
  func.func @transform_25(%arg0: i32) -> (i32, i32, i32) {
    %c0_i32 = arith.constant 0 : i32
    %c0_i32_0 = arith.constant 0 : i32
    %c0_i32_1 = arith.constant 0 : i32
    return %arg0, %c0_i32, %c0_i32_0 : i32, i32, i32
  }
  func.func @transform_26(%arg0: i32) -> (i32, i32, i32) {
    %c0_i32 = arith.constant 0 : i32
    %c0_i32_0 = arith.constant 0 : i32
    %c0_i32_1 = arith.constant 0 : i32
    return %arg0, %c0_i32, %c0_i32_0 : i32, i32, i32
  }
}

</mosaic_0001>

<llo_original>
// kernel: bert_classification_forward.1
$region0: #{bert_classification_forward.1}
  #allocation0 [shape = 'u32[]', space=smem, size = 0x4, offset = 0x4, fixed_abs, tag = 'smem constant byte address 0x4 - core index']
  #allocation1 [shape = 'u32[72,128]{1,0:T(1,128)}', space=vmem, size = 0x9000, scoped, tag = 'internal scratch']
  %s0 = inlined_call_operand.vmem [shape: s32[2,8,1], index: 0, kind: input, shape index: {}]
  %s1 = inlined_call_operand.vmem [shape: f32[2,1,8], index: 1, kind: input, shape index: {}]
  %s2 = inlined_call_operand.vmem [shape: bf16[64,32], index: 2, kind: input, shape index: {}]
  %s3 = inlined_call_operand.vmem [shape: f32[8,32], index: 3, kind: input, shape index: {}]
  %s4 = inlined_call_operand.hbm [shape: f32[1,32], index: 4, kind: input, shape index: {}]
  %s5 = inlined_call_operand.hbm [shape: f32[1,32], index: 5, kind: input, shape index: {}]
  %s6 = inlined_call_operand.vmem [shape: bf16[2,32,96], index: 6, kind: input, shape index: {}]
  %s7 = inlined_call_operand.vmem [shape: f32[2,1,96], index: 7, kind: input, shape index: {}]
  %s8 = inlined_call_operand.vmem [shape: bf16[2,32,32], index: 8, kind: input, shape index: {}]
  %s9 = inlined_call_operand.vmem [shape: f32[2,1,32], index: 9, kind: input, shape index: {}]
  %s10 = inlined_call_operand.vmem [shape: f32[2,1,32], index: 10, kind: input, shape index: {}]
  %s11 = inlined_call_operand.vmem [shape: f32[2,1,32], index: 11, kind: input, shape index: {}]
  %s12 = inlined_call_operand.hbm [shape: bf16[2,32,64], index: 12, kind: input, shape index: {}]
  %s13 = inlined_call_operand.vmem [shape: f32[2,1,64], index: 13, kind: input, shape index: {}]
  %s14 = inlined_call_operand.vmem [shape: bf16[2,64,32], index: 14, kind: input, shape index: {}]
  %s15 = inlined_call_operand.hbm [shape: f32[2,1,32], index: 15, kind: input, shape index: {}]
  %s16 = inlined_call_operand.hbm [shape: f32[2,1,32], index: 16, kind: input, shape index: {}]
  %s17 = inlined_call_operand.hbm [shape: f32[2,1,32], index: 17, kind: input, shape index: {}]
  %s18 = inlined_call_operand.hbm [shape: bf16[32,32], index: 18, kind: input, shape index: {}]
  %s19 = inlined_call_operand.hbm [shape: f32[1,32], index: 19, kind: input, shape index: {}]
  %s20 = inlined_call_operand.hbm [shape: bf16[32,128], index: 20, kind: input, shape index: {}]
  %s21 = inlined_call_operand.hbm [shape: f32[1,128], index: 21, kind: input, shape index: {}]
  %s22 = inlined_call_operand.vmem [shape: bf16[128,128], index: 22, kind: input, shape index: {}]
  %s23 = inlined_call_operand.hbm [shape: f32[1,128], index: 23, kind: input, shape index: {}]
  %s24 = inlined_call_operand.vmem [shape: f32[2,1,128], index: 24, kind: input, shape index: {}]
  %s25 = inlined_call_operand.hbm [shape: f32[2,1,128], index: 25, kind: output, shape index: {0}]
  %s26 = inlined_call_operand.vmem [shape: f32[2,1,1], index: 26, kind: output, shape index: {1}]
  %27 = xla_tuple %s25, %s26
  %s28 = sld [smem:[#allocation0]]
  $region185: #{bert_classification_forward.1} parent=0
    _
  %s30 = ssub.s32 1, %s28
  %s31 = scalar_select 0, %s30, %s28
  $region1: #{bert_classification_forward.1} parent=0
    #allocation2 [shape = 'u8[512]{0}', space=vmem, size = 0x400, scoped, tag = 'input window, operand 4, single buffered']
    #allocation3 [shape = 's32[2]{0}', space=sflag, size = 0x8, scoped, tag = 'scoped memory for bert_classification_forward.1']
    #allocation4 [shape = 's32[2]{0}', space=sflag, size = 0x8, scoped, tag = 'scoped memory for bert_classification_forward.1']
    #allocation5 [shape = 'u8[512]{0}', space=vmem, size = 0x400, scoped, tag = 'input window, operand 5, single buffered']
    #allocation6 [shape = 's32[1]{0}', space=sflag, size = 0x4, scoped, tag = 'scoped memory for bert_classification_forward.1']
    #allocation7 [shape = 'u8[16384]{0}', space=vmem, size = 0x4000, scoped, tag = 'input window, operand 12, single buffered']
    #allocation8 [shape = 'u8[1024]{0}', space=vmem, size = 0x400, scoped, tag = 'input window, operand 15, single buffered']
    #allocation9 [shape = 's32[1]{0}', space=sflag, size = 0x4, scoped, tag = 'scoped memory for bert_classification_forward.1']
    #allocation10 [shape = 'u8[1024]{0}', space=vmem, size = 0x400, scoped, tag = 'input window, operand 16, single buffered']
    #allocation11 [shape = 'u8[1024]{0}', space=vmem, size = 0x400, scoped, tag = 'input window, operand 17, single buffered']
    #allocation12 [shape = 's32[1]{0}', space=sflag, size = 0x4, scoped, tag = 'scoped memory for bert_classification_forward.1']
    #allocation13 [shape = 'u8[8192]{0}', space=vmem, size = 0x2000, scoped, tag = 'input window, operand 18, single buffered']
    #allocation14 [shape = 'u8[512]{0}', space=vmem, size = 0x400, scoped, tag = 'input window, operand 19, single buffered']
    #allocation15 [shape = 's32[1]{0}', space=sflag, size = 0x4, scoped, tag = 'scoped memory for bert_classification_forward.1']
    #allocation16 [shape = 'u8[8192]{0}', space=vmem, size = 0x2000, scoped, tag = 'input window, operand 20, single buffered']
    #allocation17 [shape = 'u8[512]{0}', space=vmem, size = 0x400, scoped, tag = 'input window, operand 21, single buffered']
    #allocation18 [shape = 's32[1]{0}', space=sflag, size = 0x4, scoped, tag = 'scoped memory for bert_classification_forward.1']
    #allocation19 [shape = 'u8[512]{0}', space=vmem, size = 0x400, scoped, tag = 'input window, operand 23, single buffered']
    #allocation20 [shape = 'u8[1024]{0}', space=vmem, size = 0x400, scoped, tag = 'output window, operand 0']
    %32 = vsyncpa [#allocation3], 0
    %33 = vsyncpa [#allocation6], 0
    %34 = vsyncpa [#allocation9], 0
    %35 = vsyncpa [#allocation12], 0
    %36 = vsyncpa [#allocation15], 0
    %37 = vsyncpa [#allocation18], 0
    %38 = vsyncpa [#allocation4], 0
    %s39 = scalar_lea.sflag [#allocation4], 1
    %40 = vsyncpa %s39, 0
    loop: start=0, step=1, limit=4
    $region2: #{bert_classification_forward.1} parent=1 // loop_pre_header
      _
    $region3: #{bert_classification_forward.1} parent=1 // loop_header
      %s42 = sphi 0, %s46
      %p43 = scmp.ge.s32.totalorder %s42, 4
      %s52 = sphi 0, %s54
      %s55 = sphi 0, %s52
      %s56 = sphi 0, %s55
      %s72 = sphi 0, %s56
      %s78 = sphi 0, %s80
      %s81 = sphi 0, %s78
      %s82 = sphi 0, %s81
      %s98 = sphi 0, %s82
      %s102 = sphi 0, %s102
      %s104 = sphi 0, %s102
      %s105 = sphi 0, %s104
      %s119 = sphi 0, %s105
      %s123 = sphi 0, %s123
      %s125 = sphi 0, %s123
      %s126 = sphi 0, %s125
      %s140 = sphi 0, %s126
      %s144 = sphi 0, %s144
      %s146 = sphi 0, %s144
      %s147 = sphi 0, %s146
      %s161 = sphi 0, %s147
      %s165 = sphi 0, %s165
      %s167 = sphi 0, %s165
      %s168 = sphi 0, %s167
      %s182 = sphi 0, %s168
      %s186 = sphi 0, %s186
      %s188 = sphi 0, %s186
      %s189 = sphi 0, %s188
      %s203 = sphi 0, %s189
      %s207 = sphi 0, %s207
      %s209 = sphi 0, %s207
      %s210 = sphi 0, %s209
      %s224 = sphi 0, %s210
      %s228 = sphi 0, %s228
      %s230 = sphi 0, %s228
      %s231 = sphi 0, %s230
      %s245 = sphi 0, %s231
      %s249 = sphi 0, %s249
      %s251 = sphi 0, %s249
      %s252 = sphi 0, %s251
      %s266 = sphi 0, %s252
      %s270 = sphi 0, %s270
      %s272 = sphi 0, %s270
      %s273 = sphi 0, %s272
      %s287 = sphi 0, %s273
      %s291 = sphi 0, %s291
      %s293 = sphi 0, %s291
      %s294 = sphi 0, %s293
      %s308 = sphi 0, %s294
      %s312 = sphi 0, %s312
      %s314 = sphi 0, %s312
      %s315 = sphi 0, %s314
      %s329 = sphi 0, %s315
      %s333 = sphi 0, %s333
      %s335 = sphi 0, %s333
      %s336 = sphi 0, %s335
      %s350 = sphi 0, %s336
      %s354 = sphi 0, %s354
      %s356 = sphi 0, %s354
      %s357 = sphi 0, %s356
      %s371 = sphi 0, %s357
      %s375 = sphi 0, %s375
      %s377 = sphi 0, %s375
      %s378 = sphi 0, %s377
      %s392 = sphi 0, %s378
      %s396 = sphi 0, %s396
      %s398 = sphi 0, %s396
      %s399 = sphi 0, %s398
      %s413 = sphi 0, %s399
      %s417 = sphi 0, %s417
      %s419 = sphi 0, %s417
      %s420 = sphi 0, %s419
      %s434 = sphi 0, %s420
      %s438 = sphi 0, %s438
      %s440 = sphi 0, %s438
      %s441 = sphi 0, %s440
      %s455 = sphi 0, %s441
      %s459 = sphi 0, %s459
      %s461 = sphi 0, %s459
      %s462 = sphi 0, %s461
      %s476 = sphi 0, %s462
      %s480 = sphi 0, %s480
      %s482 = sphi 0, %s480
      %s483 = sphi 0, %s482
      %s497 = sphi 0, %s483
      %s501 = sphi 0, %s501
      %s503 = sphi 0, %s501
      %s504 = sphi 0, %s503
      %s518 = sphi 0, %s504
      %s522 = sphi 0, %s522
      %s524 = sphi 0, %s522
      %s525 = sphi 0, %s524
      %s539 = sphi 0, %s525
      %s543 = sphi 0, %s543
      %s545 = sphi 0, %s543
      %s546 = sphi 0, %s545
      %s560 = sphi 0, %s546
      %s566 = sphi 0, %s568
      %s569 = sphi 0, %s566
      %s570 = sphi 0, %s569
      %s586 = sphi 0, %s570
      %s592 = sphi 0, %s594
      %s595 = sphi 0, %s592
      %s596 = sphi 0, %s595
      %s612 = sphi 0, %s596
      %s618 = sphi 0, %s620
      %s621 = sphi 0, %s618
      %s622 = sphi 0, %s621
      %s638 = sphi 0, %s622
    $region4: #{bert_classification_forward.1} parent=1 // loop_header_branch
      %45 = sbr.rel (%p43) target = $region8
    $region5: #{bert_classification_forward.1} parent=1 // loop_body
      %s47 = ssub.s32 %s42, 1
      %s48 = ssub.s32 %s42, 2
      %s49 = sadd.s32 %s42, 1
      %s50 = ssub.s32 %s42, %s49
      %p51 = scmp.eq.s32.totalorder %s50, 0
      %s53 = sadd.s32 %s52, 1
      %s54 = scalar_select %p51, %s52, %s53
      %p57 = pneg %p51
      %p58 = scmp.eq.s32.totalorder %s42, 1
      %p59 = por %p57, %p58
      %p60 = scmp.ne.s32.totalorder %s52, %s55
      %p61 = scmp.eq.s32.totalorder %s42, 0
      %p62 = por %p60, %p61
      %p63 = scmp.ne.s32.totalorder %s52, %s55
      %p64 = scmp.eq.s32.totalorder %s47, 1
      %p65 = por %p63, %p64
      %p66 = scmp.ne.s32.totalorder %s55, %s56
      %p67 = scmp.eq.s32.totalorder %s47, 0
      %p68 = por %p66, %p67
      %p69 = scmp.ne.s32.totalorder %s55, %s56
      %p70 = scmp.eq.s32.totalorder %s48, 1
      %p71 = por %p69, %p70
      %p73 = scmp.ne.s32.totalorder %s56, %s72
      %p74 = scmp.eq.s32.totalorder %s48, 0
      %p75 = por %p73, %p74
      %s76 = ssub.s32 %s42, %s49
      %p77 = scmp.eq.s32.totalorder %s76, 0
      %s79 = sadd.s32 %s78, 1
      %s80 = scalar_select %p77, %s78, %s79
      %p83 = pneg %p77
      %p84 = scmp.eq.s32.totalorder %s42, 1
      %p85 = por %p83, %p84
      %p86 = scmp.ne.s32.totalorder %s78, %s81
      %p87 = scmp.eq.s32.totalorder %s42, 0
      %p88 = por %p86, %p87
      %p89 = scmp.ne.s32.totalorder %s78, %s81
      %p90 = scmp.eq.s32.totalorder %s47, 1
      %p91 = por %p89, %p90
      %p92 = scmp.ne.s32.totalorder %s81, %s82
      %p93 = scmp.eq.s32.totalorder %s47, 0
      %p94 = por %p92, %p93
      %p95 = scmp.ne.s32.totalorder %s81, %s82
      %p96 = scmp.eq.s32.totalorder %s48, 1
      %p97 = por %p95, %p96
      %p99 = scmp.ne.s32.totalorder %s82, %s98
      %p100 = scmp.eq.s32.totalorder %s48, 0
      %p101 = por %p99, %p100
      %s103 = sadd.s32 %s102, 1
      %p106 = scmp.eq.s32.totalorder %s42, 1
      %p107 = scmp.ne.s32.totalorder %s102, %s104
      %p108 = scmp.eq.s32.totalorder %s42, 0
      %p109 = por %p107, %p108
      %p110 = scmp.ne.s32.totalorder %s102, %s104
      %p111 = scmp.eq.s32.totalorder %s47, 1
      %p112 = por %p110, %p111
      %p113 = scmp.ne.s32.totalorder %s104, %s105
      %p114 = scmp.eq.s32.totalorder %s47, 0
      %p115 = por %p113, %p114
      %p116 = scmp.ne.s32.totalorder %s104, %s105
      %p117 = scmp.eq.s32.totalorder %s48, 1
      %p118 = por %p116, %p117
      %p120 = scmp.ne.s32.totalorder %s105, %s119
      %p121 = scmp.eq.s32.totalorder %s48, 0
      %p122 = por %p120, %p121
      %s124 = sadd.s32 %s123, 1
      %p127 = scmp.eq.s32.totalorder %s42, 1
      %p128 = scmp.ne.s32.totalorder %s123, %s125
      %p129 = scmp.eq.s32.totalorder %s42, 0
      %p130 = por %p128, %p129
      %p131 = scmp.ne.s32.totalorder %s123, %s125
      %p132 = scmp.eq.s32.totalorder %s47, 1
      %p133 = por %p131, %p132
      %p134 = scmp.ne.s32.totalorder %s125, %s126
      %p135 = scmp.eq.s32.totalorder %s47, 0
      %p136 = por %p134, %p135
      %p137 = scmp.ne.s32.totalorder %s125, %s126
      %p138 = scmp.eq.s32.totalorder %s48, 1
      %p139 = por %p137, %p138
      %p141 = scmp.ne.s32.totalorder %s126, %s140
      %p142 = scmp.eq.s32.totalorder %s48, 0
      %p143 = por %p141, %p142
      %s145 = sadd.s32 %s144, 1
      %p148 = scmp.eq.s32.totalorder %s42, 1
      %p149 = scmp.ne.s32.totalorder %s144, %s146
      %p150 = scmp.eq.s32.totalorder %s42, 0
      %p151 = por %p149, %p150
      %p152 = scmp.ne.s32.totalorder %s144, %s146
      %p153 = scmp.eq.s32.totalorder %s47, 1
      %p154 = por %p152, %p153
      %p155 = scmp.ne.s32.totalorder %s146, %s147
      %p156 = scmp.eq.s32.totalorder %s47, 0
      %p157 = por %p155, %p156
      %p158 = scmp.ne.s32.totalorder %s146, %s147
      %p159 = scmp.eq.s32.totalorder %s48, 1
      %p160 = por %p158, %p159
      %p162 = scmp.ne.s32.totalorder %s147, %s161
      %p163 = scmp.eq.s32.totalorder %s48, 0
      %p164 = por %p162, %p163
      %s166 = sadd.s32 %s165, 1
      %p169 = scmp.eq.s32.totalorder %s42, 1
      %p170 = scmp.ne.s32.totalorder %s165, %s167
      %p171 = scmp.eq.s32.totalorder %s42, 0
      %p172 = por %p170, %p171
      %p173 = scmp.ne.s32.totalorder %s165, %s167
      %p174 = scmp.eq.s32.totalorder %s47, 1
      %p175 = por %p173, %p174
      %p176 = scmp.ne.s32.totalorder %s167, %s168
      %p177 = scmp.eq.s32.totalorder %s47, 0
      %p178 = por %p176, %p177
      %p179 = scmp.ne.s32.totalorder %s167, %s168
      %p180 = scmp.eq.s32.totalorder %s48, 1
      %p181 = por %p179, %p180
      %p183 = scmp.ne.s32.totalorder %s168, %s182
      %p184 = scmp.eq.s32.totalorder %s48, 0
      %p185 = por %p183, %p184
      %s187 = sadd.s32 %s186, 1
      %p190 = scmp.eq.s32.totalorder %s42, 1
      %p191 = scmp.ne.s32.totalorder %s186, %s188
      %p192 = scmp.eq.s32.totalorder %s42, 0
      %p193 = por %p191, %p192
      %p194 = scmp.ne.s32.totalorder %s186, %s188
      %p195 = scmp.eq.s32.totalorder %s47, 1
      %p196 = por %p194, %p195
      %p197 = scmp.ne.s32.totalorder %s188, %s189
      %p198 = scmp.eq.s32.totalorder %s47, 0
      %p199 = por %p197, %p198
      %p200 = scmp.ne.s32.totalorder %s188, %s189
      %p201 = scmp.eq.s32.totalorder %s48, 1
      %p202 = por %p200, %p201
      %p204 = scmp.ne.s32.totalorder %s189, %s203
      %p205 = scmp.eq.s32.totalorder %s48, 0
      %p206 = por %p204, %p205
      %s208 = sadd.s32 %s207, 1
      %p211 = scmp.eq.s32.totalorder %s42, 1
      %p212 = scmp.ne.s32.totalorder %s207, %s209
      %p213 = scmp.eq.s32.totalorder %s42, 0
      %p214 = por %p212, %p213
      %p215 = scmp.ne.s32.totalorder %s207, %s209
      %p216 = scmp.eq.s32.totalorder %s47, 1
      %p217 = por %p215, %p216
      %p218 = scmp.ne.s32.totalorder %s209, %s210
      %p219 = scmp.eq.s32.totalorder %s47, 0
      %p220 = por %p218, %p219
      %p221 = scmp.ne.s32.totalorder %s209, %s210
      %p222 = scmp.eq.s32.totalorder %s48, 1
      %p223 = por %p221, %p222
      %p225 = scmp.ne.s32.totalorder %s210, %s224
      %p226 = scmp.eq.s32.totalorder %s48, 0
      %p227 = por %p225, %p226
      %s229 = sadd.s32 %s228, 1
      %p232 = scmp.eq.s32.totalorder %s42, 1
      %p233 = scmp.ne.s32.totalorder %s228, %s230
      %p234 = scmp.eq.s32.totalorder %s42, 0
      %p235 = por %p233, %p234
      %p236 = scmp.ne.s32.totalorder %s228, %s230
      %p237 = scmp.eq.s32.totalorder %s47, 1
      %p238 = por %p236, %p237
      %p239 = scmp.ne.s32.totalorder %s230, %s231
      %p240 = scmp.eq.s32.totalorder %s47, 0
      %p241 = por %p239, %p240
      %p242 = scmp.ne.s32.totalorder %s230, %s231
      %p243 = scmp.eq.s32.totalorder %s48, 1
      %p244 = por %p242, %p243
      %p246 = scmp.ne.s32.totalorder %s231, %s245
      %p247 = scmp.eq.s32.totalorder %s48, 0
      %p248 = por %p246, %p247
      %s250 = sadd.s32 %s249, 1
      %p253 = scmp.eq.s32.totalorder %s42, 1
      %p254 = scmp.ne.s32.totalorder %s249, %s251
      %p255 = scmp.eq.s32.totalorder %s42, 0
      %p256 = por %p254, %p255
      %p257 = scmp.ne.s32.totalorder %s249, %s251
      %p258 = scmp.eq.s32.totalorder %s47, 1
      %p259 = por %p257, %p258
      %p260 = scmp.ne.s32.totalorder %s251, %s252
      %p261 = scmp.eq.s32.totalorder %s47, 0
      %p262 = por %p260, %p261
      %p263 = scmp.ne.s32.totalorder %s251, %s252
      %p264 = scmp.eq.s32.totalorder %s48, 1
      %p265 = por %p263, %p264
      %p267 = scmp.ne.s32.totalorder %s252, %s266
      %p268 = scmp.eq.s32.totalorder %s48, 0
      %p269 = por %p267, %p268
      %s271 = sadd.s32 %s270, 1
      %p274 = scmp.eq.s32.totalorder %s42, 1
      %p275 = scmp.ne.s32.totalorder %s270, %s272
      %p276 = scmp.eq.s32.totalorder %s42, 0
      %p277 = por %p275, %p276
      %p278 = scmp.ne.s32.totalorder %s270, %s272
      %p279 = scmp.eq.s32.totalorder %s47, 1
      %p280 = por %p278, %p279
      %p281 = scmp.ne.s32.totalorder %s272, %s273
      %p282 = scmp.eq.s32.totalorder %s47, 0
      %p283 = por %p281, %p282
      %p284 = scmp.ne.s32.totalorder %s272, %s273
      %p285 = scmp.eq.s32.totalorder %s48, 1
      %p286 = por %p284, %p285
      %p288 = scmp.ne.s32.totalorder %s273, %s287
      %p289 = scmp.eq.s32.totalorder %s48, 0
      %p290 = por %p288, %p289
      %s292 = sadd.s32 %s291, 1
      %p295 = scmp.eq.s32.totalorder %s42, 1
      %p296 = scmp.ne.s32.totalorder %s291, %s293
      %p297 = scmp.eq.s32.totalorder %s42, 0
      %p298 = por %p296, %p297
      %p299 = scmp.ne.s32.totalorder %s291, %s293
      %p300 = scmp.eq.s32.totalorder %s47, 1
      %p301 = por %p299, %p300
      %p302 = scmp.ne.s32.totalorder %s293, %s294
      %p303 = scmp.eq.s32.totalorder %s47, 0
      %p304 = por %p302, %p303
      %p305 = scmp.ne.s32.totalorder %s293, %s294
      %p306 = scmp.eq.s32.totalorder %s48, 1
      %p307 = por %p305, %p306
      %p309 = scmp.ne.s32.totalorder %s294, %s308
      %p310 = scmp.eq.s32.totalorder %s48, 0
      %p311 = por %p309, %p310
      %s313 = sadd.s32 %s312, 1
      %p316 = scmp.eq.s32.totalorder %s42, 1
      %p317 = scmp.ne.s32.totalorder %s312, %s314
      %p318 = scmp.eq.s32.totalorder %s42, 0
      %p319 = por %p317, %p318
      %p320 = scmp.ne.s32.totalorder %s312, %s314
      %p321 = scmp.eq.s32.totalorder %s47, 1
      %p322 = por %p320, %p321
      %p323 = scmp.ne.s32.totalorder %s314, %s315
      %p324 = scmp.eq.s32.totalorder %s47, 0
      %p325 = por %p323, %p324
      %p326 = scmp.ne.s32.totalorder %s314, %s315
      %p327 = scmp.eq.s32.totalorder %s48, 1
      %p328 = por %p326, %p327
      %p330 = scmp.ne.s32.totalorder %s315, %s329
      %p331 = scmp.eq.s32.totalorder %s48, 0
      %p332 = por %p330, %p331
      %s334 = sadd.s32 %s333, 1
      %p337 = scmp.eq.s32.totalorder %s42, 1
      %p338 = scmp.ne.s32.totalorder %s333, %s335
      %p339 = scmp.eq.s32.totalorder %s42, 0
      %p340 = por %p338, %p339
      %p341 = scmp.ne.s32.totalorder %s333, %s335
      %p342 = scmp.eq.s32.totalorder %s47, 1
      %p343 = por %p341, %p342
      %p344 = scmp.ne.s32.totalorder %s335, %s336
      %p345 = scmp.eq.s32.totalorder %s47, 0
      %p346 = por %p344, %p345
      %p347 = scmp.ne.s32.totalorder %s335, %s336
      %p348 = scmp.eq.s32.totalorder %s48, 1
      %p349 = por %p347, %p348
      %p351 = scmp.ne.s32.totalorder %s336, %s350
      %p352 = scmp.eq.s32.totalorder %s48, 0
      %p353 = por %p351, %p352
      %s355 = sadd.s32 %s354, 1
      %p358 = scmp.eq.s32.totalorder %s42, 1
      %p359 = scmp.ne.s32.totalorder %s354, %s356
      %p360 = scmp.eq.s32.totalorder %s42, 0
      %p361 = por %p359, %p360
      %p362 = scmp.ne.s32.totalorder %s354, %s356
      %p363 = scmp.eq.s32.totalorder %s47, 1
      %p364 = por %p362, %p363
      %p365 = scmp.ne.s32.totalorder %s356, %s357
      %p366 = scmp.eq.s32.totalorder %s47, 0
      %p367 = por %p365, %p366
      %p368 = scmp.ne.s32.totalorder %s356, %s357
      %p369 = scmp.eq.s32.totalorder %s48, 1
      %p370 = por %p368, %p369
      %p372 = scmp.ne.s32.totalorder %s357, %s371
      %p373 = scmp.eq.s32.totalorder %s48, 0
      %p374 = por %p372, %p373
      %s376 = sadd.s32 %s375, 1
      %p379 = scmp.eq.s32.totalorder %s42, 1
      %p380 = scmp.ne.s32.totalorder %s375, %s377
      %p381 = scmp.eq.s32.totalorder %s42, 0
      %p382 = por %p380, %p381
      %p383 = scmp.ne.s32.totalorder %s375, %s377
      %p384 = scmp.eq.s32.totalorder %s47, 1
      %p385 = por %p383, %p384
      %p386 = scmp.ne.s32.totalorder %s377, %s378
      %p387 = scmp.eq.s32.totalorder %s47, 0
      %p388 = por %p386, %p387
      %p389 = scmp.ne.s32.totalorder %s377, %s378
      %p390 = scmp.eq.s32.totalorder %s48, 1
      %p391 = por %p389, %p390
      %p393 = scmp.ne.s32.totalorder %s378, %s392
      %p394 = scmp.eq.s32.totalorder %s48, 0
      %p395 = por %p393, %p394
      %s397 = sadd.s32 %s396, 1
      %p400 = scmp.eq.s32.totalorder %s42, 1
      %p401 = scmp.ne.s32.totalorder %s396, %s398
      %p402 = scmp.eq.s32.totalorder %s42, 0
      %p403 = por %p401, %p402
      %p404 = scmp.ne.s32.totalorder %s396, %s398
      %p405 = scmp.eq.s32.totalorder %s47, 1
      %p406 = por %p404, %p405
      %p407 = scmp.ne.s32.totalorder %s398, %s399
      %p408 = scmp.eq.s32.totalorder %s47, 0
      %p409 = por %p407, %p408
      %p410 = scmp.ne.s32.totalorder %s398, %s399
      %p411 = scmp.eq.s32.totalorder %s48, 1
      %p412 = por %p410, %p411
      %p414 = scmp.ne.s32.totalorder %s399, %s413
      %p415 = scmp.eq.s32.totalorder %s48, 0
      %p416 = por %p414, %p415
      %s418 = sadd.s32 %s417, 1
      %p421 = scmp.eq.s32.totalorder %s42, 1
      %p422 = scmp.ne.s32.totalorder %s417, %s419
      %p423 = scmp.eq.s32.totalorder %s42, 0
      %p424 = por %p422, %p423
      %p425 = scmp.ne.s32.totalorder %s417, %s419
      %p426 = scmp.eq.s32.totalorder %s47, 1
      %p427 = por %p425, %p426
      %p428 = scmp.ne.s32.totalorder %s419, %s420
      %p429 = scmp.eq.s32.totalorder %s47, 0
      %p430 = por %p428, %p429
      %p431 = scmp.ne.s32.totalorder %s419, %s420
      %p432 = scmp.eq.s32.totalorder %s48, 1
      %p433 = por %p431, %p432
      %p435 = scmp.ne.s32.totalorder %s420, %s434
      %p436 = scmp.eq.s32.totalorder %s48, 0
      %p437 = por %p435, %p436
      %s439 = sadd.s32 %s438, 1
      %p442 = scmp.eq.s32.totalorder %s42, 1
      %p443 = scmp.ne.s32.totalorder %s438, %s440
      %p444 = scmp.eq.s32.totalorder %s42, 0
      %p445 = por %p443, %p444
      %p446 = scmp.ne.s32.totalorder %s438, %s440
      %p447 = scmp.eq.s32.totalorder %s47, 1
      %p448 = por %p446, %p447
      %p449 = scmp.ne.s32.totalorder %s440, %s441
      %p450 = scmp.eq.s32.totalorder %s47, 0
      %p451 = por %p449, %p450
      %p452 = scmp.ne.s32.totalorder %s440, %s441
      %p453 = scmp.eq.s32.totalorder %s48, 1
      %p454 = por %p452, %p453
      %p456 = scmp.ne.s32.totalorder %s441, %s455
      %p457 = scmp.eq.s32.totalorder %s48, 0
      %p458 = por %p456, %p457
      %s460 = sadd.s32 %s459, 1
      %p463 = scmp.eq.s32.totalorder %s42, 1
      %p464 = scmp.ne.s32.totalorder %s459, %s461
      %p465 = scmp.eq.s32.totalorder %s42, 0
      %p466 = por %p464, %p465
      %p467 = scmp.ne.s32.totalorder %s459, %s461
      %p468 = scmp.eq.s32.totalorder %s47, 1
      %p469 = por %p467, %p468
      %p470 = scmp.ne.s32.totalorder %s461, %s462
      %p471 = scmp.eq.s32.totalorder %s47, 0
      %p472 = por %p470, %p471
      %p473 = scmp.ne.s32.totalorder %s461, %s462
      %p474 = scmp.eq.s32.totalorder %s48, 1
      %p475 = por %p473, %p474
      %p477 = scmp.ne.s32.totalorder %s462, %s476
      %p478 = scmp.eq.s32.totalorder %s48, 0
      %p479 = por %p477, %p478
      %s481 = sadd.s32 %s480, 1
      %p484 = scmp.eq.s32.totalorder %s42, 1
      %p485 = scmp.ne.s32.totalorder %s480, %s482
      %p486 = scmp.eq.s32.totalorder %s42, 0
      %p487 = por %p485, %p486
      %p488 = scmp.ne.s32.totalorder %s480, %s482
      %p489 = scmp.eq.s32.totalorder %s47, 1
      %p490 = por %p488, %p489
      %p491 = scmp.ne.s32.totalorder %s482, %s483
      %p492 = scmp.eq.s32.totalorder %s47, 0
      %p493 = por %p491, %p492
      %p494 = scmp.ne.s32.totalorder %s482, %s483
      %p495 = scmp.eq.s32.totalorder %s48, 1
      %p496 = por %p494, %p495
      %p498 = scmp.ne.s32.totalorder %s483, %s497
      %p499 = scmp.eq.s32.totalorder %s48, 0
      %p500 = por %p498, %p499
      %s502 = sadd.s32 %s501, 1
      %p505 = scmp.eq.s32.totalorder %s42, 1
      %p506 = scmp.ne.s32.totalorder %s501, %s503
      %p507 = scmp.eq.s32.totalorder %s42, 0
      %p508 = por %p506, %p507
      %p509 = scmp.ne.s32.totalorder %s501, %s503
      %p510 = scmp.eq.s32.totalorder %s47, 1
      %p511 = por %p509, %p510
      %p512 = scmp.ne.s32.totalorder %s503, %s504
      %p513 = scmp.eq.s32.totalorder %s47, 0
      %p514 = por %p512, %p513
      %p515 = scmp.ne.s32.totalorder %s503, %s504
      %p516 = scmp.eq.s32.totalorder %s48, 1
      %p517 = por %p515, %p516
      %p519 = scmp.ne.s32.totalorder %s504, %s518
      %p520 = scmp.eq.s32.totalorder %s48, 0
      %p521 = por %p519, %p520
      %s523 = sadd.s32 %s522, 1
      %p526 = scmp.eq.s32.totalorder %s42, 1
      %p527 = scmp.ne.s32.totalorder %s522, %s524
      %p528 = scmp.eq.s32.totalorder %s42, 0
      %p529 = por %p527, %p528
      %p530 = scmp.ne.s32.totalorder %s522, %s524
      %p531 = scmp.eq.s32.totalorder %s47, 1
      %p532 = por %p530, %p531
      %p533 = scmp.ne.s32.totalorder %s524, %s525
      %p534 = scmp.eq.s32.totalorder %s47, 0
      %p535 = por %p533, %p534
      %p536 = scmp.ne.s32.totalorder %s524, %s525
      %p537 = scmp.eq.s32.totalorder %s48, 1
      %p538 = por %p536, %p537
      %p540 = scmp.ne.s32.totalorder %s525, %s539
      %p541 = scmp.eq.s32.totalorder %s48, 0
      %p542 = por %p540, %p541
      %s544 = sadd.s32 %s543, 1
      %p547 = scmp.eq.s32.totalorder %s42, 1
      %p548 = scmp.ne.s32.totalorder %s543, %s545
      %p549 = scmp.eq.s32.totalorder %s42, 0
      %p550 = por %p548, %p549
      %p551 = scmp.ne.s32.totalorder %s543, %s545
      %p552 = scmp.eq.s32.totalorder %s47, 1
      %p553 = por %p551, %p552
      %p554 = scmp.ne.s32.totalorder %s545, %s546
      %p555 = scmp.eq.s32.totalorder %s47, 0
      %p556 = por %p554, %p555
      %p557 = scmp.ne.s32.totalorder %s545, %s546
      %p558 = scmp.eq.s32.totalorder %s48, 1
      %p559 = por %p557, %p558
      %p561 = scmp.ne.s32.totalorder %s546, %s560
      %p562 = scmp.eq.s32.totalorder %s48, 0
      %p563 = por %p561, %p562
      %s564 = ssub.s32 %s42, %s49
      %p565 = scmp.eq.s32.totalorder %s564, 0
      %s567 = sadd.s32 %s566, 1
      %s568 = scalar_select %p565, %s566, %s567
      %p571 = pneg %p565
      %p572 = scmp.eq.s32.totalorder %s42, 1
      %p573 = por %p571, %p572
      %p574 = scmp.ne.s32.totalorder %s566, %s569
      %p575 = scmp.eq.s32.totalorder %s42, 0
      %p576 = por %p574, %p575
      %p577 = scmp.ne.s32.totalorder %s566, %s569
      %p578 = scmp.eq.s32.totalorder %s47, 1
      %p579 = por %p577, %p578
      %p580 = scmp.ne.s32.totalorder %s569, %s570
      %p581 = scmp.eq.s32.totalorder %s47, 0
      %p582 = por %p580, %p581
      %p583 = scmp.ne.s32.totalorder %s569, %s570
      %p584 = scmp.eq.s32.totalorder %s48, 1
      %p585 = por %p583, %p584
      %p587 = scmp.ne.s32.totalorder %s570, %s586
      %p588 = scmp.eq.s32.totalorder %s48, 0
      %p589 = por %p587, %p588
      %s590 = ssub.s32 %s42, %s49
      %p591 = scmp.eq.s32.totalorder %s590, 0
      %s593 = sadd.s32 %s592, 1
      %s594 = scalar_select %p591, %s592, %s593
      %p597 = pneg %p591
      %p598 = scmp.eq.s32.totalorder %s42, 1
      %p599 = por %p597, %p598
      %p600 = scmp.ne.s32.totalorder %s592, %s595
      %p601 = scmp.eq.s32.totalorder %s42, 0
      %p602 = por %p600, %p601
      %p603 = scmp.ne.s32.totalorder %s592, %s595
      %p604 = scmp.eq.s32.totalorder %s47, 1
      %p605 = por %p603, %p604
      %p606 = scmp.ne.s32.totalorder %s595, %s596
      %p607 = scmp.eq.s32.totalorder %s47, 0
      %p608 = por %p606, %p607
      %p609 = scmp.ne.s32.totalorder %s595, %s596
      %p610 = scmp.eq.s32.totalorder %s48, 1
      %p611 = por %p609, %p610
      %p613 = scmp.ne.s32.totalorder %s596, %s612
      %p614 = scmp.eq.s32.totalorder %s48, 0
      %p615 = por %p613, %p614
      %s616 = ssub.s32 %s42, %s49
      %p617 = scmp.eq.s32.totalorder %s616, 0
      %s619 = sadd.s32 %s618, 1
      %s620 = scalar_select %p617, %s618, %s619
      %p623 = pneg %p617
      %p624 = scmp.eq.s32.totalorder %s42, 1
      %p625 = por %p623, %p624
      %p626 = scmp.ne.s32.totalorder %s618, %s621
      %p627 = scmp.eq.s32.totalorder %s42, 0
      %p628 = por %p626, %p627
      %p629 = scmp.ne.s32.totalorder %s618, %s621
      %p630 = scmp.eq.s32.totalorder %s47, 1
      %p631 = por %p629, %p630
      %p632 = scmp.ne.s32.totalorder %s621, %s622
      %p633 = scmp.eq.s32.totalorder %s47, 0
      %p634 = por %p632, %p633
      %p635 = scmp.ne.s32.totalorder %s621, %s622
      %p636 = scmp.eq.s32.totalorder %s48, 1
      %p637 = por %p635, %p636
      %p639 = scmp.ne.s32.totalorder %s622, %s638
      %p640 = scmp.eq.s32.totalorder %s48, 0
      %p641 = por %p639, %p640
      %p642 = scmp.le.s32.totalorder 1, %s42
      %p643 = scmp.lt.s32.totalorder %s42, 3
      %p644 = pnand %p642, %p643
      %p645 = pneg %p644
      // Predicated region
      $region9: #{bert_classification_forward.1} parent=5 // pred_check
        _
      $region10: #{bert_classification_forward.1} parent=5 // pred_check_branch
        %647 = sbr.rel (%p644) target = $region12
      $region11: #{bert_classification_forward.1} parent=5 // pred_region
        %s648 = ssub.s32 %s42, 1
        // Predicated region
        $region13: #{bert_classification_forward.1} parent=11 // pred_check
          %p649 = pneg %p115
        $region14: #{bert_classification_forward.1} parent=11 // pred_check_branch
          %651 = sbr.rel (%p649) target = $region16
        $region15: #{bert_classification_forward.1} parent=11 // pred_region
          _
        $region16: #{bert_classification_forward.1} parent=11 // pred_fallthru
          _
        // Predicated region
        $region17: #{bert_classification_forward.1} parent=11 // pred_check
          %p652 = pneg %p136
        $region18: #{bert_classification_forward.1} parent=11 // pred_check_branch
          %654 = sbr.rel (%p652) target = $region20
        $region19: #{bert_classification_forward.1} parent=11 // pred_region
          _
        $region20: #{bert_classification_forward.1} parent=11 // pred_fallthru
          _
        // Predicated region
        $region21: #{bert_classification_forward.1} parent=11 // pred_check
          %p655 = pneg %p157
        $region22: #{bert_classification_forward.1} parent=11 // pred_check_branch
          %657 = sbr.rel (%p655) target = $region24
        $region23: #{bert_classification_forward.1} parent=11 // pred_region
          %659 = vsyncadd [#allocation3], 0
          %s661 = sshll.u32 %s4, 4
          %s662 = int_to_ptr.hbm [resolvable:$true] %s661
          %s663 = sshll.u32 [#allocation2], 4
          %s664 = int_to_ptr.vmem [resolvable:$true] %s663
          %666 = dma.hbm_to_vmem [thread:$0]  %s662, 16, %s664, [#allocation3]
        $region24: #{bert_classification_forward.1} parent=11 // pred_fallthru
          _
        // Predicated region
        $region25: #{bert_classification_forward.1} parent=11 // pred_check
          %p667 = pneg %p178
        $region26: #{bert_classification_forward.1} parent=11 // pred_check_branch
          %669 = sbr.rel (%p667) target = $region28
        $region27: #{bert_classification_forward.1} parent=11 // pred_region
          %671 = vsyncadd [#allocation6], 0
          %s673 = sshll.u32 %s5, 4
          %s674 = int_to_ptr.hbm [resolvable:$true] %s673
          %s675 = sshll.u32 [#allocation5], 4
          %s676 = int_to_ptr.vmem [resolvable:$true] %s675
          %678 = dma.hbm_to_vmem [thread:$0]  %s674, 16, %s676, [#allocation6]
        $region28: #{bert_classification_forward.1} parent=11 // pred_fallthru
          _
        // Predicated region
        $region29: #{bert_classification_forward.1} parent=11 // pred_check
          %p679 = pneg %p199
        $region30: #{bert_classification_forward.1} parent=11 // pred_check_branch
          %681 = sbr.rel (%p679) target = $region32
        $region31: #{bert_classification_forward.1} parent=11 // pred_region
          _
        $region32: #{bert_classification_forward.1} parent=11 // pred_fallthru
          _
        // Predicated region
        $region33: #{bert_classification_forward.1} parent=11 // pred_check
          %p682 = pneg %p220
        $region34: #{bert_classification_forward.1} parent=11 // pred_check_branch
          %684 = sbr.rel (%p682) target = $region36
        $region35: #{bert_classification_forward.1} parent=11 // pred_region
          _
        $region36: #{bert_classification_forward.1} parent=11 // pred_fallthru
          _
        // Predicated region
        $region37: #{bert_classification_forward.1} parent=11 // pred_check
          %p685 = pneg %p241
        $region38: #{bert_classification_forward.1} parent=11 // pred_check_branch
          %687 = sbr.rel (%p685) target = $region40
        $region39: #{bert_classification_forward.1} parent=11 // pred_region
          _
        $region40: #{bert_classification_forward.1} parent=11 // pred_fallthru
          _
        // Predicated region
        $region41: #{bert_classification_forward.1} parent=11 // pred_check
          %p688 = pneg %p262
        $region42: #{bert_classification_forward.1} parent=11 // pred_check_branch
          %690 = sbr.rel (%p688) target = $region44
        $region43: #{bert_classification_forward.1} parent=11 // pred_region
          _
        $region44: #{bert_classification_forward.1} parent=11 // pred_fallthru
          _
        // Predicated region
        $region45: #{bert_classification_forward.1} parent=11 // pred_check
          %p691 = pneg %p283
        $region46: #{bert_classification_forward.1} parent=11 // pred_check_branch
          %693 = sbr.rel (%p691) target = $region48
        $region47: #{bert_classification_forward.1} parent=11 // pred_region
          _
        $region48: #{bert_classification_forward.1} parent=11 // pred_fallthru
          _
        // Predicated region
        $region49: #{bert_classification_forward.1} parent=11 // pred_check
          %p694 = pneg %p304
        $region50: #{bert_classification_forward.1} parent=11 // pred_check_branch
          %696 = sbr.rel (%p694) target = $region52
        $region51: #{bert_classification_forward.1} parent=11 // pred_region
          _
        $region52: #{bert_classification_forward.1} parent=11 // pred_fallthru
          _
        // Predicated region
        $region53: #{bert_classification_forward.1} parent=11 // pred_check
          %p697 = pneg %p325
        $region54: #{bert_classification_forward.1} parent=11 // pred_check_branch
          %699 = sbr.rel (%p697) target = $region56
        $region55: #{bert_classification_forward.1} parent=11 // pred_region
          %701 = vsyncadd [#allocation6], 0
          %s702 = sshll.u32 %s12, 4
          %s703 = int_to_ptr.hbm [resolvable:$true] %s702
          %s704 = sshll.u32 [#allocation7], 4
          %s705 = int_to_ptr.vmem [resolvable:$true] %s704
          %710 = dma.hbm_to_vmem [thread:$0]  %s703, 512, %s705, [#allocation6], 64, 64, 4
        $region56: #{bert_classification_forward.1} parent=11 // pred_fallthru
          _
        // Predicated region
        $region57: #{bert_classification_forward.1} parent=11 // pred_check
          %p711 = pneg %p346
        $region58: #{bert_classification_forward.1} parent=11 // pred_check_branch
          %713 = sbr.rel (%p711) target = $region60
        $region59: #{bert_classification_forward.1} parent=11 // pred_region
          _
        $region60: #{bert_classification_forward.1} parent=11 // pred_fallthru
          _
        // Predicated region
        $region61: #{bert_classification_forward.1} parent=11 // pred_check
          %p714 = pneg %p367
        $region62: #{bert_classification_forward.1} parent=11 // pred_check_branch
          %716 = sbr.rel (%p714) target = $region64
        $region63: #{bert_classification_forward.1} parent=11 // pred_region
          _
        $region64: #{bert_classification_forward.1} parent=11 // pred_fallthru
          _
        // Predicated region
        $region65: #{bert_classification_forward.1} parent=11 // pred_check
          %p717 = pneg %p388
        $region66: #{bert_classification_forward.1} parent=11 // pred_check_branch
          %719 = sbr.rel (%p717) target = $region68
        $region67: #{bert_classification_forward.1} parent=11 // pred_region
          %721 = vsyncadd [#allocation9], 0
          %s722 = sshll.u32 %s15, 4
          %s723 = int_to_ptr.hbm [resolvable:$true] %s722
          %s724 = sshll.u32 [#allocation8], 4
          %s725 = int_to_ptr.vmem [resolvable:$true] %s724
          %730 = dma.hbm_to_vmem [thread:$0]  %s723, 32, %s725, [#allocation9], 16, 16, 1
        $region68: #{bert_classification_forward.1} parent=11 // pred_fallthru
          _
        // Predicated region
        $region69: #{bert_classification_forward.1} parent=11 // pred_check
          %p731 = pneg %p409
        $region70: #{bert_classification_forward.1} parent=11 // pred_check_branch
          %733 = sbr.rel (%p731) target = $region72
        $region71: #{bert_classification_forward.1} parent=11 // pred_region
          %735 = vsyncadd [#allocation9], 0
          %s736 = sshll.u32 %s16, 4
          %s737 = int_to_ptr.hbm [resolvable:$true] %s736
          %s738 = sshll.u32 [#allocation10], 4
          %s739 = int_to_ptr.vmem [resolvable:$true] %s738
          %744 = dma.hbm_to_vmem [thread:$0]  %s737, 32, %s739, [#allocation9], 16, 16, 1
        $region72: #{bert_classification_forward.1} parent=11 // pred_fallthru
          _
        // Predicated region
        $region73: #{bert_classification_forward.1} parent=11 // pred_check
          %p745 = pneg %p430
        $region74: #{bert_classification_forward.1} parent=11 // pred_check_branch
          %747 = sbr.rel (%p745) target = $region76
        $region75: #{bert_classification_forward.1} parent=11 // pred_region
          %749 = vsyncadd [#allocation12], 0
          %s750 = sshll.u32 %s17, 4
          %s751 = int_to_ptr.hbm [resolvable:$true] %s750
          %s752 = sshll.u32 [#allocation11], 4
          %s753 = int_to_ptr.vmem [resolvable:$true] %s752
          %758 = dma.hbm_to_vmem [thread:$0]  %s751, 32, %s753, [#allocation12], 16, 16, 1
        $region76: #{bert_classification_forward.1} parent=11 // pred_fallthru
          _
        // Predicated region
        $region77: #{bert_classification_forward.1} parent=11 // pred_check
          %p759 = pneg %p451
        $region78: #{bert_classification_forward.1} parent=11 // pred_check_branch
          %761 = sbr.rel (%p759) target = $region80
        $region79: #{bert_classification_forward.1} parent=11 // pred_region
          %763 = vsyncadd [#allocation12], 0
          %s764 = sshll.u32 %s18, 4
          %s765 = int_to_ptr.hbm [resolvable:$true] %s764
          %s766 = sshll.u32 [#allocation13], 4
          %s767 = int_to_ptr.vmem [resolvable:$true] %s766
          %772 = dma.hbm_to_vmem [thread:$0]  %s765, 256, %s767, [#allocation12], 64, 64, 4
        $region80: #{bert_classification_forward.1} parent=11 // pred_fallthru
          _
        // Predicated region
        $region81: #{bert_classification_forward.1} parent=11 // pred_check
          %p773 = pneg %p472
        $region82: #{bert_classification_forward.1} parent=11 // pred_check_branch
          %775 = sbr.rel (%p773) target = $region84
        $region83: #{bert_classification_forward.1} parent=11 // pred_region
          %777 = vsyncadd [#allocation15], 0
          %s779 = sshll.u32 %s19, 4
          %s780 = int_to_ptr.hbm [resolvable:$true] %s779
          %s781 = sshll.u32 [#allocation14], 4
          %s782 = int_to_ptr.vmem [resolvable:$true] %s781
          %784 = dma.hbm_to_vmem [thread:$0]  %s780, 16, %s782, [#allocation15]
        $region84: #{bert_classification_forward.1} parent=11 // pred_fallthru
          _
        // Predicated region
        $region85: #{bert_classification_forward.1} parent=11 // pred_check
          %p785 = pneg %p493
        $region86: #{bert_classification_forward.1} parent=11 // pred_check_branch
          %787 = sbr.rel (%p785) target = $region88
        $region87: #{bert_classification_forward.1} parent=11 // pred_region
          %789 = vsyncadd [#allocation15], 0
          %s790 = sshll.u32 %s20, 4
          %s791 = int_to_ptr.hbm [resolvable:$true] %s790
          %s792 = sshll.u32 [#allocation16], 4
          %s793 = int_to_ptr.vmem [resolvable:$true] %s792
          %798 = dma.hbm_to_vmem [thread:$0]  %s791, 256, %s793, [#allocation15], 64, 64, 4
        $region88: #{bert_classification_forward.1} parent=11 // pred_fallthru
          _
        // Predicated region
        $region89: #{bert_classification_forward.1} parent=11 // pred_check
          %p799 = pneg %p514
        $region90: #{bert_classification_forward.1} parent=11 // pred_check_branch
          %801 = sbr.rel (%p799) target = $region92
        $region91: #{bert_classification_forward.1} parent=11 // pred_region
          %803 = vsyncadd [#allocation18], 0
          %s805 = sshll.u32 %s21, 4
          %s806 = int_to_ptr.hbm [resolvable:$true] %s805
          %s807 = sshll.u32 [#allocation17], 4
          %s808 = int_to_ptr.vmem [resolvable:$true] %s807
          %810 = dma.hbm_to_vmem [thread:$0]  %s806, 16, %s808, [#allocation18]
        $region92: #{bert_classification_forward.1} parent=11 // pred_fallthru
          _
        // Predicated region
        $region93: #{bert_classification_forward.1} parent=11 // pred_check
          %p811 = pneg %p535
        $region94: #{bert_classification_forward.1} parent=11 // pred_check_branch
          %813 = sbr.rel (%p811) target = $region96
        $region95: #{bert_classification_forward.1} parent=11 // pred_region
          _
        $region96: #{bert_classification_forward.1} parent=11 // pred_fallthru
          _
        // Predicated region
        $region97: #{bert_classification_forward.1} parent=11 // pred_check
          %p814 = pneg %p556
        $region98: #{bert_classification_forward.1} parent=11 // pred_check_branch
          %816 = sbr.rel (%p814) target = $region100
        $region99: #{bert_classification_forward.1} parent=11 // pred_region
          %818 = vsyncadd [#allocation18], 0
          %s820 = sshll.u32 %s23, 4
          %s821 = int_to_ptr.hbm [resolvable:$true] %s820
          %s822 = sshll.u32 [#allocation19], 4
          %s823 = int_to_ptr.vmem [resolvable:$true] %s822
          %825 = dma.hbm_to_vmem [thread:$0]  %s821, 16, %s823, [#allocation18]
        $region100: #{bert_classification_forward.1} parent=11 // pred_fallthru
          _
      $region12: #{bert_classification_forward.1} parent=5 // pred_fallthru
        _
      %p826 = scmp.lt.s32.totalorder %s42, 2
      // Predicated region
      $region101: #{bert_classification_forward.1} parent=5 // pred_check
        %p827 = pneg %p826
      $region102: #{bert_classification_forward.1} parent=5 // pred_check_branch
        %829 = sbr.rel (%p827) target = $region104
      $region103: #{bert_classification_forward.1} parent=5 // pred_region
        // Predicated region
        $region105: #{bert_classification_forward.1} parent=103 // pred_check
          %p830 = pneg %p62
        $region106: #{bert_classification_forward.1} parent=103 // pred_check_branch
          %832 = sbr.rel (%p830) target = $region108
        $region107: #{bert_classification_forward.1} parent=103 // pred_region
          %p833 = scmp.lt.s32.totalorder %s42, 1
          %s834 = scalar_select %p833, %s42, 1
          %s835 = smul.addr %s834, 8
          %s836 = scalar_lea.vmem %s0, %s835
        $region108: #{bert_classification_forward.1} parent=103 // pred_fallthru
          _
        // Predicated region
        $region109: #{bert_classification_forward.1} parent=103 // pred_check
          %p837 = pneg %p88
        $region110: #{bert_classification_forward.1} parent=103 // pred_check_branch
          %839 = sbr.rel (%p837) target = $region112
        $region111: #{bert_classification_forward.1} parent=103 // pred_region
          %p840 = scmp.lt.s32.totalorder %s42, 1
          %s841 = scalar_select %p840, %s42, 1
          %s842 = scalar_lea.vmem %s1, %s841
        $region112: #{bert_classification_forward.1} parent=103 // pred_fallthru
          _
        // Predicated region
        $region113: #{bert_classification_forward.1} parent=103 // pred_check
          %p843 = pneg %p576
        $region114: #{bert_classification_forward.1} parent=103 // pred_check_branch
          %845 = sbr.rel (%p843) target = $region116
        $region115: #{bert_classification_forward.1} parent=103 // pred_region
          %p846 = scmp.lt.s32.totalorder %s42, 1
          %s847 = scalar_select %p846, %s42, 1
          %s848 = scalar_lea.vmem %s24, %s847
        $region116: #{bert_classification_forward.1} parent=103 // pred_fallthru
          _
      $region104: #{bert_classification_forward.1} parent=5 // pred_fallthru
        _
      %p849 = scmp.le.s32.totalorder 1, %s42
      %p850 = scmp.lt.s32.totalorder %s42, 3
      %p851 = pnand %p849, %p850
      %p852 = pneg %p851
      // Predicated region
      $region117: #{bert_classification_forward.1} parent=5 // pred_check
        _
      $region118: #{bert_classification_forward.1} parent=5 // pred_check_branch
        %854 = sbr.rel (%p851) target = $region120
      $region119: #{bert_classification_forward.1} parent=5 // pred_region
        %s855 = ssub.s32 %s42, 1
        // Predicated region
        $region121: #{bert_classification_forward.1} parent=119 // pred_check
          %p856 = pneg %p157
        $region122: #{bert_classification_forward.1} parent=119 // pred_check_branch
          %858 = sbr.rel (%p856) target = $region124
        $region123: #{bert_classification_forward.1} parent=119 // pred_region
          %860 = dma.done [#allocation3], 16
        $region124: #{bert_classification_forward.1} parent=119 // pred_fallthru
          _
        // Predicated region
        $region125: #{bert_classification_forward.1} parent=119 // pred_check
          %p861 = pneg %p178
        $region126: #{bert_classification_forward.1} parent=119 // pred_check_branch
          %863 = sbr.rel (%p861) target = $region128
        $region127: #{bert_classification_forward.1} parent=119 // pred_region
          %865 = dma.done [#allocation6], 16
        $region128: #{bert_classification_forward.1} parent=119 // pred_fallthru
          _
        // Predicated region
        $region129: #{bert_classification_forward.1} parent=119 // pred_check
          %p866 = pneg %p325
        $region130: #{bert_classification_forward.1} parent=119 // pred_check_branch
          %868 = sbr.rel (%p866) target = $region132
        $region131: #{bert_classification_forward.1} parent=119 // pred_region
          %870 = dma.done [#allocation6], 512
        $region132: #{bert_classification_forward.1} parent=119 // pred_fallthru
          _
        // Predicated region
        $region133: #{bert_classification_forward.1} parent=119 // pred_check
          %p871 = pneg %p388
        $region134: #{bert_classification_forward.1} parent=119 // pred_check_branch
          %873 = sbr.rel (%p871) target = $region136
        $region135: #{bert_classification_forward.1} parent=119 // pred_region
          %875 = dma.done [#allocation9], 32
        $region136: #{bert_classification_forward.1} parent=119 // pred_fallthru
          _
        // Predicated region
        $region137: #{bert_classification_forward.1} parent=119 // pred_check
          %p876 = pneg %p409
        $region138: #{bert_classification_forward.1} parent=119 // pred_check_branch
          %878 = sbr.rel (%p876) target = $region140
        $region139: #{bert_classification_forward.1} parent=119 // pred_region
          %880 = dma.done [#allocation9], 32
        $region140: #{bert_classification_forward.1} parent=119 // pred_fallthru
          _
        // Predicated region
        $region141: #{bert_classification_forward.1} parent=119 // pred_check
          %p881 = pneg %p430
        $region142: #{bert_classification_forward.1} parent=119 // pred_check_branch
          %883 = sbr.rel (%p881) target = $region144
        $region143: #{bert_classification_forward.1} parent=119 // pred_region
          %885 = dma.done [#allocation12], 32
        $region144: #{bert_classification_forward.1} parent=119 // pred_fallthru
          _
        // Predicated region
        $region145: #{bert_classification_forward.1} parent=119 // pred_check
          %p886 = pneg %p451
        $region146: #{bert_classification_forward.1} parent=119 // pred_check_branch
          %888 = sbr.rel (%p886) target = $region148
        $region147: #{bert_classification_forward.1} parent=119 // pred_region
          %890 = dma.done [#allocation12], 256
        $region148: #{bert_classification_forward.1} parent=119 // pred_fallthru
          _
        // Predicated region
        $region149: #{bert_classification_forward.1} parent=119 // pred_check
          %p891 = pneg %p472
        $region150: #{bert_classification_forward.1} parent=119 // pred_check_branch
          %893 = sbr.rel (%p891) target = $region152
        $region151: #{bert_classification_forward.1} parent=119 // pred_region
          %895 = dma.done [#allocation15], 16
        $region152: #{bert_classification_forward.1} parent=119 // pred_fallthru
          _
        // Predicated region
        $region153: #{bert_classification_forward.1} parent=119 // pred_check
          %p896 = pneg %p493
        $region154: #{bert_classification_forward.1} parent=119 // pred_check_branch
          %898 = sbr.rel (%p896) target = $region156
        $region155: #{bert_classification_forward.1} parent=119 // pred_region
          %900 = dma.done [#allocation15], 256
        $region156: #{bert_classification_forward.1} parent=119 // pred_fallthru
          _
        // Predicated region
        $region157: #{bert_classification_forward.1} parent=119 // pred_check
          %p901 = pneg %p514
        $region158: #{bert_classification_forward.1} parent=119 // pred_check_branch
          %903 = sbr.rel (%p901) target = $region160
        $region159: #{bert_classification_forward.1} parent=119 // pred_region
          %905 = dma.done [#allocation18], 16
        $region160: #{bert_classification_forward.1} parent=119 // pred_fallthru
          _
        // Predicated region
        $region161: #{bert_classification_forward.1} parent=119 // pred_check
          %p906 = pneg %p556
        $region162: #{bert_classification_forward.1} parent=119 // pred_check_branch
          %908 = sbr.rel (%p906) target = $region164
        $region163: #{bert_classification_forward.1} parent=119 // pred_region
          %910 = dma.done [#allocation18], 16
        $region164: #{bert_classification_forward.1} parent=119 // pred_fallthru
          _
        %p911 = scmp.lt.s32.totalorder %s47, 1
        %s912 = scalar_select %p911, %s47, 1
        %s913 = smul.addr %s912, 8
        %s914 = scalar_lea.vmem %s0, %s913
        %p915 = pneg %p68
        %p916 = pneg %p65
        %p917 = scmp.lt.s32.totalorder %s47, 1
        %s918 = scalar_select %p917, %s47, 1
        %s919 = scalar_lea.vmem %s1, %s918
        %p920 = pneg %p94
        %p921 = pneg %p91
        %p922 = pneg %p115
        %p923 = pneg %p112
        %p924 = pneg %p136
        %p925 = pneg %p133
        %p926 = pneg %p157
        %p927 = pneg %p154
        %p928 = pneg %p178
        %p929 = pneg %p175
        %p930 = pneg %p199
        %p931 = pneg %p196
        %p932 = pneg %p220
        %p933 = pneg %p217
        %p934 = pneg %p241
        %p935 = pneg %p238
        %p936 = pneg %p262
        %p937 = pneg %p259
        %p938 = pneg %p283
        %p939 = pneg %p280
        %p940 = pneg %p304
        %p941 = pneg %p301
        %p942 = pneg %p325
        %p943 = pneg %p322
        %p944 = pneg %p346
        %p945 = pneg %p343
        %p946 = pneg %p367
        %p947 = pneg %p364
        %p948 = pneg %p388
        %p949 = pneg %p385
        %p950 = pneg %p409
        %p951 = pneg %p406
        %p952 = pneg %p430
        %p953 = pneg %p427
        %p954 = pneg %p451
        %p955 = pneg %p448
        %p956 = pneg %p472
        %p957 = pneg %p469
        %p958 = pneg %p493
        %p959 = pneg %p490
        %p960 = pneg %p514
        %p961 = pneg %p511
        %p962 = pneg %p535
        %p963 = pneg %p532
        %p964 = pneg %p556
        %p965 = pneg %p553
        %p966 = scmp.lt.s32.totalorder %s47, 1
        %s967 = scalar_select %p966, %s47, 1
        %s968 = scalar_lea.vmem %s24, %s967
        %p969 = pneg %p582
        %p970 = pneg %p579
        %p971 = pneg %p608
        %p972 = pneg %p605
        %s973 = sand.u32 %s595, 1
        %s974 = scalar_lea.sflag [#allocation4], %s973
        %s975 = sand.u32 %s595, 1
        %s976 = scalar_lea.vmem [#allocation20], %s975
        %p977 = pneg %p634
        %p978 = pneg %p631
        %p979 = scmp.lt.s32.totalorder %s47, 1
        %s980 = scalar_select %p979, %s47, 1
        %s981 = scalar_lea.vmem %s26, %s980
        %p982 = scmp.lt.s32.totalorder %s47, 1
        %s983 = scalar_select %p982, %s47, 1
        %s984 = smul.addr %s983, 8
        %s985 = scalar_lea.vmem %s0, %s984
        %p986 = scmp.lt.s32.totalorder %s47, 1
        %s987 = scalar_select %p986, %s47, 1
        %s988 = scalar_lea.vmem %s1, %s987
        %p989 = scmp.lt.s32.totalorder %s47, 1
        %s990 = scalar_select %p989, %s47, 1
        %s991 = scalar_lea.vmem %s24, %s990
        %p992 = scmp.lt.s32.totalorder %s47, 1
        %s993 = scalar_select %p992, %s47, 1
        %s994 = scalar_lea.vmem %s26, %s993
        %v996 = vld [vmem:[%s985] sm:$0xff]
        %v997 = vlaneseq
        %v998 = vand.u32 %v997, 127
        %999 = vset.pattern.permute.xlu0 0
        %1000 = vperm.xlu0 %999, %v996
        %v1001 = vpop.permute.xlu0 %1000
        %vm1002 = vcmp.eq.s32.totalorder %v998, %v1001
        %v1003 = vld [vmem:[%s2] sm:$0xf]
        %v1004 = vld [vmem:[%s2 + $0x4] sm:$0xf]
        %v1005 = vld [vmem:[%s2 + $0x8] sm:$0xf]
        %v1006 = vld [vmem:[%s2 + $0xc] sm:$0xf]
        %v1007 = vld [vmem:[%s2 + $0x10] sm:$0xf]
        %v1008 = vld [vmem:[%s2 + $0x14] sm:$0xf]
        %v1009 = vld [vmem:[%s2 + $0x18] sm:$0xf]
        %v1010 = vld [vmem:[%s2 + $0x1c] sm:$0xf]
        %v1011 = vsel %vm1002, 1, 0
        %v1012 = vcvt.s32.f32 %v1011
        %v1013 = vpack.c.bf16 %v1012, %v1012
        %v1014 = vld [vmem:[%s3] sm:$0xff]
        %v1023 = vunpack.c.l.b16 %v1003
        %v1024 = vunpack.c.l.b16 %v1004
        %v1025 = vunpack.c.l.b16 %v1005
        %v1026 = vunpack.c.l.b16 %v1006
        %v1027 = vunpack.c.l.b16 %v1007
        %v1028 = vunpack.c.l.b16 %v1008
        %v1029 = vunpack.c.l.b16 %v1009
        %v1030 = vunpack.c.l.b16 %v1010
        %v1031 = vpack.c.b16 %v1024, %v1023
        %v1032 = vpack.c.b16 %v1026, %v1025
        %v1033 = vpack.c.b16 %v1028, %v1027
        %v1034 = vpack.c.b16 %v1030, %v1029
        %vm1039 = vcmask 523264
        %v1041 = vsel %vm1039, %v1013, 0
        %1043 = vmatpush.bf16.msra.mxu0 0
        %1044 = vmatpush.bf16.msra.mxu0 0
        %1045 = vmatpush.bf16.msra.mxu0 0
        %1046 = vmatpush.bf16.msra.mxu0 0
        %1047 = vmatpush.bf16.msra.mxu0 %v1034
        %1048 = vmatpush.bf16.msra.mxu0 %v1033
        %1049 = vmatpush.bf16.msra.mxu0 %v1032
        %1050 = vmatpush.bf16.msra.mxu0 %v1031
        %1051 = vmatmul.bf16.gmra.mxu0 %v1041
        %v1052 = vpop.f32.mrf.mxu0
        %v1053 = vadd.f32 %v1014, %v1052
        %v1054 = vpop.f32.mrf.mxu0
        %1055 = vdwg.mxu0
        %v1056 = vld [vmem:[#allocation2] sm:$0x1]
        %v1057 = vld [vmem:[#allocation5] sm:$0x1]
        %vm1058 = vcmask 261120
        %v1059 = vsel %vm1058, %v1053, 0.0
        %1060 = vadd.xlane.f32.xlu0 %v1059
        %v1061 = vpop.xlane.xlu0 %1060
        %v1062 = vrcp.pop 32.0
        %v1063 = vmul.f32 32.0, %v1062
        %v1064 = vsub.f32 1.0, %v1063
        %v1065 = vmul.f32 %v1062, %v1064
        %v1066 = vadd.f32 %v1062, %v1065
        %vm1067 = vweird.f32 %v1062
        %v1068 = vsel %vm1067, %v1062, %v1066
        %v1069 = vmul.f32 %v1061, %v1068
        %v1070 = vsub.f32 %v1053, %v1069
        %v1071 = vmul.f32 %v1070, %v1070
        %v1072 = vsel %vm1058, %v1071, 0.0
        %1073 = vadd.xlane.f32.xlu0 %v1072
        %v1074 = vpop.xlane.xlu0 %1073
        %v1075 = vmul.f32 %v1074, %v1068
        %v1076 = vadd.f32 %v1075, 1e-12
        %v1077 = vrsqrt.pop %v1076
        %v1078 = vmul.f32 %v1077, %v1076
        %v1079 = vmul.f32 %v1078, %v1077
        %v1080 = vmul.f32 0.5, %v1079
        %v1081 = vsub.f32 1.5, %v1080
        %v1082 = vmul.f32 %v1077, %v1081
        %vm1083 = vweird.f32 %v1076
        %vm1084 = vweird.f32 %v1077
        %vm1085 = vmor %vm1083, %vm1084
        %v1086 = vsel %vm1085, %v1077, %v1082
        %v1087 = vmul.f32 %v1070, %v1086
        %v1089 = vperm.slane %v1056, 0
        %v1091 = vmul.f32 %v1087, %v1089
        %v1093 = vperm.slane %v1057, 0
        %v1095 = vadd.f32 %v1091, %v1093
        %v1096 = vld [vmem:[%s988] sm:$0x1]
        %v1097 = vsub.f32 1.0, %v1096
        %v1098 = vmul.f32 %v1097, -10000.0
        %v1099 = vld [vmem:[%s6] sm:$0xf]
        %v1100 = vld [vmem:[%s6 + $0x4] sm:$0xf]
        %v1101 = vld [vmem:[%s6 + $0x8] sm:$0xf]
        %v1102 = vld [vmem:[%s6 + $0xc] sm:$0xf]
        %v1103 = vpack.c.bf16 %v1095, %v1095
        %v1104 = vld [vmem:[%s7] sm:$0x1]
        %v1106 = vperm.slane %v1104, 0
        %v1112 = vunpack.c.l.b16 %v1099
        %v1113 = vunpack.c.l.b16 %v1100
        %v1114 = vunpack.c.l.b16 %v1101
        %v1115 = vunpack.c.l.b16 %v1102
        %v1116 = vpack.c.b16 %v1113, %v1112
        %v1117 = vpack.c.b16 %v1115, %v1114
        %v1121 = vsel %vm1058, %v1103, 0
        %1123 = vmatpush.bf16.msra.mxu0 0
        %1124 = vmatpush.bf16.msra.mxu0 0
        %1125 = vmatpush.bf16.msra.mxu0 0
        %1126 = vmatpush.bf16.msra.mxu0 0
        %1127 = vmatpush.bf16.msra.mxu0 0
        %1128 = vmatpush.bf16.msra.mxu0 0
        %1129 = vmatpush.bf16.msra.mxu0 %v1117
        %1130 = vmatpush.bf16.msra.mxu0 %v1116
        %1131 = vmatmul.bf16.gmra.mxu0 %v1121
        %v1132 = vpop.f32.mrf.mxu0
        %v1133 = vadd.f32 %v1106, %v1132
        %v1134 = vpop.f32.mrf.mxu0
        %1135 = vdwg.mxu0
        %1137 = vrot.lane.b32.xlu0 %v1133, 96
        %v1138 = vpop.permute.xlu0 %1137
        %vm1139 = vcmask 64512
        %v1140 = vsel %vm1139, %v1133, 0
        %v1142 = vsel %vm1139, %v1138, 0
        %1144 = vmatpush.xpose.msra.mxu0 0.0
        %1145 = vmatpush.xpose.msra.mxu0 0.0
        %1146 = vmatpush.xpose.msra.mxu0 0.0
        %1147 = vmatpush.xpose.msra.mxu0 0.0
        %1148 = vmatpush.xpose.msra.mxu0 0.0
        %1149 = vmatpush.xpose.msra.mxu0 0.0
        %1150 = vmatpush.xpose.msra.mxu0 0.0
        %1151 = vmatpush.xpose.msra.mxu0 0.0
        %1152 = vmatpush.xpose.msra.mxu0 0.0
        %1153 = vmatpush.xpose.msra.mxu0 0.0
        %1154 = vmatpush.xpose.msra.mxu0 0.0
        %1155 = vmatpush.xpose.msra.mxu0 0.0
        %1156 = vmatpush.xpose.msra.mxu0 0.0
        %1157 = vmatpush.xpose.msra.mxu0 0.0
        %1158 = vmatpush.xpose.msra.mxu0 0.0
        %1159 = vmatpush.xpose.msra.mxu0 %v1142
        %1160 = vmatmul.f32.gmra.mxu0 %v1140
        %v1161 = vpop.f32.mrf.mxu0
        %v1162 = vadd.f32 0.0, %v1161
        %1163 = vdwg.mxu0
        %v1164 = vmul.f32 %v1162, 0.35355338
        %v1166 = vperm.slane %v1098, 0
        %v1168 = vadd.f32 %v1164, %v1166
        %v1169 = vsel %vm1139, %v1168, -inf
        %1170 = vmax.xlane.f32.xlu0 %v1169
        %v1171 = vpop.xlane.xlu0 %1170
        %v1172 = vsub.f32 %v1168, %v1171
        %v1173 = vmul.f32 %v1172, 1.442695
        %v1174 = vpow.pop %v1173
        %v1175 = vsel %vm1139, %v1174, 0.0
        %1176 = vadd.xlane.f32.xlu0 %v1175
        %v1177 = vpop.xlane.xlu0 %1176
        %v1178 = vrcp.pop %v1177
        %v1179 = vmul.f32 %v1174, %v1178
        %1180 = vrot.lane.b32.xlu0 %v1133, 64
        %v1181 = vpop.permute.xlu0 %1180
        %v1184 = vsel %vm1139, %v1179, 0
        %1186 = vmatpush.msra.mxu0 0.0
        %1187 = vmatpush.msra.mxu0 0.0
        %1188 = vmatpush.msra.mxu0 0.0
        %1189 = vmatpush.msra.mxu0 0.0
        %1190 = vmatpush.msra.mxu0 0.0
        %1191 = vmatpush.msra.mxu0 0.0
        %1192 = vmatpush.msra.mxu0 0.0
        %1193 = vmatpush.msra.mxu0 0.0
        %1194 = vmatpush.msra.mxu0 0.0
        %1195 = vmatpush.msra.mxu0 0.0
        %1196 = vmatpush.msra.mxu0 0.0
        %1197 = vmatpush.msra.mxu0 0.0
        %1198 = vmatpush.msra.mxu0 0.0
        %1199 = vmatpush.msra.mxu0 0.0
        %1200 = vmatpush.msra.mxu0 0.0
        %1201 = vmatpush.msra.mxu0 %v1181
        %1202 = vmatmul.f32.gmra.mxu0 %v1184
        %v1203 = vpop.f32.mrf.mxu0
        %v1204 = vadd.f32 0.0, %v1203
        %1205 = vdwg.mxu0
        %1206 = vrot.lane.b32.xlu0 %v1133, 120
        %v1207 = vpop.permute.xlu0 %1206
        %1208 = vrot.lane.b32.xlu0 %v1133, 88
        %v1209 = vpop.permute.xlu0 %1208
        %v1210 = vsel %vm1139, %v1207, 0
        %v1212 = vsel %vm1139, %v1209, 0
        %1214 = vmatpush.xpose.msra.mxu0 0.0
        %1215 = vmatpush.xpose.msra.mxu0 0.0
        %1216 = vmatpush.xpose.msra.mxu0 0.0
        %1217 = vmatpush.xpose.msra.mxu0 0.0
        %1218 = vmatpush.xpose.msra.mxu0 0.0
        %1219 = vmatpush.xpose.msra.mxu0 0.0
        %1220 = vmatpush.xpose.msra.mxu0 0.0
        %1221 = vmatpush.xpose.msra.mxu0 0.0
        %1222 = vmatpush.xpose.msra.mxu0 0.0
        %1223 = vmatpush.xpose.msra.mxu0 0.0
        %1224 = vmatpush.xpose.msra.mxu0 0.0
        %1225 = vmatpush.xpose.msra.mxu0 0.0
        %1226 = vmatpush.xpose.msra.mxu0 0.0
        %1227 = vmatpush.xpose.msra.mxu0 0.0
        %1228 = vmatpush.xpose.msra.mxu0 0.0
        %1229 = vmatpush.xpose.msra.mxu0 %v1212
        %1230 = vmatmul.f32.gmra.mxu0 %v1210
        %v1231 = vpop.f32.mrf.mxu0
        %v1232 = vadd.f32 0.0, %v1231
        %1233 = vdwg.mxu0
        %v1234 = vmul.f32 %v1232, 0.35355338
        %v1235 = vadd.f32 %v1234, %v1166
        %v1236 = vsel %vm1139, %v1235, -inf
        %1237 = vmax.xlane.f32.xlu0 %v1236
        %v1238 = vpop.xlane.xlu0 %1237
        %v1239 = vsub.f32 %v1235, %v1238
        %v1240 = vmul.f32 %v1239, 1.442695
        %v1241 = vpow.pop %v1240
        %v1242 = vsel %vm1139, %v1241, 0.0
        %1243 = vadd.xlane.f32.xlu0 %v1242
        %v1244 = vpop.xlane.xlu0 %1243
        %v1245 = vrcp.pop %v1244
        %v1246 = vmul.f32 %v1241, %v1245
        %1247 = vrot.lane.b32.xlu0 %v1133, 56
        %v1248 = vpop.permute.xlu0 %1247
        %v1251 = vsel %vm1139, %v1246, 0
        %1253 = vmatpush.msra.mxu0 0.0
        %1254 = vmatpush.msra.mxu0 0.0
        %1255 = vmatpush.msra.mxu0 0.0
        %1256 = vmatpush.msra.mxu0 0.0
        %1257 = vmatpush.msra.mxu0 0.0
        %1258 = vmatpush.msra.mxu0 0.0
        %1259 = vmatpush.msra.mxu0 0.0
        %1260 = vmatpush.msra.mxu0 0.0
        %1261 = vmatpush.msra.mxu0 0.0
        %1262 = vmatpush.msra.mxu0 0.0
        %1263 = vmatpush.msra.mxu0 0.0
        %1264 = vmatpush.msra.mxu0 0.0
        %1265 = vmatpush.msra.mxu0 0.0
        %1266 = vmatpush.msra.mxu0 0.0
        %1267 = vmatpush.msra.mxu0 0.0
        %1268 = vmatpush.msra.mxu0 %v1248
        %1269 = vmatmul.f32.gmra.mxu0 %v1251
        %v1270 = vpop.f32.mrf.mxu0
        %v1271 = vadd.f32 0.0, %v1270
        %1272 = vdwg.mxu0
        %1273 = vrot.lane.b32.xlu0 %v1133, 112
        %v1274 = vpop.permute.xlu0 %1273
        %1275 = vrot.lane.b32.xlu0 %v1133, 80
        %v1276 = vpop.permute.xlu0 %1275
        %v1277 = vsel %vm1139, %v1274, 0
        %v1279 = vsel %vm1139, %v1276, 0
        %1281 = vmatpush.xpose.msra.mxu0 0.0
        %1282 = vmatpush.xpose.msra.mxu0 0.0
        %1283 = vmatpush.xpose.msra.mxu0 0.0
        %1284 = vmatpush.xpose.msra.mxu0 0.0
        %1285 = vmatpush.xpose.msra.mxu0 0.0
        %1286 = vmatpush.xpose.msra.mxu0 0.0
        %1287 = vmatpush.xpose.msra.mxu0 0.0
        %1288 = vmatpush.xpose.msra.mxu0 0.0
        %1289 = vmatpush.xpose.msra.mxu0 0.0
        %1290 = vmatpush.xpose.msra.mxu0 0.0
        %1291 = vmatpush.xpose.msra.mxu0 0.0
        %1292 = vmatpush.xpose.msra.mxu0 0.0
        %1293 = vmatpush.xpose.msra.mxu0 0.0
        %1294 = vmatpush.xpose.msra.mxu0 0.0
        %1295 = vmatpush.xpose.msra.mxu0 0.0
        %1296 = vmatpush.xpose.msra.mxu0 %v1279
        %1297 = vmatmul.f32.gmra.mxu0 %v1277
        %v1298 = vpop.f32.mrf.mxu0
        %v1299 = vadd.f32 0.0, %v1298
        %1300 = vdwg.mxu0
        %v1301 = vmul.f32 %v1299, 0.35355338
        %v1302 = vadd.f32 %v1301, %v1166
        %v1303 = vsel %vm1139, %v1302, -inf
        %1304 = vmax.xlane.f32.xlu0 %v1303
        %v1305 = vpop.xlane.xlu0 %1304
        %v1306 = vsub.f32 %v1302, %v1305
        %v1307 = vmul.f32 %v1306, 1.442695
        %v1308 = vpow.pop %v1307
        %v1309 = vsel %vm1139, %v1308, 0.0
        %1310 = vadd.xlane.f32.xlu0 %v1309
        %v1311 = vpop.xlane.xlu0 %1310
        %v1312 = vrcp.pop %v1311
        %v1313 = vmul.f32 %v1308, %v1312
        %1314 = vrot.lane.b32.xlu0 %v1133, 48
        %v1315 = vpop.permute.xlu0 %1314
        %v1318 = vsel %vm1139, %v1313, 0
        %1320 = vmatpush.msra.mxu0 0.0
        %1321 = vmatpush.msra.mxu0 0.0
        %1322 = vmatpush.msra.mxu0 0.0
        %1323 = vmatpush.msra.mxu0 0.0
        %1324 = vmatpush.msra.mxu0 0.0
        %1325 = vmatpush.msra.mxu0 0.0
        %1326 = vmatpush.msra.mxu0 0.0
        %1327 = vmatpush.msra.mxu0 0.0
        %1328 = vmatpush.msra.mxu0 0.0
        %1329 = vmatpush.msra.mxu0 0.0
        %1330 = vmatpush.msra.mxu0 0.0
        %1331 = vmatpush.msra.mxu0 0.0
        %1332 = vmatpush.msra.mxu0 0.0
        %1333 = vmatpush.msra.mxu0 0.0
        %1334 = vmatpush.msra.mxu0 0.0
        %1335 = vmatpush.msra.mxu0 %v1315
        %1336 = vmatmul.f32.gmra.mxu0 %v1318
        %v1337 = vpop.f32.mrf.mxu0
        %v1338 = vadd.f32 0.0, %v1337
        %1339 = vdwg.mxu0
        %1340 = vrot.lane.b32.xlu0 %v1133, 104
        %v1341 = vpop.permute.xlu0 %1340
        %1342 = vrot.lane.b32.xlu0 %v1133, 72
        %v1343 = vpop.permute.xlu0 %1342
        %v1344 = vsel %vm1139, %v1341, 0
        %v1346 = vsel %vm1139, %v1343, 0
        %1348 = vmatpush.xpose.msra.mxu0 0.0
        %1349 = vmatpush.xpose.msra.mxu0 0.0
        %1350 = vmatpush.xpose.msra.mxu0 0.0
        %1351 = vmatpush.xpose.msra.mxu0 0.0
        %1352 = vmatpush.xpose.msra.mxu0 0.0
        %1353 = vmatpush.xpose.msra.mxu0 0.0
        %1354 = vmatpush.xpose.msra.mxu0 0.0
        %1355 = vmatpush.xpose.msra.mxu0 0.0
        %1356 = vmatpush.xpose.msra.mxu0 0.0
        %1357 = vmatpush.xpose.msra.mxu0 0.0
        %1358 = vmatpush.xpose.msra.mxu0 0.0
        %1359 = vmatpush.xpose.msra.mxu0 0.0
        %1360 = vmatpush.xpose.msra.mxu0 0.0
        %1361 = vmatpush.xpose.msra.mxu0 0.0
        %1362 = vmatpush.xpose.msra.mxu0 0.0
        %1363 = vmatpush.xpose.msra.mxu0 %v1346
        %1364 = vmatmul.f32.gmra.mxu0 %v1344
        %v1365 = vpop.f32.mrf.mxu0
        %v1366 = vadd.f32 0.0, %v1365
        %1367 = vdwg.mxu0
        %v1368 = vmul.f32 %v1366, 0.35355338
        %v1369 = vadd.f32 %v1368, %v1166
        %v1370 = vsel %vm1139, %v1369, -inf
        %1371 = vmax.xlane.f32.xlu0 %v1370
        %v1372 = vpop.xlane.xlu0 %1371
        %v1373 = vsub.f32 %v1369, %v1372
        %v1374 = vmul.f32 %v1373, 1.442695
        %v1375 = vpow.pop %v1374
        %v1376 = vsel %vm1139, %v1375, 0.0
        %1377 = vadd.xlane.f32.xlu0 %v1376
        %v1378 = vpop.xlane.xlu0 %1377
        %v1379 = vrcp.pop %v1378
        %v1380 = vmul.f32 %v1375, %v1379
        %1381 = vrot.lane.b32.xlu0 %v1133, 40
        %v1382 = vpop.permute.xlu0 %1381
        %v1385 = vsel %vm1139, %v1380, 0
        %1387 = vmatpush.msra.mxu0 0.0
        %1388 = vmatpush.msra.mxu0 0.0
        %1389 = vmatpush.msra.mxu0 0.0
        %1390 = vmatpush.msra.mxu0 0.0
        %1391 = vmatpush.msra.mxu0 0.0
        %1392 = vmatpush.msra.mxu0 0.0
        %1393 = vmatpush.msra.mxu0 0.0
        %1394 = vmatpush.msra.mxu0 0.0
        %1395 = vmatpush.msra.mxu0 0.0
        %1396 = vmatpush.msra.mxu0 0.0
        %1397 = vmatpush.msra.mxu0 0.0
        %1398 = vmatpush.msra.mxu0 0.0
        %1399 = vmatpush.msra.mxu0 0.0
        %1400 = vmatpush.msra.mxu0 0.0
        %1401 = vmatpush.msra.mxu0 0.0
        %1402 = vmatpush.msra.mxu0 %v1382
        %1403 = vmatmul.f32.gmra.mxu0 %v1385
        %v1404 = vpop.f32.mrf.mxu0
        %v1405 = vadd.f32 0.0, %v1404
        %1406 = vdwg.mxu0
        %1408 = vrot.lane.b32.xlu0 %v1271, 8
        %v1409 = vpop.permute.xlu0 %1408
        %1412 = vrot.lane.b32.xlu0 %v1338, 16
        %v1413 = vpop.permute.xlu0 %1412
        %1416 = vrot.lane.b32.xlu0 %v1405, 24
        %v1417 = vpop.permute.xlu0 %1416
        %v1419 = vsel %vm1139, %v1204, %v1409
        %vm1420 = vcmask 130048
        %v1421 = vsel %vm1420, %v1419, %v1413
        %vm1422 = vcmask 195584
        %v1423 = vsel %vm1422, %v1421, %v1417
        %v1424 = vld [vmem:[%s8] sm:$0xf]
        %v1425 = vld [vmem:[%s8 + $0x4] sm:$0xf]
        %v1426 = vld [vmem:[%s8 + $0x8] sm:$0xf]
        %v1427 = vld [vmem:[%s8 + $0xc] sm:$0xf]
        %v1428 = vpack.c.bf16 %v1423, %v1423
        %v1429 = vld [vmem:[%s9] sm:$0x1]
        %v1431 = vperm.slane %v1429, 0
        %v1437 = vunpack.c.l.b16 %v1424
        %v1438 = vunpack.c.l.b16 %v1425
        %v1439 = vunpack.c.l.b16 %v1426
        %v1440 = vunpack.c.l.b16 %v1427
        %v1441 = vpack.c.b16 %v1438, %v1437
        %v1442 = vpack.c.b16 %v1440, %v1439
        %v1446 = vsel %vm1058, %v1428, 0
        %1448 = vmatpush.bf16.msra.mxu0 0
        %1449 = vmatpush.bf16.msra.mxu0 0
        %1450 = vmatpush.bf16.msra.mxu0 0
        %1451 = vmatpush.bf16.msra.mxu0 0
        %1452 = vmatpush.bf16.msra.mxu0 0
        %1453 = vmatpush.bf16.msra.mxu0 0
        %1454 = vmatpush.bf16.msra.mxu0 %v1442
        %1455 = vmatpush.bf16.msra.mxu0 %v1441
        %1456 = vmatmul.bf16.gmra.mxu0 %v1446
        %v1457 = vpop.f32.mrf.mxu0
        %v1458 = vadd.f32 %v1431, %v1457
        %v1459 = vpop.f32.mrf.mxu0
        %1460 = vdwg.mxu0
        %v1461 = vadd.f32 %v1458, %v1095
        %v1462 = vld [vmem:[%s10] sm:$0x1]
        %v1463 = vld [vmem:[%s11] sm:$0x1]
        %v1464 = vsel %vm1058, %v1461, 0.0
        %1465 = vadd.xlane.f32.xlu0 %v1464
        %v1466 = vpop.xlane.xlu0 %1465
        %v1467 = vmul.f32 %v1466, %v1068
        %v1468 = vsub.f32 %v1461, %v1467
        %v1469 = vmul.f32 %v1468, %v1468
        %v1470 = vsel %vm1058, %v1469, 0.0
        %1471 = vadd.xlane.f32.xlu0 %v1470
        %v1472 = vpop.xlane.xlu0 %1471
        %v1473 = vmul.f32 %v1472, %v1068
        %v1474 = vadd.f32 %v1473, 1e-12
        %v1475 = vrsqrt.pop %v1474
        %v1476 = vmul.f32 %v1475, %v1474
        %v1477 = vmul.f32 %v1476, %v1475
        %v1478 = vmul.f32 0.5, %v1477
        %v1479 = vsub.f32 1.5, %v1478
        %v1480 = vmul.f32 %v1475, %v1479
        %vm1481 = vweird.f32 %v1474
        %vm1482 = vweird.f32 %v1475
        %vm1483 = vmor %vm1481, %vm1482
        %v1484 = vsel %vm1483, %v1475, %v1480
        %v1485 = vmul.f32 %v1468, %v1484
        %v1487 = vperm.slane %v1462, 0
        %v1489 = vmul.f32 %v1485, %v1487
        %v1491 = vperm.slane %v1463, 0
        %v1493 = vadd.f32 %v1489, %v1491
        %v1494 = vld [vmem:[#allocation7] sm:$0xf]
        %v1495 = vld [vmem:[#allocation7 + $0x4] sm:$0xf]
        %v1496 = vld [vmem:[#allocation7 + $0x8] sm:$0xf]
        %v1497 = vld [vmem:[#allocation7 + $0xc] sm:$0xf]
        %v1498 = vpack.c.bf16 %v1493, %v1493
        %v1499 = vld [vmem:[%s13] sm:$0x1]
        %v1501 = vperm.slane %v1499, 0
        %v1507 = vunpack.c.l.b16 %v1494
        %v1508 = vunpack.c.l.b16 %v1495
        %v1509 = vunpack.c.l.b16 %v1496
        %v1510 = vunpack.c.l.b16 %v1497
        %v1511 = vpack.c.b16 %v1508, %v1507
        %v1512 = vpack.c.b16 %v1510, %v1509
        %v1516 = vsel %vm1058, %v1498, 0
        %1518 = vmatpush.bf16.msra.mxu0 0
        %1519 = vmatpush.bf16.msra.mxu0 0
        %1520 = vmatpush.bf16.msra.mxu0 0
        %1521 = vmatpush.bf16.msra.mxu0 0
        %1522 = vmatpush.bf16.msra.mxu0 0
        %1523 = vmatpush.bf16.msra.mxu0 0
        %1524 = vmatpush.bf16.msra.mxu0 %v1512
        %1525 = vmatpush.bf16.msra.mxu0 %v1511
        %1526 = vmatmul.bf16.gmra.mxu0 %v1516
        %v1527 = vpop.f32.mrf.mxu0
        %v1528 = vadd.f32 %v1501, %v1527
        %v1529 = vpop.f32.mrf.mxu0
        %1530 = vdwg.mxu0
        %v1531 = vmul.f32 %v1528, %v1528
        %v1532 = vmul.f32 %v1528, %v1531
        %v1533 = vmul.f32 %v1532, 0.044715
        %v1534 = vadd.f32 %v1528, %v1533
        %v1535 = vmul.f32 %v1534, 0.7978846
        %v1536 = vtanh.pop %v1535
        %v1537 = vadd.f32 %v1536, 1.0
        %v1538 = vmul.f32 %v1537, 0.5
        %v1539 = vmul.f32 %v1528, %v1538
        %v1540 = vld [vmem:[%s14] sm:$0xf]
        %v1541 = vld [vmem:[%s14 + $0x4] sm:$0xf]
        %v1542 = vld [vmem:[%s14 + $0x8] sm:$0xf]
        %v1543 = vld [vmem:[%s14 + $0xc] sm:$0xf]
        %v1544 = vld [vmem:[%s14 + $0x10] sm:$0xf]
        %v1545 = vld [vmem:[%s14 + $0x14] sm:$0xf]
        %v1546 = vld [vmem:[%s14 + $0x18] sm:$0xf]
        %v1547 = vld [vmem:[%s14 + $0x1c] sm:$0xf]
        %v1548 = vpack.c.bf16 %v1539, %v1539
        %v1549 = vld [vmem:[#allocation8] sm:$0x1]
        %v1551 = vperm.slane %v1549, 0
        %v1561 = vunpack.c.l.b16 %v1540
        %v1562 = vunpack.c.l.b16 %v1541
        %v1563 = vunpack.c.l.b16 %v1542
        %v1564 = vunpack.c.l.b16 %v1543
        %v1565 = vunpack.c.l.b16 %v1544
        %v1566 = vunpack.c.l.b16 %v1545
        %v1567 = vunpack.c.l.b16 %v1546
        %v1568 = vunpack.c.l.b16 %v1547
        %v1569 = vpack.c.b16 %v1562, %v1561
        %v1570 = vpack.c.b16 %v1564, %v1563
        %v1571 = vpack.c.b16 %v1566, %v1565
        %v1572 = vpack.c.b16 %v1568, %v1567
        %v1578 = vsel %vm1039, %v1548, 0
        %1580 = vmatpush.bf16.msra.mxu0 0
        %1581 = vmatpush.bf16.msra.mxu0 0
        %1582 = vmatpush.bf16.msra.mxu0 0
        %1583 = vmatpush.bf16.msra.mxu0 0
        %1584 = vmatpush.bf16.msra.mxu0 %v1572
        %1585 = vmatpush.bf16.msra.mxu0 %v1571
        %1586 = vmatpush.bf16.msra.mxu0 %v1570
        %1587 = vmatpush.bf16.msra.mxu0 %v1569
        %1588 = vmatmul.bf16.gmra.mxu0 %v1578
        %v1589 = vpop.f32.mrf.mxu0
        %v1590 = vadd.f32 %v1551, %v1589
        %v1591 = vpop.f32.mrf.mxu0
        %1592 = vdwg.mxu0
        %v1593 = vadd.f32 %v1590, %v1493
        %v1594 = vld [vmem:[#allocation10] sm:$0x1]
        %v1595 = vld [vmem:[#allocation11] sm:$0x1]
        %v1596 = vsel %vm1058, %v1593, 0.0
        %1597 = vadd.xlane.f32.xlu0 %v1596
        %v1598 = vpop.xlane.xlu0 %1597
        %v1599 = vmul.f32 %v1598, %v1068
        %v1600 = vsub.f32 %v1593, %v1599
        %v1601 = vmul.f32 %v1600, %v1600
        %v1602 = vsel %vm1058, %v1601, 0.0
        %1603 = vadd.xlane.f32.xlu0 %v1602
        %v1604 = vpop.xlane.xlu0 %1603
        %v1605 = vmul.f32 %v1604, %v1068
        %v1606 = vadd.f32 %v1605, 1e-12
        %v1607 = vrsqrt.pop %v1606
        %v1608 = vmul.f32 %v1607, %v1606
        %v1609 = vmul.f32 %v1608, %v1607
        %v1610 = vmul.f32 0.5, %v1609
        %v1611 = vsub.f32 1.5, %v1610
        %v1612 = vmul.f32 %v1607, %v1611
        %vm1613 = vweird.f32 %v1606
        %vm1614 = vweird.f32 %v1607
        %vm1615 = vmor %vm1613, %vm1614
        %v1616 = vsel %vm1615, %v1607, %v1612
        %v1617 = vmul.f32 %v1600, %v1616
        %v1619 = vperm.slane %v1594, 0
        %v1621 = vmul.f32 %v1617, %v1619
        %v1623 = vperm.slane %v1595, 0
        %v1625 = vadd.f32 %v1621, %v1623
        %s1626 = scalar_lea.vmem %s6, 16
        %v1627 = vld [vmem:[%s1626] sm:$0xf]
        %v1628 = vld [vmem:[%s1626 + $0x4] sm:$0xf]
        %v1629 = vld [vmem:[%s1626 + $0x8] sm:$0xf]
        %v1630 = vld [vmem:[%s1626 + $0xc] sm:$0xf]
        %v1631 = vpack.c.bf16 %v1625, %v1625
        %s1632 = scalar_lea.vmem %s7, 1
        %v1633 = vld [vmem:[%s1632] sm:$0x1]
        %v1635 = vperm.slane %v1633, 0
        %v1641 = vunpack.c.l.b16 %v1627
        %v1642 = vunpack.c.l.b16 %v1628
        %v1643 = vunpack.c.l.b16 %v1629
        %v1644 = vunpack.c.l.b16 %v1630
        %v1645 = vpack.c.b16 %v1642, %v1641
        %v1646 = vpack.c.b16 %v1644, %v1643
        %v1650 = vsel %vm1058, %v1631, 0
        %1652 = vmatpush.bf16.msra.mxu0 0
        %1653 = vmatpush.bf16.msra.mxu0 0
        %1654 = vmatpush.bf16.msra.mxu0 0
        %1655 = vmatpush.bf16.msra.mxu0 0
        %1656 = vmatpush.bf16.msra.mxu0 0
        %1657 = vmatpush.bf16.msra.mxu0 0
        %1658 = vmatpush.bf16.msra.mxu0 %v1646
        %1659 = vmatpush.bf16.msra.mxu0 %v1645
        %1660 = vmatmul.bf16.gmra.mxu0 %v1650
        %v1661 = vpop.f32.mrf.mxu0
        %v1662 = vadd.f32 %v1635, %v1661
        %v1663 = vpop.f32.mrf.mxu0
        %1664 = vdwg.mxu0
        %1666 = vrot.lane.b32.xlu0 %v1662, 96
        %v1667 = vpop.permute.xlu0 %1666
        %v1668 = vsel %vm1139, %v1662, 0
        %v1670 = vsel %vm1139, %v1667, 0
        %1672 = vmatpush.xpose.msra.mxu0 0.0
        %1673 = vmatpush.xpose.msra.mxu0 0.0
        %1674 = vmatpush.xpose.msra.mxu0 0.0
        %1675 = vmatpush.xpose.msra.mxu0 0.0
        %1676 = vmatpush.xpose.msra.mxu0 0.0
        %1677 = vmatpush.xpose.msra.mxu0 0.0
        %1678 = vmatpush.xpose.msra.mxu0 0.0
        %1679 = vmatpush.xpose.msra.mxu0 0.0
        %1680 = vmatpush.xpose.msra.mxu0 0.0
        %1681 = vmatpush.xpose.msra.mxu0 0.0
        %1682 = vmatpush.xpose.msra.mxu0 0.0
        %1683 = vmatpush.xpose.msra.mxu0 0.0
        %1684 = vmatpush.xpose.msra.mxu0 0.0
        %1685 = vmatpush.xpose.msra.mxu0 0.0
        %1686 = vmatpush.xpose.msra.mxu0 0.0
        %1687 = vmatpush.xpose.msra.mxu0 %v1670
        %1688 = vmatmul.f32.gmra.mxu0 %v1668
        %v1689 = vpop.f32.mrf.mxu0
        %v1690 = vadd.f32 0.0, %v1689
        %1691 = vdwg.mxu0
        %v1692 = vmul.f32 %v1690, 0.35355338
        %v1693 = vadd.f32 %v1692, %v1166
        %v1694 = vsel %vm1139, %v1693, -inf
        %1695 = vmax.xlane.f32.xlu0 %v1694
        %v1696 = vpop.xlane.xlu0 %1695
        %v1697 = vsub.f32 %v1693, %v1696
        %v1698 = vmul.f32 %v1697, 1.442695
        %v1699 = vpow.pop %v1698
        %v1700 = vsel %vm1139, %v1699, 0.0
        %1701 = vadd.xlane.f32.xlu0 %v1700
        %v1702 = vpop.xlane.xlu0 %1701
        %v1703 = vrcp.pop %v1702
        %v1704 = vmul.f32 %v1699, %v1703
        %1705 = vrot.lane.b32.xlu0 %v1662, 64
        %v1706 = vpop.permute.xlu0 %1705
        %v1709 = vsel %vm1139, %v1704, 0
        %1711 = vmatpush.msra.mxu0 0.0
        %1712 = vmatpush.msra.mxu0 0.0
        %1713 = vmatpush.msra.mxu0 0.0
        %1714 = vmatpush.msra.mxu0 0.0
        %1715 = vmatpush.msra.mxu0 0.0
        %1716 = vmatpush.msra.mxu0 0.0
        %1717 = vmatpush.msra.mxu0 0.0
        %1718 = vmatpush.msra.mxu0 0.0
        %1719 = vmatpush.msra.mxu0 0.0
        %1720 = vmatpush.msra.mxu0 0.0
        %1721 = vmatpush.msra.mxu0 0.0
        %1722 = vmatpush.msra.mxu0 0.0
        %1723 = vmatpush.msra.mxu0 0.0
        %1724 = vmatpush.msra.mxu0 0.0
        %1725 = vmatpush.msra.mxu0 0.0
        %1726 = vmatpush.msra.mxu0 %v1706
        %1727 = vmatmul.f32.gmra.mxu0 %v1709
        %v1728 = vpop.f32.mrf.mxu0
        %v1729 = vadd.f32 0.0, %v1728
        %1730 = vdwg.mxu0
        %1731 = vrot.lane.b32.xlu0 %v1662, 120
        %v1732 = vpop.permute.xlu0 %1731
        %1733 = vrot.lane.b32.xlu0 %v1662, 88
        %v1734 = vpop.permute.xlu0 %1733
        %v1735 = vsel %vm1139, %v1732, 0
        %v1737 = vsel %vm1139, %v1734, 0
        %1739 = vmatpush.xpose.msra.mxu0 0.0
        %1740 = vmatpush.xpose.msra.mxu0 0.0
        %1741 = vmatpush.xpose.msra.mxu0 0.0
        %1742 = vmatpush.xpose.msra.mxu0 0.0
        %1743 = vmatpush.xpose.msra.mxu0 0.0
        %1744 = vmatpush.xpose.msra.mxu0 0.0
        %1745 = vmatpush.xpose.msra.mxu0 0.0
        %1746 = vmatpush.xpose.msra.mxu0 0.0
        %1747 = vmatpush.xpose.msra.mxu0 0.0
        %1748 = vmatpush.xpose.msra.mxu0 0.0
        %1749 = vmatpush.xpose.msra.mxu0 0.0
        %1750 = vmatpush.xpose.msra.mxu0 0.0
        %1751 = vmatpush.xpose.msra.mxu0 0.0
        %1752 = vmatpush.xpose.msra.mxu0 0.0
        %1753 = vmatpush.xpose.msra.mxu0 0.0
        %1754 = vmatpush.xpose.msra.mxu0 %v1737
        %1755 = vmatmul.f32.gmra.mxu0 %v1735
        %v1756 = vpop.f32.mrf.mxu0
        %v1757 = vadd.f32 0.0, %v1756
        %1758 = vdwg.mxu0
        %v1759 = vmul.f32 %v1757, 0.35355338
        %v1760 = vadd.f32 %v1759, %v1166
        %v1761 = vsel %vm1139, %v1760, -inf
        %1762 = vmax.xlane.f32.xlu0 %v1761
        %v1763 = vpop.xlane.xlu0 %1762
        %v1764 = vsub.f32 %v1760, %v1763
        %v1765 = vmul.f32 %v1764, 1.442695
        %v1766 = vpow.pop %v1765
        %v1767 = vsel %vm1139, %v1766, 0.0
        %1768 = vadd.xlane.f32.xlu0 %v1767
        %v1769 = vpop.xlane.xlu0 %1768
        %v1770 = vrcp.pop %v1769
        %v1771 = vmul.f32 %v1766, %v1770
        %1772 = vrot.lane.b32.xlu0 %v1662, 56
        %v1773 = vpop.permute.xlu0 %1772
        %v1776 = vsel %vm1139, %v1771, 0
        %1778 = vmatpush.msra.mxu0 0.0
        %1779 = vmatpush.msra.mxu0 0.0
        %1780 = vmatpush.msra.mxu0 0.0
        %1781 = vmatpush.msra.mxu0 0.0
        %1782 = vmatpush.msra.mxu0 0.0
        %1783 = vmatpush.msra.mxu0 0.0
        %1784 = vmatpush.msra.mxu0 0.0
        %1785 = vmatpush.msra.mxu0 0.0
        %1786 = vmatpush.msra.mxu0 0.0
        %1787 = vmatpush.msra.mxu0 0.0
        %1788 = vmatpush.msra.mxu0 0.0
        %1789 = vmatpush.msra.mxu0 0.0
        %1790 = vmatpush.msra.mxu0 0.0
        %1791 = vmatpush.msra.mxu0 0.0
        %1792 = vmatpush.msra.mxu0 0.0
        %1793 = vmatpush.msra.mxu0 %v1773
        %1794 = vmatmul.f32.gmra.mxu0 %v1776
        %v1795 = vpop.f32.mrf.mxu0
        %v1796 = vadd.f32 0.0, %v1795
        %1797 = vdwg.mxu0
        %1798 = vrot.lane.b32.xlu0 %v1662, 112
        %v1799 = vpop.permute.xlu0 %1798
        %1800 = vrot.lane.b32.xlu0 %v1662, 80
        %v1801 = vpop.permute.xlu0 %1800
        %v1802 = vsel %vm1139, %v1799, 0
        %v1804 = vsel %vm1139, %v1801, 0
        %1806 = vmatpush.xpose.msra.mxu0 0.0
        %1807 = vmatpush.xpose.msra.mxu0 0.0
        %1808 = vmatpush.xpose.msra.mxu0 0.0
        %1809 = vmatpush.xpose.msra.mxu0 0.0
        %1810 = vmatpush.xpose.msra.mxu0 0.0
        %1811 = vmatpush.xpose.msra.mxu0 0.0
        %1812 = vmatpush.xpose.msra.mxu0 0.0
        %1813 = vmatpush.xpose.msra.mxu0 0.0
        %1814 = vmatpush.xpose.msra.mxu0 0.0
        %1815 = vmatpush.xpose.msra.mxu0 0.0
        %1816 = vmatpush.xpose.msra.mxu0 0.0
        %1817 = vmatpush.xpose.msra.mxu0 0.0
        %1818 = vmatpush.xpose.msra.mxu0 0.0
        %1819 = vmatpush.xpose.msra.mxu0 0.0
        %1820 = vmatpush.xpose.msra.mxu0 0.0
        %1821 = vmatpush.xpose.msra.mxu0 %v1804
        %1822 = vmatmul.f32.gmra.mxu0 %v1802
        %v1823 = vpop.f32.mrf.mxu0
        %v1824 = vadd.f32 0.0, %v1823
        %1825 = vdwg.mxu0
        %v1826 = vmul.f32 %v1824, 0.35355338
        %v1827 = vadd.f32 %v1826, %v1166
        %v1828 = vsel %vm1139, %v1827, -inf
        %1829 = vmax.xlane.f32.xlu0 %v1828
        %v1830 = vpop.xlane.xlu0 %1829
        %v1831 = vsub.f32 %v1827, %v1830
        %v1832 = vmul.f32 %v1831, 1.442695
        %v1833 = vpow.pop %v1832
        %v1834 = vsel %vm1139, %v1833, 0.0
        %1835 = vadd.xlane.f32.xlu0 %v1834
        %v1836 = vpop.xlane.xlu0 %1835
        %v1837 = vrcp.pop %v1836
        %v1838 = vmul.f32 %v1833, %v1837
        %1839 = vrot.lane.b32.xlu0 %v1662, 48
        %v1840 = vpop.permute.xlu0 %1839
        %v1843 = vsel %vm1139, %v1838, 0
        %1845 = vmatpush.msra.mxu0 0.0
        %1846 = vmatpush.msra.mxu0 0.0
        %1847 = vmatpush.msra.mxu0 0.0
        %1848 = vmatpush.msra.mxu0 0.0
        %1849 = vmatpush.msra.mxu0 0.0
        %1850 = vmatpush.msra.mxu0 0.0
        %1851 = vmatpush.msra.mxu0 0.0
        %1852 = vmatpush.msra.mxu0 0.0
        %1853 = vmatpush.msra.mxu0 0.0
        %1854 = vmatpush.msra.mxu0 0.0
        %1855 = vmatpush.msra.mxu0 0.0
        %1856 = vmatpush.msra.mxu0 0.0
        %1857 = vmatpush.msra.mxu0 0.0
        %1858 = vmatpush.msra.mxu0 0.0
        %1859 = vmatpush.msra.mxu0 0.0
        %1860 = vmatpush.msra.mxu0 %v1840
        %1861 = vmatmul.f32.gmra.mxu0 %v1843
        %v1862 = vpop.f32.mrf.mxu0
        %v1863 = vadd.f32 0.0, %v1862
        %1864 = vdwg.mxu0
        %1865 = vrot.lane.b32.xlu0 %v1662, 104
        %v1866 = vpop.permute.xlu0 %1865
        %1867 = vrot.lane.b32.xlu0 %v1662, 72
        %v1868 = vpop.permute.xlu0 %1867
        %v1869 = vsel %vm1139, %v1866, 0
        %v1871 = vsel %vm1139, %v1868, 0
        %1873 = vmatpush.xpose.msra.mxu0 0.0
        %1874 = vmatpush.xpose.msra.mxu0 0.0
        %1875 = vmatpush.xpose.msra.mxu0 0.0
        %1876 = vmatpush.xpose.msra.mxu0 0.0
        %1877 = vmatpush.xpose.msra.mxu0 0.0
        %1878 = vmatpush.xpose.msra.mxu0 0.0
        %1879 = vmatpush.xpose.msra.mxu0 0.0
        %1880 = vmatpush.xpose.msra.mxu0 0.0
        %1881 = vmatpush.xpose.msra.mxu0 0.0
        %1882 = vmatpush.xpose.msra.mxu0 0.0
        %1883 = vmatpush.xpose.msra.mxu0 0.0
        %1884 = vmatpush.xpose.msra.mxu0 0.0
        %1885 = vmatpush.xpose.msra.mxu0 0.0
        %1886 = vmatpush.xpose.msra.mxu0 0.0
        %1887 = vmatpush.xpose.msra.mxu0 0.0
        %1888 = vmatpush.xpose.msra.mxu0 %v1871
        %1889 = vmatmul.f32.gmra.mxu0 %v1869
        %v1890 = vpop.f32.mrf.mxu0
        %v1891 = vadd.f32 0.0, %v1890
        %1892 = vdwg.mxu0
        %v1893 = vmul.f32 %v1891, 0.35355338
        %v1894 = vadd.f32 %v1893, %v1166
        %v1895 = vsel %vm1139, %v1894, -inf
        %1896 = vmax.xlane.f32.xlu0 %v1895
        %v1897 = vpop.xlane.xlu0 %1896
        %v1898 = vsub.f32 %v1894, %v1897
        %v1899 = vmul.f32 %v1898, 1.442695
        %v1900 = vpow.pop %v1899
        %v1901 = vsel %vm1139, %v1900, 0.0
        %1902 = vadd.xlane.f32.xlu0 %v1901
        %v1903 = vpop.xlane.xlu0 %1902
        %v1904 = vrcp.pop %v1903
        %v1905 = vmul.f32 %v1900, %v1904
        %1906 = vrot.lane.b32.xlu0 %v1662, 40
        %v1907 = vpop.permute.xlu0 %1906
        %v1910 = vsel %vm1139, %v1905, 0
        %1912 = vmatpush.msra.mxu0 0.0
        %1913 = vmatpush.msra.mxu0 0.0
        %1914 = vmatpush.msra.mxu0 0.0
        %1915 = vmatpush.msra.mxu0 0.0
        %1916 = vmatpush.msra.mxu0 0.0
        %1917 = vmatpush.msra.mxu0 0.0
        %1918 = vmatpush.msra.mxu0 0.0
        %1919 = vmatpush.msra.mxu0 0.0
        %1920 = vmatpush.msra.mxu0 0.0
        %1921 = vmatpush.msra.mxu0 0.0
        %1922 = vmatpush.msra.mxu0 0.0
        %1923 = vmatpush.msra.mxu0 0.0
        %1924 = vmatpush.msra.mxu0 0.0
        %1925 = vmatpush.msra.mxu0 0.0
        %1926 = vmatpush.msra.mxu0 0.0
        %1927 = vmatpush.msra.mxu0 %v1907
        %1928 = vmatmul.f32.gmra.mxu0 %v1910
        %v1929 = vpop.f32.mrf.mxu0
        %v1930 = vadd.f32 0.0, %v1929
        %1931 = vdwg.mxu0
        %1933 = vrot.lane.b32.xlu0 %v1796, 8
        %v1934 = vpop.permute.xlu0 %1933
        %1937 = vrot.lane.b32.xlu0 %v1863, 16
        %v1938 = vpop.permute.xlu0 %1937
        %1941 = vrot.lane.b32.xlu0 %v1930, 24
        %v1942 = vpop.permute.xlu0 %1941
        %v1944 = vsel %vm1139, %v1729, %v1934
        %v1945 = vsel %vm1420, %v1944, %v1938
        %v1946 = vsel %vm1422, %v1945, %v1942
        %s1947 = scalar_lea.vmem %s8, 16
        %v1948 = vld [vmem:[%s1947] sm:$0xf]
        %v1949 = vld [vmem:[%s1947 + $0x4] sm:$0xf]
        %v1950 = vld [vmem:[%s1947 + $0x8] sm:$0xf]
        %v1951 = vld [vmem:[%s1947 + $0xc] sm:$0xf]
        %v1952 = vpack.c.bf16 %v1946, %v1946
        %s1953 = scalar_lea.vmem %s9, 1
        %v1954 = vld [vmem:[%s1953] sm:$0x1]
        %v1956 = vperm.slane %v1954, 0
        %v1962 = vunpack.c.l.b16 %v1948
        %v1963 = vunpack.c.l.b16 %v1949
        %v1964 = vunpack.c.l.b16 %v1950
        %v1965 = vunpack.c.l.b16 %v1951
        %v1966 = vpack.c.b16 %v1963, %v1962
        %v1967 = vpack.c.b16 %v1965, %v1964
        %v1971 = vsel %vm1058, %v1952, 0
        %1973 = vmatpush.bf16.msra.mxu0 0
        %1974 = vmatpush.bf16.msra.mxu0 0
        %1975 = vmatpush.bf16.msra.mxu0 0
        %1976 = vmatpush.bf16.msra.mxu0 0
        %1977 = vmatpush.bf16.msra.mxu0 0
        %1978 = vmatpush.bf16.msra.mxu0 0
        %1979 = vmatpush.bf16.msra.mxu0 %v1967
        %1980 = vmatpush.bf16.msra.mxu0 %v1966
        %1981 = vmatmul.bf16.gmra.mxu0 %v1971
        %v1982 = vpop.f32.mrf.mxu0
        %v1983 = vadd.f32 %v1956, %v1982
        %v1984 = vpop.f32.mrf.mxu0
        %1985 = vdwg.mxu0
        %v1986 = vadd.f32 %v1983, %v1625
        %s1987 = scalar_lea.vmem %s10, 1
        %v1988 = vld [vmem:[%s1987] sm:$0x1]
        %s1989 = scalar_lea.vmem %s11, 1
        %v1990 = vld [vmem:[%s1989] sm:$0x1]
        %v1991 = vsel %vm1058, %v1986, 0.0
        %1992 = vadd.xlane.f32.xlu0 %v1991
        %v1993 = vpop.xlane.xlu0 %1992
        %v1994 = vmul.f32 %v1993, %v1068
        %v1995 = vsub.f32 %v1986, %v1994
        %v1996 = vmul.f32 %v1995, %v1995
        %v1997 = vsel %vm1058, %v1996, 0.0
        %1998 = vadd.xlane.f32.xlu0 %v1997
        %v1999 = vpop.xlane.xlu0 %1998
        %v2000 = vmul.f32 %v1999, %v1068
        %v2001 = vadd.f32 %v2000, 1e-12
        %v2002 = vrsqrt.pop %v2001
        %v2003 = vmul.f32 %v2002, %v2001
        %v2004 = vmul.f32 %v2003, %v2002
        %v2005 = vmul.f32 0.5, %v2004
        %v2006 = vsub.f32 1.5, %v2005
        %v2007 = vmul.f32 %v2002, %v2006
        %vm2008 = vweird.f32 %v2001
        %vm2009 = vweird.f32 %v2002
        %vm2010 = vmor %vm2008, %vm2009
        %v2011 = vsel %vm2010, %v2002, %v2007
        %v2012 = vmul.f32 %v1995, %v2011
        %v2014 = vperm.slane %v1988, 0
        %v2016 = vmul.f32 %v2012, %v2014
        %v2018 = vperm.slane %v1990, 0
        %v2020 = vadd.f32 %v2016, %v2018
        %s2021 = scalar_lea.vmem [#allocation7], 16
        %v2022 = vld [vmem:[%s2021] sm:$0xf]
        %v2023 = vld [vmem:[%s2021 + $0x4] sm:$0xf]
        %v2024 = vld [vmem:[%s2021 + $0x8] sm:$0xf]
        %v2025 = vld [vmem:[%s2021 + $0xc] sm:$0xf]
        %v2026 = vpack.c.bf16 %v2020, %v2020
        %s2027 = scalar_lea.vmem %s13, 1
        %v2028 = vld [vmem:[%s2027] sm:$0x1]
        %v2030 = vperm.slane %v2028, 0
        %v2036 = vunpack.c.l.b16 %v2022
        %v2037 = vunpack.c.l.b16 %v2023
        %v2038 = vunpack.c.l.b16 %v2024
        %v2039 = vunpack.c.l.b16 %v2025
        %v2040 = vpack.c.b16 %v2037, %v2036
        %v2041 = vpack.c.b16 %v2039, %v2038
        %v2045 = vsel %vm1058, %v2026, 0
        %2047 = vmatpush.bf16.msra.mxu0 0
        %2048 = vmatpush.bf16.msra.mxu0 0
        %2049 = vmatpush.bf16.msra.mxu0 0
        %2050 = vmatpush.bf16.msra.mxu0 0
        %2051 = vmatpush.bf16.msra.mxu0 0
        %2052 = vmatpush.bf16.msra.mxu0 0
        %2053 = vmatpush.bf16.msra.mxu0 %v2041
        %2054 = vmatpush.bf16.msra.mxu0 %v2040
        %2055 = vmatmul.bf16.gmra.mxu0 %v2045
        %v2056 = vpop.f32.mrf.mxu0
        %v2057 = vadd.f32 %v2030, %v2056
        %v2058 = vpop.f32.mrf.mxu0
        %2059 = vdwg.mxu0
        %v2060 = vmul.f32 %v2057, %v2057
        %v2061 = vmul.f32 %v2057, %v2060
        %v2062 = vmul.f32 %v2061, 0.044715
        %v2063 = vadd.f32 %v2057, %v2062
        %v2064 = vmul.f32 %v2063, 0.7978846
        %v2065 = vtanh.pop %v2064
        %v2066 = vadd.f32 %v2065, 1.0
        %v2067 = vmul.f32 %v2066, 0.5
        %v2068 = vmul.f32 %v2057, %v2067
        %s2069 = scalar_lea.vmem %s14, 32
        %v2070 = vld [vmem:[%s2069] sm:$0xf]
        %v2071 = vld [vmem:[%s2069 + $0x4] sm:$0xf]
        %v2072 = vld [vmem:[%s2069 + $0x8] sm:$0xf]
        %v2073 = vld [vmem:[%s2069 + $0xc] sm:$0xf]
        %v2074 = vld [vmem:[%s2069 + $0x10] sm:$0xf]
        %v2075 = vld [vmem:[%s2069 + $0x14] sm:$0xf]
        %v2076 = vld [vmem:[%s2069 + $0x18] sm:$0xf]
        %v2077 = vld [vmem:[%s2069 + $0x1c] sm:$0xf]
        %v2078 = vpack.c.bf16 %v2068, %v2068
        %s2079 = scalar_lea.vmem [#allocation8], 1
        %v2080 = vld [vmem:[%s2079] sm:$0x1]
        %v2082 = vperm.slane %v2080, 0
        %v2092 = vunpack.c.l.b16 %v2070
        %v2093 = vunpack.c.l.b16 %v2071
        %v2094 = vunpack.c.l.b16 %v2072
        %v2095 = vunpack.c.l.b16 %v2073
        %v2096 = vunpack.c.l.b16 %v2074
        %v2097 = vunpack.c.l.b16 %v2075
        %v2098 = vunpack.c.l.b16 %v2076
        %v2099 = vunpack.c.l.b16 %v2077
        %v2100 = vpack.c.b16 %v2093, %v2092
        %v2101 = vpack.c.b16 %v2095, %v2094
        %v2102 = vpack.c.b16 %v2097, %v2096
        %v2103 = vpack.c.b16 %v2099, %v2098
        %v2109 = vsel %vm1039, %v2078, 0
        %2111 = vmatpush.bf16.msra.mxu0 0
        %2112 = vmatpush.bf16.msra.mxu0 0
        %2113 = vmatpush.bf16.msra.mxu0 0
        %2114 = vmatpush.bf16.msra.mxu0 0
        %2115 = vmatpush.bf16.msra.mxu0 %v2103
        %2116 = vmatpush.bf16.msra.mxu0 %v2102
        %2117 = vmatpush.bf16.msra.mxu0 %v2101
        %2118 = vmatpush.bf16.msra.mxu0 %v2100
        %2119 = vmatmul.bf16.gmra.mxu0 %v2109
        %v2120 = vpop.f32.mrf.mxu0
        %v2121 = vadd.f32 %v2082, %v2120
        %v2122 = vpop.f32.mrf.mxu0
        %2123 = vdwg.mxu0
        %v2124 = vadd.f32 %v2121, %v2020
        %s2125 = scalar_lea.vmem [#allocation10], 1
        %v2126 = vld [vmem:[%s2125] sm:$0x1]
        %s2127 = scalar_lea.vmem [#allocation11], 1
        %v2128 = vld [vmem:[%s2127] sm:$0x1]
        %v2129 = vsel %vm1058, %v2124, 0.0
        %2130 = vadd.xlane.f32.xlu0 %v2129
        %v2131 = vpop.xlane.xlu0 %2130
        %v2132 = vmul.f32 %v2131, %v1068
        %v2133 = vsub.f32 %v2124, %v2132
        %v2134 = vmul.f32 %v2133, %v2133
        %v2135 = vsel %vm1058, %v2134, 0.0
        %2136 = vadd.xlane.f32.xlu0 %v2135
        %v2137 = vpop.xlane.xlu0 %2136
        %v2138 = vmul.f32 %v2137, %v1068
        %v2139 = vadd.f32 %v2138, 1e-12
        %v2140 = vrsqrt.pop %v2139
        %v2141 = vmul.f32 %v2140, %v2139
        %v2142 = vmul.f32 %v2141, %v2140
        %v2143 = vmul.f32 0.5, %v2142
        %v2144 = vsub.f32 1.5, %v2143
        %v2145 = vmul.f32 %v2140, %v2144
        %vm2146 = vweird.f32 %v2139
        %vm2147 = vweird.f32 %v2140
        %vm2148 = vmor %vm2146, %vm2147
        %v2149 = vsel %vm2148, %v2140, %v2145
        %v2150 = vmul.f32 %v2133, %v2149
        %v2152 = vperm.slane %v2126, 0
        %v2154 = vmul.f32 %v2150, %v2152
        %v2156 = vperm.slane %v2128, 0
        %v2158 = vadd.f32 %v2154, %v2156
        %v2159 = vld [vmem:[#allocation13] sm:$0xf]
        %v2160 = vld [vmem:[#allocation13 + $0x4] sm:$0xf]
        %v2161 = vld [vmem:[#allocation13 + $0x8] sm:$0xf]
        %v2162 = vld [vmem:[#allocation13 + $0xc] sm:$0xf]
        %v2163 = vpack.c.bf16 %v2158, %v2158
        %v2164 = vld [vmem:[#allocation14] sm:$0x1]
        %v2169 = vunpack.c.l.b16 %v2159
        %v2170 = vunpack.c.l.b16 %v2160
        %v2171 = vunpack.c.l.b16 %v2161
        %v2172 = vunpack.c.l.b16 %v2162
        %v2173 = vpack.c.b16 %v2170, %v2169
        %v2174 = vpack.c.b16 %v2172, %v2171
        %v2178 = vsel %vm1058, %v2163, 0
        %2180 = vmatpush.bf16.msra.mxu0 0
        %2181 = vmatpush.bf16.msra.mxu0 0
        %2182 = vmatpush.bf16.msra.mxu0 0
        %2183 = vmatpush.bf16.msra.mxu0 0
        %2184 = vmatpush.bf16.msra.mxu0 0
        %2185 = vmatpush.bf16.msra.mxu0 0
        %2186 = vmatpush.bf16.msra.mxu0 %v2174
        %2187 = vmatpush.bf16.msra.mxu0 %v2173
        %2188 = vmatmul.bf16.gmra.mxu0 %v2178
        %v2189 = vpop.f32.mrf.mxu0
        %v2190 = vadd.f32 %v2164, %v2189
        %v2191 = vpop.f32.mrf.mxu0
        %2192 = vdwg.mxu0
        %v2193 = vtanh.pop %v2190
        %v2194 = vld [vmem:[#allocation16] sm:$0xf]
        %v2195 = vld [vmem:[#allocation16 + $0x4] sm:$0xf]
        %v2196 = vld [vmem:[#allocation16 + $0x8] sm:$0xf]
        %v2197 = vld [vmem:[#allocation16 + $0xc] sm:$0xf]
        %v2198 = vpack.c.bf16 %v2193, %v2193
        %v2199 = vld [vmem:[#allocation17] sm:$0x1]
        %v2204 = vunpack.c.l.b16 %v2194
        %v2205 = vunpack.c.l.b16 %v2195
        %v2206 = vunpack.c.l.b16 %v2196
        %v2207 = vunpack.c.l.b16 %v2197
        %v2208 = vpack.c.b16 %v2205, %v2204
        %v2209 = vpack.c.b16 %v2207, %v2206
        %v2213 = vsel %vm1058, %v2198, 0
        %2215 = vmatpush.bf16.msra.mxu0 0
        %2216 = vmatpush.bf16.msra.mxu0 0
        %2217 = vmatpush.bf16.msra.mxu0 0
        %2218 = vmatpush.bf16.msra.mxu0 0
        %2219 = vmatpush.bf16.msra.mxu0 0
        %2220 = vmatpush.bf16.msra.mxu0 0
        %2221 = vmatpush.bf16.msra.mxu0 %v2209
        %2222 = vmatpush.bf16.msra.mxu0 %v2208
        %2223 = vmatmul.bf16.gmra.mxu0 %v2213
        %v2224 = vpop.f32.mrf.mxu0
        %v2225 = vadd.f32 %v2199, %v2224
        %v2226 = vpop.f32.mrf.mxu0
        %2227 = vdwg.mxu0
        %v2228 = vmax.f32 %v2225, 0.0
        %v2229 = vld [vmem:[%s22] sm:$0xf]
        %v2230 = vld [vmem:[%s22 + $0x4] sm:$0xf]
        %v2231 = vld [vmem:[%s22 + $0x8] sm:$0xf]
        %v2232 = vld [vmem:[%s22 + $0xc] sm:$0xf]
        %v2233 = vld [vmem:[%s22 + $0x10] sm:$0xf]
        %v2234 = vld [vmem:[%s22 + $0x14] sm:$0xf]
        %v2235 = vld [vmem:[%s22 + $0x18] sm:$0xf]
        %v2236 = vld [vmem:[%s22 + $0x1c] sm:$0xf]
        %v2237 = vld [vmem:[%s22 + $0x20] sm:$0xf]
        %v2238 = vld [vmem:[%s22 + $0x24] sm:$0xf]
        %v2239 = vld [vmem:[%s22 + $0x28] sm:$0xf]
        %v2240 = vld [vmem:[%s22 + $0x2c] sm:$0xf]
        %v2241 = vld [vmem:[%s22 + $0x30] sm:$0xf]
        %v2242 = vld [vmem:[%s22 + $0x34] sm:$0xf]
        %v2243 = vld [vmem:[%s22 + $0x38] sm:$0xf]
        %v2244 = vld [vmem:[%s22 + $0x3c] sm:$0xf]
        %v2245 = vpack.c.bf16 %v2228, %v2228
        %v2246 = vld [vmem:[#allocation19] sm:$0x1]
        %v2263 = vunpack.c.l.b16 %v2229
        %v2264 = vunpack.c.l.b16 %v2230
        %v2265 = vunpack.c.l.b16 %v2231
        %v2266 = vunpack.c.l.b16 %v2232
        %v2267 = vunpack.c.l.b16 %v2233
        %v2268 = vunpack.c.l.b16 %v2234
        %v2269 = vunpack.c.l.b16 %v2235
        %v2270 = vunpack.c.l.b16 %v2236
        %v2271 = vunpack.c.l.b16 %v2237
        %v2272 = vunpack.c.l.b16 %v2238
        %v2273 = vunpack.c.l.b16 %v2239
        %v2274 = vunpack.c.l.b16 %v2240
        %v2275 = vunpack.c.l.b16 %v2241
        %v2276 = vunpack.c.l.b16 %v2242
        %v2277 = vunpack.c.l.b16 %v2243
        %v2278 = vunpack.c.l.b16 %v2244
        %v2279 = vpack.c.b16 %v2264, %v2263
        %v2280 = vpack.c.b16 %v2266, %v2265
        %v2281 = vpack.c.b16 %v2268, %v2267
        %v2282 = vpack.c.b16 %v2270, %v2269
        %v2283 = vpack.c.b16 %v2272, %v2271
        %v2284 = vpack.c.b16 %v2274, %v2273
        %v2285 = vpack.c.b16 %v2276, %v2275
        %v2286 = vpack.c.b16 %v2278, %v2277
        %2295 = vmatpush.bf16.msra.mxu0 %v2286
        %2296 = vmatpush.bf16.msra.mxu0 %v2285
        %2297 = vmatpush.bf16.msra.mxu0 %v2284
        %2298 = vmatpush.bf16.msra.mxu0 %v2283
        %2299 = vmatpush.bf16.msra.mxu0 %v2282
        %2300 = vmatpush.bf16.msra.mxu0 %v2281
        %2301 = vmatpush.bf16.msra.mxu0 %v2280
        %2302 = vmatpush.bf16.msra.mxu0 %v2279
        %2303 = vmatmul.bf16.gmra.mxu0 %v2245
        %v2304 = vpop.f32.mrf.mxu0
        %v2305 = vadd.f32 %v2246, %v2304
        %v2306 = vpop.f32.mrf.mxu0
        %2307 = vdwg.mxu0
        %vm2308 = vcmp.lt.s32.totalorder %v998, 3
        %v2309 = vsel %vm2308, %v2305, -1e+30
        %vm2310 = vcmask 1040384
        %v2311 = vsel %vm2310, %v2309, -inf
        %2312 = vmax.xlane.f32.xlu0 %v2311
        %v2313 = vpop.xlane.xlu0 %2312
        %v2314 = vsub.f32 %v2309, %v2313
        %v2315 = vmul.f32 %v2314, 1.442695
        %v2316 = vpow.pop %v2315
        %v2317 = vsel %vm2310, %v2316, 0.0
        %2318 = vadd.xlane.f32.xlu0 %v2317
        %v2319 = vpop.xlane.xlu0 %2318
        %v2320 = vrcp.pop %v2319
        %v2321 = vmul.f32 %v2319, %v2320
        %v2322 = vsub.f32 1.0, %v2321
        %v2323 = vmul.f32 %v2320, %v2322
        %v2324 = vadd.f32 %v2320, %v2323
        %vm2325 = vweird.f32 %v2319
        %vm2326 = vweird.f32 %v2320
        %vm2327 = vmor %vm2325, %vm2326
        %v2328 = vsel %vm2327, %v2320, %v2324
        %v2329 = vand.u32 2147483647, %v2319
        %vm2330 = vcmp.eq.f32.partialorder %v2329, 8.507059e+37
        %v2331 = vand.u32 %v2319, 2147483648
        %v2332 = vor.u32 1.1754944e-38, %v2331
        %v2333 = vsel %vm2330, %v2332, %v2328
        %v2334 = vmul.f32 %v2316, %v2333
        %v2335 = vsel %vm2308, %v2334, 0.0
        %2336 = vst [vmem:[%s976] sm:$0x1] %v2335
        %v2337 = vld [vmem:[%s991] sm:$0x1]
        %v2338 = vsub.f32 %v2335, %v2337
        %v2339 = vmul.f32 %v2338, %v2338
        %v2340 = vsel %vm2310, %v2339, 0.0
        %2341 = vadd.xlane.f32.xlu0 %v2340
        %v2342 = vpop.xlane.xlu0 %2341
        %v2343 = vrot.slane %v2342, 4
        %v2344 = vadd.f32 %v2342, %v2343
        %v2345 = vrot.slane %v2344, 2
        %v2346 = vadd.f32 %v2344, %v2345
        %v2347 = vrot.slane %v2346, 1
        %v2348 = vadd.f32 %v2346, %v2347
        %s2349 = vtos %v2348
        %v2350 = vstv %s2349
        %vm2351 = vcmask 0
        %2352 = vst.msk [vmem:[%s994] sm:$0x1] %vm2351, %v2350
        %s2353 = sand.u32 %s595, 1
        %s2354 = scalar_lea.sflag [#allocation4], %s2353
        %s2355 = sand.u32 %s595, 1
        %s2356 = scalar_lea.vmem [#allocation20], %s2355
        %p2357 = scmp.lt.s32.totalorder %s47, 1
        %s2358 = scalar_select %p2357, %s47, 1
        %s2359 = scalar_lea.vmem %s26, %s2358
        // Predicated region
        $region165: #{bert_classification_forward.1} parent=119 // pred_check
          %p2360 = pneg %p605
        $region166: #{bert_classification_forward.1} parent=119 // pred_check_branch
          %2362 = sbr.rel (%p2360) target = $region168
        $region167: #{bert_classification_forward.1} parent=119 // pred_region
          %2364 = vsyncadd %s2354, 0
          %s2365 = scalar_lea.hbm %s25, %s47
          %s2367 = sshll.u32 %s2356, 4
          %s2368 = int_to_ptr.vmem [resolvable:$true] %s2367
          %s2369 = sshll.u32 %s2365, 4
          %s2370 = int_to_ptr.hbm [resolvable:$true] %s2369
          %2372 = dma.vmem_to_hbm [thread:$0]  %s2368, 16, %s2370, %s2354
        $region168: #{bert_classification_forward.1} parent=119 // pred_fallthru
          _
        // Predicated region
        $region169: #{bert_classification_forward.1} parent=119 // pred_check
          %p2373 = pneg %p631
        $region170: #{bert_classification_forward.1} parent=119 // pred_check_branch
          %2375 = sbr.rel (%p2373) target = $region172
        $region171: #{bert_classification_forward.1} parent=119 // pred_region
          _
        $region172: #{bert_classification_forward.1} parent=119 // pred_fallthru
          _
      $region120: #{bert_classification_forward.1} parent=5 // pred_fallthru
        _
      %p2376 = scmp.le.s32.totalorder 2, %s42
      // Predicated region
      $region173: #{bert_classification_forward.1} parent=5 // pred_check
        %p2377 = pneg %p2376
      $region174: #{bert_classification_forward.1} parent=5 // pred_check_branch
        %2379 = sbr.rel (%p2377) target = $region176
      $region175: #{bert_classification_forward.1} parent=5 // pred_region
        %s2380 = ssub.s32 %s42, 2
        // Predicated region
        $region177: #{bert_classification_forward.1} parent=175 // pred_check
          %p2381 = pneg %p611
        $region178: #{bert_classification_forward.1} parent=175 // pred_check_branch
          %2383 = sbr.rel (%p2381) target = $region180
        $region179: #{bert_classification_forward.1} parent=175 // pred_region
          %s2384 = sand.u32 %s596, 1
          %s2385 = scalar_lea.sflag [#allocation4], %s2384
          %s2386 = sand.u32 %s596, 1
          %s2387 = scalar_lea.vmem [#allocation20], %s2386
          %2389 = dma.done %s2385, 16
        $region180: #{bert_classification_forward.1} parent=175 // pred_fallthru
          _
        // Predicated region
        $region181: #{bert_classification_forward.1} parent=175 // pred_check
          %p2390 = pneg %p637
        $region182: #{bert_classification_forward.1} parent=175 // pred_check_branch
          %2392 = sbr.rel (%p2390) target = $region184
        $region183: #{bert_classification_forward.1} parent=175 // pred_region
          %p2393 = scmp.lt.s32.totalorder %s48, 1
          %s2394 = scalar_select %p2393, %s48, 1
          %s2395 = scalar_lea.vmem %s26, %s2394
        $region184: #{bert_classification_forward.1} parent=175 // pred_fallthru
          _
      $region176: #{bert_classification_forward.1} parent=5 // pred_fallthru
        _
    $region6: #{bert_classification_forward.1} parent=1 // loop_footer
      %s46 = sadd.s32 1, %s42
    $region7: #{bert_classification_forward.1} parent=1 // loop_footer_branch
      %41 = sbr.rel target = $region3
    $region8: #{bert_classification_forward.1} parent=1 // loop_exit
      _
    %2396 = vsyncpa [#allocation3], 1
    %s2397 = scalar_lea.sflag [#allocation3], 1
    %2398 = vsyncpa %s2397, 1
    %2399 = vsyncpa [#allocation6], 1
    %2400 = vsyncpa [#allocation9], 1
    %2401 = vsyncpa [#allocation12], 1
    %2402 = vsyncpa [#allocation15], 1
    %2403 = vsyncpa [#allocation18], 1
    %2404 = vsyncpa [#allocation4], 1
    %s2405 = scalar_lea.sflag [#allocation4], 1
    %2406 = vsyncpa %s2405, 1

</llo_original>
